<compile_context>
chip_gen: v5e
topology: v5e:2x2
jax: 0.10.0
libtpu: 0.0.40
codegen_flags: <defaults>
</compile_context>

<pallas_src>
import jax
import jax.numpy as jnp
from jax.experimental import pallas as pl
from jax.experimental.pallas import tpu as pltpu


# ------------- model configuration (synthetic diffuser value net) -----------
HORIZON = 8            # trajectory horizon
TRANSITION_DIM = 31    # per-step feature dim (matches the 31-wide diffuser layout)
EMB_DIM = 16           # sinusoidal time embedding (8 sin + 8 cos)
HIDDEN = 256           # MLP hidden width, multiple of 128

FEAT = HORIZON * TRANSITION_DIM       # 248
FEAT_PAD = 256                        # 248 -> 256  (lane aligned)
EMB_PAD = 128                         # 16  -> 128  (lane aligned)
EMB_HALF = EMB_DIM // 2               # 8

MXU_DTYPE = jnp.bfloat16              # MXU inputs; accumulation stays f32


def _ceil_to(x, m):
    return ((x + m - 1) // m) * m


# --------------------------------- kernel -----------------------------------
def _mish(x):
    # mish(x) = x * tanh(softplus(x)) == x * (u^2 + 2u) / (u^2 + 2u + 2), u=e^x.
    # Clamp before exp so u^2 stays finite in f32; for x >= 40 the ratio is 1.
    u = jnp.exp(jnp.minimum(x, 40.0))
    n = u * (u + 2.0)
    return x * n * pl.reciprocal(n + 2.0, approx=True)


def _value_kernel(xf_ref, t_ref, fr_ref, ph_ref, w1x_ref, w1t_ref, b1_ref,
                  w2_ref, b2_ref, w3_ref, out_ref):
    # Sinusoidal time embedding fused in-kernel: single sin, cos via +pi/2
    # phase on lanes [8,16); padded lanes [16,128) give sin(0) = 0.
    tf = t_ref[...] * fr_ref[...] + ph_ref[...]            # (Bt,1)*(1,128)+(1,128)
    emb = jnp.sin(tf)                                       # (Bt, 128) f32

    # Layer 1: trajectory features + time embedding, bf16 MXU, f32 accumulate.
    h = jnp.dot(xf_ref[...], w1x_ref[...], preferred_element_type=jnp.float32)
    h = h + jnp.dot(emb.astype(MXU_DTYPE), w1t_ref[...],
                    preferred_element_type=jnp.float32)
    h = _mish(h + b1_ref[...])                               # (Bt, H) f32

    # Layer 2.
    h2 = jnp.dot(h.astype(MXU_DTYPE), w2_ref[...],
                 preferred_element_type=jnp.float32)
    h2 = _mish(h2 + b2_ref[...])                             # (Bt, H) f32

    # Value head (HIDDEN -> 1) on the MXU: contraction over hidden of both
    # operands (rhs transposed) gives a lane-dense (8, Bt) result directly —
    # no XLU transpose, no sublane reduce.  Rows 1..7 of w3 are zero-padding.
    vals = jnp.einsum('oh,bh->ob', w3_ref[...], h2.astype(MXU_DTYPE),
                      preferred_element_type=jnp.float32)    # (8, Bt)
    out_ref[...] = vals[0:1, :].astype(out_ref.dtype)        # (1, Bt) lane-dense


# --------------------------------- wrapper -----------------------------------
def init_value_model_params(key):
    ks = jax.random.split(key, 7)

    def dense(k, fan_in, shape):
        return jax.random.normal(k, shape, jnp.float32) / jnp.sqrt(float(fan_in))

    w1x = jnp.zeros((FEAT_PAD, HIDDEN), jnp.float32).at[:FEAT].set(
        dense(ks[0], FEAT + EMB_DIM, (FEAT, HIDDEN)))
    w1t = jnp.zeros((EMB_PAD, HIDDEN), jnp.float32).at[:EMB_DIM].set(
        dense(ks[1], FEAT + EMB_DIM, (EMB_DIM, HIDDEN)))
    b1 = 0.1 * jax.random.normal(ks[2], (1, HIDDEN), jnp.float32)
    w2 = dense(ks[3], HIDDEN, (HIDDEN, HIDDEN))
    b2 = 0.1 * jax.random.normal(ks[4], (1, HIDDEN), jnp.float32)
    w3 = dense(ks[5], HIDDEN, (1, HIDDEN))
    # Value-head weights stored MXU-ready: (8, HIDDEN) bf16, real row at 0.
    w3_pad = jnp.zeros((8, HIDDEN), jnp.float32).at[0:1].set(w3)
    b3 = 0.1 * jax.random.normal(ks[6], (), jnp.float32)
    return dict(w1x=w1x.astype(MXU_DTYPE), w1t=w1t.astype(MXU_DTYPE), b1=b1,
                w2=w2.astype(MXU_DTYPE), b2=b2,
                w3=w3_pad.astype(MXU_DTYPE), b3=b3)


def _freq_phase_rows():
    """(1,128) frequency row and (1,128) phase row for the fused embedding.

    lanes [0,8)   : sin frequencies, phase 0
    lanes [8,16)  : cos frequencies (same values), phase pi/2
    lanes [16,128): freq 0, phase 0  -> sin(0) = 0
    """
    log_scale = jnp.log(10000.0) / (EMB_HALF - 1)
    f = jnp.exp(-log_scale * jnp.arange(EMB_HALF, dtype=jnp.float32))
    freqs = (jnp.zeros((1, EMB_PAD), jnp.float32)
             .at[0, :EMB_HALF].set(f)
             .at[0, EMB_HALF:2 * EMB_HALF].set(f))
    phase = jnp.zeros((1, EMB_PAD), jnp.float32).at[
        0, EMB_HALF:2 * EMB_HALF].set(jnp.pi / 2)
    return freqs, phase


def _pick_tiling(B):
    """Batch tile / padded-batch sizes.

    >= 2 grid steps for mid/large batches so the 'parallel' axis shards
    across v7x's two TensorCores; 1024-wide tiles for large batches to
    amortize per-grid-step overhead.  VMEM footprint stays far below the
    scoped default on all generations.
    """
    if B <= 256:
        b_tile = 128
    elif B <= 2048:
        b_tile = max(128, _ceil_to(-(-B // 2), 128))   # ~half the batch per tile
    else:
        b_tile = 1024
    return b_tile, _ceil_to(B, b_tile)


def value_model_pallas(params, x, cond, t):
    """model(x, cond, t) -> (B, 1) values, computed by the Pallas kernel."""
    # cond is accepted for API parity; like diffuser's ValueFunction, this
    # synthetic value net does not consume it (conditioning is applied to x
    # upstream in the diffuser pipeline).
    del cond
    B = x.shape[0]
    b_tile, b_pad = _pick_tiling(B)

    # Pad / cast features directly in bf16 (no f32 intermediate).
    feat = x.reshape(B, FEAT).astype(MXU_DTYPE)
    feat_p = jnp.zeros((b_pad, FEAT_PAD), MXU_DTYPE).at[:B, :FEAT].set(feat)

    # Timesteps as a tiny (b_pad, 1) f32 column; outer product happens in-kernel.
    t_col = jnp.zeros((b_pad, 1), jnp.float32).at[:B, 0].set(
        t.astype(jnp.float32))
    freqs, phase = _freq_phase_rows()

    def const_spec(shp):
        return pl.BlockSpec(shp, lambda i: (0,) * len(shp))     # VMEM-resident

    out = pl.pallas_call(
        _value_kernel,
        out_shape=jax.ShapeDtypeStruct((1, b_pad), jnp.float32),
        grid=(b_pad // b_tile,),
        in_specs=[
            pl.BlockSpec((b_tile, FEAT_PAD), lambda i: (i, 0)),  # trajectory feats
            pl.BlockSpec((b_tile, 1), lambda i: (i, 0)),         # t column
            const_spec((1, EMB_PAD)),                            # freq row
            const_spec((1, EMB_PAD)),                            # phase row
            const_spec((FEAT_PAD, HIDDEN)),                      # W1x
            const_spec((EMB_PAD, HIDDEN)),                       # W1t
            const_spec((1, HIDDEN)),                             # b1
            const_spec((HIDDEN, HIDDEN)),                        # W2
            const_spec((1, HIDDEN)),                             # b2
            const_spec((8, HIDDEN)),                             # w3 (value head)
        ],
        out_specs=pl.BlockSpec((1, b_tile), lambda i: (0, i)),   # lane-dense row
        compiler_params=pltpu.CompilerParams(
            dimension_semantics=("parallel",)),
    )(feat_p, t_col, freqs, phase, params["w1x"], params["w1t"], params["b1"],
      params["w2"], params["b2"], params["w3"])

    vals = out[0, :B] + params["b3"]                             # fold +b3 here
    return vals[:, None]                                         # (B, 1)


def value_guide_forward(params, x, cond, t):
    """ValueGuide.forward: model(x, cond, t).squeeze(-1)."""
    return value_model_pallas(params, x, cond, t)[:, 0]


# ----------------------------- pure-JAX reference ----------------------------
def _mish_ref(x):
    return x * jnp.tanh(jax.nn.softplus(x))


def value_guide_ref(params, x, cond, t):
    del cond
    B = x.shape[0]
    feat = x.reshape(B, FEAT).astype(MXU_DTYPE)
    log_scale = jnp.log(10000.0) / (EMB_HALF - 1)
    freqs = jnp.exp(-log_scale * jnp.arange(EMB_HALF, dtype=jnp.float32))
    tf = t.astype(jnp.float32)[:, None] * freqs[None, :]
    emb = jnp.concatenate([jnp.sin(tf), jnp.cos(tf)], axis=-1).astype(MXU_DTYPE)
    h = jnp.dot(feat, params["w1x"][:FEAT], preferred_element_type=jnp.float32)
    h = h + jnp.dot(emb, params["w1t"][:EMB_DIM],
                    preferred_element_type=jnp.float32)
    h = _mish_ref(h + params["b1"])
    h2 = jnp.dot(h.astype(MXU_DTYPE), params["w2"],
                 preferred_element_type=jnp.float32)
    h2 = _mish_ref(h2 + params["b2"])
    w3 = params["w3"][0].astype(jnp.float32)                     # (HIDDEN,)
    vals = jnp.dot(h2.astype(MXU_DTYPE).astype(jnp.float32), w3)
    return vals + params["b3"]


# ----------------------------------- main ------------------------------------
if __name__ == "__main__":
    key = jax.random.PRNGKey(0)
    k_param, k_x, k_t = jax.random.split(key, 3)

    params = init_value_model_params(k_param)

    B = 4                                              # small demo batch
    x = jax.random.normal(k_x, (B, HORIZON, TRANSITION_DIM), jnp.float32)
    t = jax.random.randint(k_t, (B,), 0, 1000, jnp.int32)
    cond = {0: x[:, 0, :]}                             # diffuser-style cond (unused)

    y = jax.block_until_ready(value_guide_forward(params, x, cond, t))
    y_ref = jax.block_until_ready(value_guide_ref(params, x, cond, t))

    assert y.shape == (B,), y.shape
    assert bool(jnp.all(jnp.isfinite(y))), y
    if not jnp.allclose(y, y_ref, rtol=2e-2, atol=2e-2):
        raise AssertionError(f"mismatch:\n pallas={y}\n ref   ={y_ref}")

    # TODO(synk): ValueGuide.gradients / heatmap-saving utilities (autograd,
    # matplotlib, file I/O) are host-side tooling outside the forward pass and
    # are not translated.
    print("KERNEL_OK")
</pallas_src>

<mosaic_0001>
module attributes {stable_mosaic.version = 11 : i64} {
  func.func @_value_kernel(%arg0: i32, %arg1: memref<128x256xbf16, #tpu.memory_space<vmem>>, %arg2: memref<128x1xf32, #tpu.memory_space<vmem>>, %arg3: memref<1x128xf32, #tpu.memory_space<vmem>>, %arg4: memref<1x128xf32, #tpu.memory_space<vmem>>, %arg5: memref<256x256xbf16, #tpu.memory_space<vmem>>, %arg6: memref<128x256xbf16, #tpu.memory_space<vmem>>, %arg7: memref<1x256xf32, #tpu.memory_space<vmem>>, %arg8: memref<256x256xbf16, #tpu.memory_space<vmem>>, %arg9: memref<1x256xf32, #tpu.memory_space<vmem>>, %arg10: memref<8x256xbf16, #tpu.memory_space<vmem>>, %arg11: memref<1x128xf32, #tpu.memory_space<vmem>>) attributes {dimension_semantics = [#tpu.dimension_semantics<parallel>], iteration_bounds = array<i64: 1>, scalar_prefetch = 0 : i64, scratch_operands = 0 : i64, tpu.core_type = #tpu.core_type<tc>, window_params = [{transform_indices = @transform_0, window_bounds = array<i64: 128, 256>}, {transform_indices = @transform_1, window_bounds = array<i64: 128, 1>}, {pipeline_mode = #tpu.pipeline_mode<synchronous>, transform_indices = @transform_2, window_bounds = array<i64: 1, 128>}, {pipeline_mode = #tpu.pipeline_mode<synchronous>, transform_indices = @transform_3, window_bounds = array<i64: 1, 128>}, {pipeline_mode = #tpu.pipeline_mode<synchronous>, transform_indices = @transform_4, window_bounds = array<i64: 256, 256>}, {pipeline_mode = #tpu.pipeline_mode<synchronous>, transform_indices = @transform_5, window_bounds = array<i64: 128, 256>}, {pipeline_mode = #tpu.pipeline_mode<synchronous>, transform_indices = @transform_6, window_bounds = array<i64: 1, 256>}, {pipeline_mode = #tpu.pipeline_mode<synchronous>, transform_indices = @transform_7, window_bounds = array<i64: 256, 256>}, {pipeline_mode = #tpu.pipeline_mode<synchronous>, transform_indices = @transform_8, window_bounds = array<i64: 1, 256>}, {pipeline_mode = #tpu.pipeline_mode<synchronous>, transform_indices = @transform_9, window_bounds = array<i64: 8, 256>}, {transform_indices = @transform_10, window_bounds = array<i64: 1, 128>}]} {
    %c0 = arith.constant 0 : index
    %c0_0 = arith.constant 0 : index
    %0 = vector.load %arg2[%c0, %c0_0] : memref<128x1xf32, #tpu.memory_space<vmem>>, vector<128x1xf32>
    %c0_1 = arith.constant 0 : index
    %c0_2 = arith.constant 0 : index
    %1 = vector.load %arg3[%c0_1, %c0_2] : memref<1x128xf32, #tpu.memory_space<vmem>>, vector<1x128xf32>
    %2 = vector.broadcast %0 : vector<128x1xf32> to vector<128x128xf32>
    %3 = vector.broadcast %1 : vector<1x128xf32> to vector<128x128xf32>
    %4 = arith.mulf %2, %3 : vector<128x128xf32>
    %c0_3 = arith.constant 0 : index
    %c0_4 = arith.constant 0 : index
    %5 = vector.load %arg4[%c0_3, %c0_4] : memref<1x128xf32, #tpu.memory_space<vmem>>, vector<1x128xf32>
    %6 = vector.broadcast %5 : vector<1x128xf32> to vector<128x128xf32>
    %7 = arith.addf %4, %6 : vector<128x128xf32>
    %8 = math.sin %7 : vector<128x128xf32>
    %c0_5 = arith.constant 0 : index
    %c0_6 = arith.constant 0 : index
    %9 = vector.load %arg1[%c0_5, %c0_6] : memref<128x256xbf16, #tpu.memory_space<vmem>>, vector<128x256xbf16>
    %c0_7 = arith.constant 0 : index
    %c0_8 = arith.constant 0 : index
    %10 = vector.load %arg5[%c0_7, %c0_8] : memref<256x256xbf16, #tpu.memory_space<vmem>>, vector<256x256xbf16>
    %cst = arith.constant dense<0.000000e+00> : vector<128x256xf32>
    %11 = tpu.matmul %9, %10, %cst {dimension_numbers = #tpu.dot_dimension_numbers<[1], [0], [0], [1], [0, 0, 1, 1], [], []>} : vector<128x256xbf16>, vector<256x256xbf16>, vector<128x256xf32> -> vector<128x256xf32>
    %12 = arith.truncf %8 : vector<128x128xf32> to vector<128x128xbf16>
    %c0_9 = arith.constant 0 : index
    %c0_10 = arith.constant 0 : index
    %13 = vector.load %arg6[%c0_9, %c0_10] : memref<128x256xbf16, #tpu.memory_space<vmem>>, vector<128x256xbf16>
    %cst_11 = arith.constant dense<0.000000e+00> : vector<128x256xf32>
    %14 = tpu.matmul %12, %13, %cst_11 {dimension_numbers = #tpu.dot_dimension_numbers<[1], [0], [0], [1], [0, 0, 1, 1], [], []>} : vector<128x128xbf16>, vector<128x256xbf16>, vector<128x256xf32> -> vector<128x256xf32>
    %15 = arith.addf %11, %14 : vector<128x256xf32>
    %c0_12 = arith.constant 0 : index
    %c0_13 = arith.constant 0 : index
    %16 = vector.load %arg7[%c0_12, %c0_13] : memref<1x256xf32, #tpu.memory_space<vmem>>, vector<1x256xf32>
    %17 = vector.broadcast %16 : vector<1x256xf32> to vector<128x256xf32>
    %18 = arith.addf %15, %17 : vector<128x256xf32>
    %cst_14 = arith.constant 4.000000e+01 : f32
    %19 = vector.broadcast %cst_14 : f32 to vector<128x256xf32>
    %20 = arith.minimumf %18, %19 : vector<128x256xf32>
    %21 = math.exp %20 : vector<128x256xf32>
    %cst_15 = arith.constant 2.000000e+00 : f32
    %22 = vector.broadcast %cst_15 : f32 to vector<128x256xf32>
    %23 = arith.addf %21, %22 : vector<128x256xf32>
    %24 = arith.mulf %21, %23 : vector<128x256xf32>
    %25 = arith.mulf %18, %24 : vector<128x256xf32>
    %cst_16 = arith.constant 2.000000e+00 : f32
    %26 = vector.broadcast %cst_16 : f32 to vector<128x256xf32>
    %27 = arith.addf %24, %26 : vector<128x256xf32>
    %28 = tpu.reciprocal %27 {approx = true} : vector<128x256xf32> -> vector<128x256xf32>
    %29 = arith.mulf %25, %28 : vector<128x256xf32>
    %30 = arith.truncf %29 : vector<128x256xf32> to vector<128x256xbf16>
    %c0_17 = arith.constant 0 : index
    %c0_18 = arith.constant 0 : index
    %31 = vector.load %arg8[%c0_17, %c0_18] : memref<256x256xbf16, #tpu.memory_space<vmem>>, vector<256x256xbf16>
    %cst_19 = arith.constant dense<0.000000e+00> : vector<128x256xf32>
    %32 = tpu.matmul %30, %31, %cst_19 {dimension_numbers = #tpu.dot_dimension_numbers<[1], [0], [0], [1], [0, 0, 1, 1], [], []>} : vector<128x256xbf16>, vector<256x256xbf16>, vector<128x256xf32> -> vector<128x256xf32>
    %c0_20 = arith.constant 0 : index
    %c0_21 = arith.constant 0 : index
    %33 = vector.load %arg9[%c0_20, %c0_21] : memref<1x256xf32, #tpu.memory_space<vmem>>, vector<1x256xf32>
    %34 = vector.broadcast %33 : vector<1x256xf32> to vector<128x256xf32>
    %35 = arith.addf %32, %34 : vector<128x256xf32>
    %cst_22 = arith.constant 4.000000e+01 : f32
    %36 = vector.broadcast %cst_22 : f32 to vector<128x256xf32>
    %37 = arith.minimumf %35, %36 : vector<128x256xf32>
    %38 = math.exp %37 : vector<128x256xf32>
    %cst_23 = arith.constant 2.000000e+00 : f32
    %39 = vector.broadcast %cst_23 : f32 to vector<128x256xf32>
    %40 = arith.addf %38, %39 : vector<128x256xf32>
    %41 = arith.mulf %38, %40 : vector<128x256xf32>
    %42 = arith.mulf %35, %41 : vector<128x256xf32>
    %cst_24 = arith.constant 2.000000e+00 : f32
    %43 = vector.broadcast %cst_24 : f32 to vector<128x256xf32>
    %44 = arith.addf %41, %43 : vector<128x256xf32>
    %45 = tpu.reciprocal %44 {approx = true} : vector<128x256xf32> -> vector<128x256xf32>
    %46 = arith.mulf %42, %45 : vector<128x256xf32>
    %c0_25 = arith.constant 0 : index
    %c0_26 = arith.constant 0 : index
    %47 = vector.load %arg10[%c0_25, %c0_26] : memref<8x256xbf16, #tpu.memory_space<vmem>>, vector<8x256xbf16>
    %48 = arith.truncf %46 : vector<128x256xf32> to vector<128x256xbf16>
    "tpu.trace_start"() <{level = 10 : i32, message = "oh,bh->ob"}> : () -> ()
    %cst_27 = arith.constant dense<0.000000e+00> : vector<8x128xf32>
    %49 = tpu.matmul %47, %48, %cst_27 {dimension_numbers = #tpu.dot_dimension_numbers<[1], [1], [0], [0], [0, 0, 1, 0], [], []>} : vector<8x256xbf16>, vector<128x256xbf16>, vector<8x128xf32> -> vector<8x128xf32>
    "tpu.trace_stop"() : () -> ()
    %50 = vector.extract_strided_slice %49 {offsets = [0, 0], sizes = [1, 128], strides = [1, 1]} : vector<8x128xf32> to vector<1x128xf32>
    %c0_28 = arith.constant 0 : index
    %c0_29 = arith.constant 0 : index
    %51 = vector.load %arg11[%c0_28, %c0_29] : memref<1x128xf32, #tpu.memory_space<vmem>>, vector<1x128xf32>
    tpu.vector_store %arg11[%c0_28, %c0_29], %50 {strides = array<i32>} : memref<1x128xf32, #tpu.memory_space<vmem>>, vector<1x128xf32>,
    return
  }
  func.func @transform_0(%arg0: i32) -> (i32, i32) {
    %c0_i32 = arith.constant 0 : i32
    %c0_i32_0 = arith.constant 0 : i32
    return %arg0, %c0_i32 : i32, i32
  }
  func.func @transform_1(%arg0: i32) -> (i32, i32) {
    %c0_i32 = arith.constant 0 : i32
    %c0_i32_0 = arith.constant 0 : i32
    return %arg0, %c0_i32 : i32, i32
  }
  func.func @transform_2(%arg0: i32) -> (i32, i32) {
    %c0_i32 = arith.constant 0 : i32
    %c0_i32_0 = arith.constant 0 : i32
    %c0_i32_1 = arith.constant 0 : i32
    return %c0_i32, %c0_i32_0 : i32, i32
  }
  func.func @transform_3(%arg0: i32) -> (i32, i32) {
    %c0_i32 = arith.constant 0 : i32
    %c0_i32_0 = arith.constant 0 : i32
    %c0_i32_1 = arith.constant 0 : i32
    return %c0_i32, %c0_i32_0 : i32, i32
  }
  func.func @transform_4(%arg0: i32) -> (i32, i32) {
    %c0_i32 = arith.constant 0 : i32
    %c0_i32_0 = arith.constant 0 : i32
    %c0_i32_1 = arith.constant 0 : i32
    return %c0_i32, %c0_i32_0 : i32, i32
  }
  func.func @transform_5(%arg0: i32) -> (i32, i32) {
    %c0_i32 = arith.constant 0 : i32
    %c0_i32_0 = arith.constant 0 : i32
    %c0_i32_1 = arith.constant 0 : i32
    return %c0_i32, %c0_i32_0 : i32, i32
  }
  func.func @transform_6(%arg0: i32) -> (i32, i32) {
    %c0_i32 = arith.constant 0 : i32
    %c0_i32_0 = arith.constant 0 : i32
    %c0_i32_1 = arith.constant 0 : i32
    return %c0_i32, %c0_i32_0 : i32, i32
  }
  func.func @transform_7(%arg0: i32) -> (i32, i32) {
    %c0_i32 = arith.constant 0 : i32
    %c0_i32_0 = arith.constant 0 : i32
    %c0_i32_1 = arith.constant 0 : i32
    return %c0_i32, %c0_i32_0 : i32, i32
  }
  func.func @transform_8(%arg0: i32) -> (i32, i32) {
    %c0_i32 = arith.constant 0 : i32
    %c0_i32_0 = arith.constant 0 : i32
    %c0_i32_1 = arith.constant 0 : i32
    return %c0_i32, %c0_i32_0 : i32, i32
  }
  func.func @transform_9(%arg0: i32) -> (i32, i32) {
    %c0_i32 = arith.constant 0 : i32
    %c0_i32_0 = arith.constant 0 : i32
    %c0_i32_1 = arith.constant 0 : i32
    return %c0_i32, %c0_i32_0 : i32, i32
  }
  func.func @transform_10(%arg0: i32) -> (i32, i32) {
    %c0_i32 = arith.constant 0 : i32
    %c0_i32_0 = arith.constant 0 : i32
    return %c0_i32, %arg0 : i32, i32
  }
}

</mosaic_0001>

<llo_original>
// kernel: tpu_custom_call.1
$region0: #{tpu_custom_call.1}
  #allocation0 [shape = 'u32[]', space=smem, size = 0x4, offset = 0x4, fixed_abs, tag = 'smem constant byte address 0x4 - core index']
  #allocation1 [shape = 'u32[72,128]{1,0:T(1,128)}', space=vmem, size = 0x9000, scoped, tag = 'internal scratch']
  %s0 = inlined_call_operand.vmem [shape: bf16[128,256], index: 0, kind: input, shape index: {}]
  %s1 = inlined_call_operand.vmem [shape: f32[128,1], index: 1, kind: input, shape index: {}]
  %s2 = inlined_call_operand.hbm [shape: f32[1,128], index: 2, kind: input, shape index: {}]
  %s3 = inlined_call_operand.hbm [shape: f32[1,128], index: 3, kind: input, shape index: {}]
  %s4 = inlined_call_operand.hbm [shape: bf16[256,256], index: 4, kind: input, shape index: {}]
  %s5 = inlined_call_operand.hbm [shape: bf16[128,256], index: 5, kind: input, shape index: {}]
  %s6 = inlined_call_operand.hbm [shape: f32[1,256], index: 6, kind: input, shape index: {}]
  %s7 = inlined_call_operand.hbm [shape: bf16[256,256], index: 7, kind: input, shape index: {}]
  %s8 = inlined_call_operand.hbm [shape: f32[1,256], index: 8, kind: input, shape index: {}]
  %s9 = inlined_call_operand.vmem [shape: bf16[8,256], index: 9, kind: input, shape index: {}]
  %s10 = inlined_call_operand.hbm [shape: f32[1,128], index: 10, kind: output, shape index: {}]
  %s11 = sld [smem:[#allocation0]]
  $region78: #{tpu_custom_call.1} parent=0
    _
  %s13 = ssub.s32 1, %s11
  %s14 = scalar_select 0, %s13, %s11
  $region1: #{tpu_custom_call.1} parent=0
    #allocation2 [shape = 'u8[512]{0}', space=vmem, size = 0x400, scoped, tag = 'input window, operand 2, single buffered']
    #allocation3 [shape = 's32[1]{0}', space=sflag, size = 0x4, scoped, tag = 'scoped memory for tpu_custom_call.1']
    #allocation4 [shape = 's32[1]{0}', space=sflag, size = 0x4, scoped, tag = 'scoped memory for tpu_custom_call.1']
    #allocation5 [shape = 'u8[512]{0}', space=vmem, size = 0x400, scoped, tag = 'input window, operand 3, single buffered']
    #allocation6 [shape = 's32[1]{0}', space=sflag, size = 0x4, scoped, tag = 'scoped memory for tpu_custom_call.1']
    #allocation7 [shape = 'u8[131072]{0}', space=vmem, size = 0x20000, scoped, tag = 'input window, operand 4, single buffered']
    #allocation8 [shape = 'u8[65536]{0}', space=vmem, size = 0x10000, scoped, tag = 'input window, operand 5, single buffered']
    #allocation9 [shape = 's32[1]{0}', space=sflag, size = 0x4, scoped, tag = 'scoped memory for tpu_custom_call.1']
    #allocation10 [shape = 'u8[1024]{0}', space=vmem, size = 0x400, scoped, tag = 'input window, operand 6, single buffered']
    #allocation11 [shape = 'u8[131072]{0}', space=vmem, size = 0x20000, scoped, tag = 'input window, operand 7, single buffered']
    #allocation12 [shape = 's32[1]{0}', space=sflag, size = 0x4, scoped, tag = 'scoped memory for tpu_custom_call.1']
    #allocation13 [shape = 'u8[1024]{0}', space=vmem, size = 0x400, scoped, tag = 'input window, operand 8, single buffered']
    #allocation14 [shape = 'u8[512]{0}', space=vmem, size = 0x400, scoped, tag = 'output window, operand 0, single buffered']
    %15 = vsyncpa [#allocation3], 0
    %16 = vsyncpa [#allocation6], 0
    %17 = vsyncpa [#allocation9], 0
    %18 = vsyncpa [#allocation12], 0
    %19 = vsyncpa [#allocation4], 0
    // Predicated region
    $region2: #{tpu_custom_call.1} parent=1 // pred_check
      _
    $region3: #{tpu_custom_call.1} parent=1 // pred_check_branch
      %21 = sbr.rel (0) target = $region5
    $region4: #{tpu_custom_call.1} parent=1 // pred_region
      _
    $region5: #{tpu_custom_call.1} parent=1 // pred_fallthru
      _
    // Predicated region
    $region6: #{tpu_custom_call.1} parent=1 // pred_check
      _
    $region7: #{tpu_custom_call.1} parent=1 // pred_check_branch
      %23 = sbr.rel (0) target = $region9
    $region8: #{tpu_custom_call.1} parent=1 // pred_region
      _
    $region9: #{tpu_custom_call.1} parent=1 // pred_fallthru
      _
    // Predicated region
    $region10: #{tpu_custom_call.1} parent=1 // pred_check
      _
    $region11: #{tpu_custom_call.1} parent=1 // pred_check_branch
      %25 = sbr.rel (0) target = $region13
    $region12: #{tpu_custom_call.1} parent=1 // pred_region
      %27 = vsyncadd [#allocation3], 0
      %s29 = sshll.u32 %s2, 4
      %s30 = int_to_ptr.hbm [resolvable:$true] %s29
      %s31 = sshll.u32 [#allocation2], 4
      %s32 = int_to_ptr.vmem [resolvable:$true] %s31
      %34 = dma.hbm_to_vmem [thread:$0]  %s30, 16, %s32, [#allocation3]
    $region13: #{tpu_custom_call.1} parent=1 // pred_fallthru
      _
    // Predicated region
    $region14: #{tpu_custom_call.1} parent=1 // pred_check
      _
    $region15: #{tpu_custom_call.1} parent=1 // pred_check_branch
      %36 = sbr.rel (0) target = $region17
    $region16: #{tpu_custom_call.1} parent=1 // pred_region
      %38 = vsyncadd [#allocation6], 0
      %s40 = sshll.u32 %s3, 4
      %s41 = int_to_ptr.hbm [resolvable:$true] %s40
      %s42 = sshll.u32 [#allocation5], 4
      %s43 = int_to_ptr.vmem [resolvable:$true] %s42
      %45 = dma.hbm_to_vmem [thread:$0]  %s41, 16, %s43, [#allocation6]
    $region17: #{tpu_custom_call.1} parent=1 // pred_fallthru
      _
    // Predicated region
    $region18: #{tpu_custom_call.1} parent=1 // pred_check
      _
    $region19: #{tpu_custom_call.1} parent=1 // pred_check_branch
      %47 = sbr.rel (0) target = $region21
    $region20: #{tpu_custom_call.1} parent=1 // pred_region
      %49 = vsyncadd [#allocation6], 0
      %s50 = sshll.u32 %s4, 4
      %s51 = int_to_ptr.hbm [resolvable:$true] %s50
      %s52 = sshll.u32 [#allocation7], 4
      %s53 = int_to_ptr.vmem [resolvable:$true] %s52
      %58 = dma.hbm_to_vmem [thread:$0]  %s51, 4096, %s53, [#allocation6], 128, 128, 8
    $region21: #{tpu_custom_call.1} parent=1 // pred_fallthru
      _
    // Predicated region
    $region22: #{tpu_custom_call.1} parent=1 // pred_check
      _
    $region23: #{tpu_custom_call.1} parent=1 // pred_check_branch
      %60 = sbr.rel (0) target = $region25
    $region24: #{tpu_custom_call.1} parent=1 // pred_region
      %62 = vsyncadd [#allocation9], 0
      %s63 = sshll.u32 %s5, 4
      %s64 = int_to_ptr.hbm [resolvable:$true] %s63
      %s65 = sshll.u32 [#allocation8], 4
      %s66 = int_to_ptr.vmem [resolvable:$true] %s65
      %71 = dma.hbm_to_vmem [thread:$0]  %s64, 2048, %s66, [#allocation9], 128, 128, 8
    $region25: #{tpu_custom_call.1} parent=1 // pred_fallthru
      _
    // Predicated region
    $region26: #{tpu_custom_call.1} parent=1 // pred_check
      _
    $region27: #{tpu_custom_call.1} parent=1 // pred_check_branch
      %73 = sbr.rel (0) target = $region29
    $region28: #{tpu_custom_call.1} parent=1 // pred_region
      %75 = vsyncadd [#allocation9], 0
      %s77 = sshll.u32 %s6, 4
      %s78 = int_to_ptr.hbm [resolvable:$true] %s77
      %s79 = sshll.u32 [#allocation10], 4
      %s80 = int_to_ptr.vmem [resolvable:$true] %s79
      %82 = dma.hbm_to_vmem [thread:$0]  %s78, 32, %s80, [#allocation9]
    $region29: #{tpu_custom_call.1} parent=1 // pred_fallthru
      _
    // Predicated region
    $region30: #{tpu_custom_call.1} parent=1 // pred_check
      _
    $region31: #{tpu_custom_call.1} parent=1 // pred_check_branch
      %84 = sbr.rel (0) target = $region33
    $region32: #{tpu_custom_call.1} parent=1 // pred_region
      %86 = vsyncadd [#allocation12], 0
      %s87 = sshll.u32 %s7, 4
      %s88 = int_to_ptr.hbm [resolvable:$true] %s87
      %s89 = sshll.u32 [#allocation11], 4
      %s90 = int_to_ptr.vmem [resolvable:$true] %s89
      %95 = dma.hbm_to_vmem [thread:$0]  %s88, 4096, %s90, [#allocation12], 128, 128, 8
    $region33: #{tpu_custom_call.1} parent=1 // pred_fallthru
      _
    // Predicated region
    $region34: #{tpu_custom_call.1} parent=1 // pred_check
      _
    $region35: #{tpu_custom_call.1} parent=1 // pred_check_branch
      %97 = sbr.rel (0) target = $region37
    $region36: #{tpu_custom_call.1} parent=1 // pred_region
      %99 = vsyncadd [#allocation12], 0
      %s101 = sshll.u32 %s8, 4
      %s102 = int_to_ptr.hbm [resolvable:$true] %s101
      %s103 = sshll.u32 [#allocation13], 4
      %s104 = int_to_ptr.vmem [resolvable:$true] %s103
      %106 = dma.hbm_to_vmem [thread:$0]  %s102, 32, %s104, [#allocation12]
    $region37: #{tpu_custom_call.1} parent=1 // pred_fallthru
      _
    // Predicated region
    $region38: #{tpu_custom_call.1} parent=1 // pred_check
      _
    $region39: #{tpu_custom_call.1} parent=1 // pred_check_branch
      %108 = sbr.rel (0) target = $region41
    $region40: #{tpu_custom_call.1} parent=1 // pred_region
      _
    $region41: #{tpu_custom_call.1} parent=1 // pred_fallthru
      _
    // Predicated region
    $region42: #{tpu_custom_call.1} parent=1 // pred_check
      _
    $region43: #{tpu_custom_call.1} parent=1 // pred_check_branch
      %110 = sbr.rel (0) target = $region45
    $region44: #{tpu_custom_call.1} parent=1 // pred_region
      %112 = dma.done [#allocation3], 16
    $region45: #{tpu_custom_call.1} parent=1 // pred_fallthru
      _
    // Predicated region
    $region46: #{tpu_custom_call.1} parent=1 // pred_check
      _
    $region47: #{tpu_custom_call.1} parent=1 // pred_check_branch
      %114 = sbr.rel (0) target = $region49
    $region48: #{tpu_custom_call.1} parent=1 // pred_region
      %116 = dma.done [#allocation6], 16
    $region49: #{tpu_custom_call.1} parent=1 // pred_fallthru
      _
    // Predicated region
    $region50: #{tpu_custom_call.1} parent=1 // pred_check
      _
    $region51: #{tpu_custom_call.1} parent=1 // pred_check_branch
      %118 = sbr.rel (0) target = $region53
    $region52: #{tpu_custom_call.1} parent=1 // pred_region
      %120 = dma.done [#allocation6], 4096
    $region53: #{tpu_custom_call.1} parent=1 // pred_fallthru
      _
    // Predicated region
    $region54: #{tpu_custom_call.1} parent=1 // pred_check
      _
    $region55: #{tpu_custom_call.1} parent=1 // pred_check_branch
      %122 = sbr.rel (0) target = $region57
    $region56: #{tpu_custom_call.1} parent=1 // pred_region
      %124 = dma.done [#allocation9], 2048
    $region57: #{tpu_custom_call.1} parent=1 // pred_fallthru
      _
    // Predicated region
    $region58: #{tpu_custom_call.1} parent=1 // pred_check
      _
    $region59: #{tpu_custom_call.1} parent=1 // pred_check_branch
      %126 = sbr.rel (0) target = $region61
    $region60: #{tpu_custom_call.1} parent=1 // pred_region
      %128 = dma.done [#allocation9], 32
    $region61: #{tpu_custom_call.1} parent=1 // pred_fallthru
      _
    // Predicated region
    $region62: #{tpu_custom_call.1} parent=1 // pred_check
      _
    $region63: #{tpu_custom_call.1} parent=1 // pred_check_branch
      %130 = sbr.rel (0) target = $region65
    $region64: #{tpu_custom_call.1} parent=1 // pred_region
      %132 = dma.done [#allocation12], 4096
    $region65: #{tpu_custom_call.1} parent=1 // pred_fallthru
      _
    // Predicated region
    $region66: #{tpu_custom_call.1} parent=1 // pred_check
      _
    $region67: #{tpu_custom_call.1} parent=1 // pred_check_branch
      %134 = sbr.rel (0) target = $region69
    $region68: #{tpu_custom_call.1} parent=1 // pred_region
      %136 = dma.done [#allocation12], 32
    $region69: #{tpu_custom_call.1} parent=1 // pred_fallthru
      _
    %v137 = vld [vmem:[%s1] sm:$0xff]
    %v138 = vld [vmem:[%s1 + $0x8] sm:$0xff]
    %v139 = vld [vmem:[%s1 + $0x10] sm:$0xff]
    %v140 = vld [vmem:[%s1 + $0x18] sm:$0xff]
    %v141 = vld [vmem:[%s1 + $0x20] sm:$0xff]
    %v142 = vld [vmem:[%s1 + $0x28] sm:$0xff]
    %v143 = vld [vmem:[%s1 + $0x30] sm:$0xff]
    %v144 = vld [vmem:[%s1 + $0x38] sm:$0xff]
    %v145 = vld [vmem:[%s1 + $0x40] sm:$0xff]
    %v146 = vld [vmem:[%s1 + $0x48] sm:$0xff]
    %v147 = vld [vmem:[%s1 + $0x50] sm:$0xff]
    %v148 = vld [vmem:[%s1 + $0x58] sm:$0xff]
    %v149 = vld [vmem:[%s1 + $0x60] sm:$0xff]
    %v150 = vld [vmem:[%s1 + $0x68] sm:$0xff]
    %v151 = vld [vmem:[%s1 + $0x70] sm:$0xff]
    %v152 = vld [vmem:[%s1 + $0x78] sm:$0xff]
    %v153 = vld [vmem:[#allocation2] sm:$0x1]
    %155 = vset.pattern.permute.xlu0 0
    %156 = vperm.xlu0 %155, %v137
    %v157 = vpop.permute.xlu0 %156
    %160 = vset.pattern.permute.xlu0 0
    %161 = vperm.xlu0 %160, %v138
    %v162 = vpop.permute.xlu0 %161
    %165 = vset.pattern.permute.xlu0 0
    %166 = vperm.xlu0 %165, %v139
    %v167 = vpop.permute.xlu0 %166
    %170 = vset.pattern.permute.xlu0 0
    %171 = vperm.xlu0 %170, %v140
    %v172 = vpop.permute.xlu0 %171
    %175 = vset.pattern.permute.xlu0 0
    %176 = vperm.xlu0 %175, %v141
    %v177 = vpop.permute.xlu0 %176
    %180 = vset.pattern.permute.xlu0 0
    %181 = vperm.xlu0 %180, %v142
    %v182 = vpop.permute.xlu0 %181
    %185 = vset.pattern.permute.xlu0 0
    %186 = vperm.xlu0 %185, %v143
    %v187 = vpop.permute.xlu0 %186
    %190 = vset.pattern.permute.xlu0 0
    %191 = vperm.xlu0 %190, %v144
    %v192 = vpop.permute.xlu0 %191
    %195 = vset.pattern.permute.xlu0 0
    %196 = vperm.xlu0 %195, %v145
    %v197 = vpop.permute.xlu0 %196
    %200 = vset.pattern.permute.xlu0 0
    %201 = vperm.xlu0 %200, %v146
    %v202 = vpop.permute.xlu0 %201
    %205 = vset.pattern.permute.xlu0 0
    %206 = vperm.xlu0 %205, %v147
    %v207 = vpop.permute.xlu0 %206
    %210 = vset.pattern.permute.xlu0 0
    %211 = vperm.xlu0 %210, %v148
    %v212 = vpop.permute.xlu0 %211
    %215 = vset.pattern.permute.xlu0 0
    %216 = vperm.xlu0 %215, %v149
    %v217 = vpop.permute.xlu0 %216
    %220 = vset.pattern.permute.xlu0 0
    %221 = vperm.xlu0 %220, %v150
    %v222 = vpop.permute.xlu0 %221
    %225 = vset.pattern.permute.xlu0 0
    %226 = vperm.xlu0 %225, %v151
    %v227 = vpop.permute.xlu0 %226
    %230 = vset.pattern.permute.xlu0 0
    %231 = vperm.xlu0 %230, %v152
    %v232 = vpop.permute.xlu0 %231
    %v235 = vperm.slane %v153, 0
    %v237 = vmul.f32 %v157, %v235
    %v238 = vmul.f32 %v162, %v235
    %v239 = vmul.f32 %v167, %v235
    %v240 = vmul.f32 %v172, %v235
    %v241 = vmul.f32 %v177, %v235
    %v242 = vmul.f32 %v182, %v235
    %v243 = vmul.f32 %v187, %v235
    %v244 = vmul.f32 %v192, %v235
    %v245 = vmul.f32 %v197, %v235
    %v246 = vmul.f32 %v202, %v235
    %v247 = vmul.f32 %v207, %v235
    %v248 = vmul.f32 %v212, %v235
    %v249 = vmul.f32 %v217, %v235
    %v250 = vmul.f32 %v222, %v235
    %v251 = vmul.f32 %v227, %v235
    %v252 = vmul.f32 %v232, %v235
    %v253 = vld [vmem:[#allocation5] sm:$0x1]
    %v255 = vperm.slane %v253, 0
    %v257 = vadd.f32 %v237, %v255
    %v258 = vadd.f32 %v238, %v255
    %v259 = vadd.f32 %v239, %v255
    %v260 = vadd.f32 %v240, %v255
    %v261 = vadd.f32 %v241, %v255
    %v262 = vadd.f32 %v242, %v255
    %v263 = vadd.f32 %v243, %v255
    %v264 = vadd.f32 %v244, %v255
    %v265 = vadd.f32 %v245, %v255
    %v266 = vadd.f32 %v246, %v255
    %v267 = vadd.f32 %v247, %v255
    %v268 = vadd.f32 %v248, %v255
    %v269 = vadd.f32 %v249, %v255
    %v270 = vadd.f32 %v250, %v255
    %v271 = vadd.f32 %v251, %v255
    %v272 = vadd.f32 %v252, %v255
    %v273 = vand.u32 2147483647, %v257
    %vm274 = vcmp.le.f32.partialorder %v273, 0.7853982
    %vm275 = vcmp.lt.s32.totalorder %v257, 0
    %v276 = vand.u32 %v257, 2139095040
    %v277 = vshrl.u32 %v276, 23
    %v278 = vsub.s32 %v277, 127
    %v279 = vand.u32 2147483647, %v257
    %v280 = vand.u32 %v279, 8388607
    %v281 = vor.u32 %v280, 8388608
    %v282 = vsub.s32 0, %v281
    %v283 = vadd.s32 %v278, 1
    %vm284 = vcmp.gt.s32.totalorder %v283, 0
    %v285 = vsel %vm284, %v283, 0
    %v286 = vshrl.u32 %v285, 5
    %v287 = vand.u32 %v285, 31
    %v288 = vsub.s32 32, %v287
    %v289 = vshrl.u32 683565275, %v288
    %v290 = vshll.u32 683565275, %v287
    %v291 = vshrl.u32 2475754826, %v288
    %v292 = vor.u32 %v290, %v291
    %v293 = vshll.u32 2475754826, %v287
    %v294 = vshrl.u32 2131351028, %v288
    %v295 = vor.u32 %v293, %v294
    %v296 = vshll.u32 2131351028, %v287
    %v297 = vshrl.u32 2102212464, %v288
    %v298 = vor.u32 %v296, %v297
    %v299 = vshll.u32 2102212464, %v287
    %v300 = vshrl.u32 920167782, %v288
    %v301 = vor.u32 %v299, %v300
    %v302 = vshll.u32 920167782, %v287
    %v303 = vshrl.u32 1326507024, %v288
    %v304 = vor.u32 %v302, %v303
    %vm305 = vcmp.lt.s32.totalorder %v286, 1
    %vm306 = vcmp.lt.s32.totalorder %v286, 2
    %vm307 = vcmp.lt.s32.totalorder %v286, 3
    %vm308 = vcmp.lt.s32.totalorder %v286, 4
    %v309 = vsel %vm305, %v289, %v292
    %v310 = vsel %vm308, %v298, 2102212464
    %v311 = vsel %vm307, %v295, %v310
    %v312 = vsel %vm306, %v309, %v311
    %v313 = vsel %vm305, %v292, %v295
    %v314 = vsel %vm308, %v301, 920167782
    %v315 = vsel %vm307, %v298, %v314
    %v316 = vsel %vm306, %v313, %v315
    %v317 = vsel %vm305, %v295, %v298
    %v318 = vsel %vm308, %v304, 1326507024
    %v319 = vsel %vm307, %v301, %v318
    %v320 = vsel %vm306, %v317, %v319
    %v321 = vshll.u32 %v281, 8
    %v322 = vand.u32 %v321, 65535
    %v323 = vshrl.u32 %v321, 16
    %v324 = vand.u32 %v320, 65535
    %v325 = vshrl.u32 %v320, 16
    %v326 = vmul.u32 %v322, %v324
    %v327 = vmul.u32 %v322, %v325
    %v328 = vmul.u32 %v323, %v324
    %v329 = vmul.u32 %v323, %v325
    %v330 = vshll.u32 %v327, 16
    %v331 = vshrl.u32 %v327, 16
    %v332 = vshll.u32 %v328, 16
    %v333 = vshrl.u32 %v328, 16
    %vm334 = vc.u32 %v326, %v330
    %v335 = vsel %vm334, 1, 0
    %v336 = vadd.s32 %v326, %v330
    %v337 = vadd.s32 %v329, %v335
    %vm338 = vc.u32 %v336, %v332
    %v339 = vsel %vm338, 1, 0
    %v340 = vadd.s32 %v336, %v332
    %v341 = vadd.s32 %v337, %v339
    %v342 = vadd.s32 %v341, %v331
    %v343 = vadd.s32 %v342, %v333
    %v344 = vand.u32 %v321, 65535
    %v345 = vshrl.u32 %v321, 16
    %v346 = vand.u32 %v316, 65535
    %v347 = vshrl.u32 %v316, 16
    %v348 = vmul.u32 %v344, %v346
    %v349 = vmul.u32 %v344, %v347
    %v350 = vmul.u32 %v345, %v346
    %v351 = vmul.u32 %v345, %v347
    %v352 = vshll.u32 %v349, 16
    %v353 = vshrl.u32 %v349, 16
    %v354 = vshll.u32 %v350, 16
    %v355 = vshrl.u32 %v350, 16
    %vm356 = vc.u32 %v348, %v352
    %v357 = vsel %vm356, 1, 0
    %v358 = vadd.s32 %v348, %v352
    %v359 = vadd.s32 %v351, %v357
    %vm360 = vc.u32 %v358, %v354
    %v361 = vsel %vm360, 1, 0
    %v362 = vadd.s32 %v358, %v354
    %v363 = vadd.s32 %v359, %v361
    %v364 = vadd.s32 %v363, %v353
    %v365 = vadd.s32 %v364, %v355
    %v366 = vmul.u32 %v321, %v312
    %v367 = vadd.s32 %v343, %v362
    %vm368 = vc.u32 %v343, %v362
    %v369 = vadd.s32 %v365, 1
    %v370 = vsel %vm368, %v369, %v365
    %v371 = vadd.s32 %v366, %v370
    %v372 = vadd.s32 %v371, 536870912
    %v373 = vshrl.u32 %v372, 30
    %v374 = vshll.u32 %v373, 30
    %v375 = vsub.s32 %v371, %v374
    %vm376 = vcmp.lt.s32.totalorder %v375, 0
    %v377 = vsub.s32 0, %v375
    %v378 = vsel %vm376, %v377, %v375
    %v379 = vclz %v378
    %v380 = vsub.s32 %v379, 2
    %vm381 = vcmp.gt.s32.totalorder 0, %v380
    %v382 = vsel %vm381, 0, %v380
    %v383 = vsub.s32 32, %v382
    %v384 = vshll.u32 %v375, %v382
    %v385 = vshrl.u32 %v367, %v383
    %v386 = vor.u32 %v384, %v385
    %v387 = vsub.s32 4294967266, %v382
    %v388 = vadd.s32 %v387, 127
    %v389 = vshll.u32 %v388, 23
    %v390 = vor.u32 4788187, %v389
    %v391 = vand.u32 2147483647, %v390
    %v393 = vcvt.s32.f32 %v386
    %v394 = vmul.f32 %v393, %v391
    %v395 = vxor.u32 %v394, 2147483648
    %v396 = vsel %vm275, %v395, %v394
    %v397 = vsub.s32 4, %v373
    %v398 = vsel %vm275, %v397, %v373
    %v399 = vsel %vm274, %v257, %v396
    %v400 = vsel %vm274, 0, %v398
    %v401 = vmul.f32 %v399, %v399
    %v402 = vmul.f32 %v401, -0.001358992
    %v403 = vadd.f32 %v402, 0.041655596
    %v404 = vmul.f32 %v401, %v403
    %v405 = vadd.f32 %v404, -0.4999988
    %v406 = vmul.f32 %v401, %v405
    %v407 = vadd.f32 1.0, %v406
    %v408 = vmul.f32 %v399, %v399
    %v409 = vmul.f32 %v408, -0.00019511016
    %v410 = vadd.f32 %v409, 0.008332121
    %v411 = vmul.f32 %v408, %v410
    %v412 = vadd.f32 %v411, -0.16666654
    %v413 = vmul.f32 %v408, %v412
    %v414 = vadd.f32 %v413, 1.0
    %v415 = vmul.f32 %v414, %v399
    %vm416 = vweird.f32 %v257
    %v417 = vadd.s32 %v400, 3
    %v418 = vand.u32 %v417, 3
    %vm419 = vcmp.lt.s32.totalorder %v418, 2
    %vm420 = vcmp.eq.s32.totalorder %v418, 0
    %v421 = vxor.u32 %v415, 2147483648
    %v422 = vsel %vm420, %v407, %v421
    %vm423 = vcmp.eq.s32.totalorder %v418, 2
    %v424 = vxor.u32 %v407, 2147483648
    %v425 = vsel %vm423, %v424, %v415
    %v426 = vsel %vm419, %v422, %v425
    %v427 = vsel %vm416, nan, %v426
    %v428 = vand.u32 2147483647, %v258
    %vm429 = vcmp.le.f32.partialorder %v428, 0.7853982
    %vm430 = vcmp.lt.s32.totalorder %v258, 0
    %v431 = vand.u32 %v258, 2139095040
    %v432 = vshrl.u32 %v431, 23
    %v433 = vsub.s32 %v432, 127
    %v434 = vand.u32 2147483647, %v258
    %v435 = vand.u32 %v434, 8388607
    %v436 = vor.u32 %v435, 8388608
    %v437 = vsub.s32 0, %v436
    %v438 = vadd.s32 %v433, 1
    %vm439 = vcmp.gt.s32.totalorder %v438, 0
    %v440 = vsel %vm439, %v438, 0
    %v441 = vshrl.u32 %v440, 5
    %v442 = vand.u32 %v440, 31
    %v443 = vsub.s32 32, %v442
    %v444 = vshrl.u32 683565275, %v443
    %v445 = vshll.u32 683565275, %v442
    %v446 = vshrl.u32 2475754826, %v443
    %v447 = vor.u32 %v445, %v446
    %v448 = vshll.u32 2475754826, %v442
    %v449 = vshrl.u32 2131351028, %v443
    %v450 = vor.u32 %v448, %v449
    %v451 = vshll.u32 2131351028, %v442
    %v452 = vshrl.u32 2102212464, %v443
    %v453 = vor.u32 %v451, %v452
    %v454 = vshll.u32 2102212464, %v442
    %v455 = vshrl.u32 920167782, %v443
    %v456 = vor.u32 %v454, %v455
    %v457 = vshll.u32 920167782, %v442
    %v458 = vshrl.u32 1326507024, %v443
    %v459 = vor.u32 %v457, %v458
    %vm460 = vcmp.lt.s32.totalorder %v441, 1
    %vm461 = vcmp.lt.s32.totalorder %v441, 2
    %vm462 = vcmp.lt.s32.totalorder %v441, 3
    %vm463 = vcmp.lt.s32.totalorder %v441, 4
    %v464 = vsel %vm460, %v444, %v447
    %v465 = vsel %vm463, %v453, 2102212464
    %v466 = vsel %vm462, %v450, %v465
    %v467 = vsel %vm461, %v464, %v466
    %v468 = vsel %vm460, %v447, %v450
    %v469 = vsel %vm463, %v456, 920167782
    %v470 = vsel %vm462, %v453, %v469
    %v471 = vsel %vm461, %v468, %v470
    %v472 = vsel %vm460, %v450, %v453
    %v473 = vsel %vm463, %v459, 1326507024
    %v474 = vsel %vm462, %v456, %v473
    %v475 = vsel %vm461, %v472, %v474
    %v476 = vshll.u32 %v436, 8
    %v477 = vand.u32 %v476, 65535
    %v478 = vshrl.u32 %v476, 16
    %v479 = vand.u32 %v475, 65535
    %v480 = vshrl.u32 %v475, 16
    %v481 = vmul.u32 %v477, %v479
    %v482 = vmul.u32 %v477, %v480
    %v483 = vmul.u32 %v478, %v479
    %v484 = vmul.u32 %v478, %v480
    %v485 = vshll.u32 %v482, 16
    %v486 = vshrl.u32 %v482, 16
    %v487 = vshll.u32 %v483, 16
    %v488 = vshrl.u32 %v483, 16
    %vm489 = vc.u32 %v481, %v485
    %v490 = vsel %vm489, 1, 0
    %v491 = vadd.s32 %v481, %v485
    %v492 = vadd.s32 %v484, %v490
    %vm493 = vc.u32 %v491, %v487
    %v494 = vsel %vm493, 1, 0
    %v495 = vadd.s32 %v491, %v487
    %v496 = vadd.s32 %v492, %v494
    %v497 = vadd.s32 %v496, %v486
    %v498 = vadd.s32 %v497, %v488
    %v499 = vand.u32 %v476, 65535
    %v500 = vshrl.u32 %v476, 16
    %v501 = vand.u32 %v471, 65535
    %v502 = vshrl.u32 %v471, 16
    %v503 = vmul.u32 %v499, %v501
    %v504 = vmul.u32 %v499, %v502
    %v505 = vmul.u32 %v500, %v501
    %v506 = vmul.u32 %v500, %v502
    %v507 = vshll.u32 %v504, 16
    %v508 = vshrl.u32 %v504, 16
    %v509 = vshll.u32 %v505, 16
    %v510 = vshrl.u32 %v505, 16
    %vm511 = vc.u32 %v503, %v507
    %v512 = vsel %vm511, 1, 0
    %v513 = vadd.s32 %v503, %v507
    %v514 = vadd.s32 %v506, %v512
    %vm515 = vc.u32 %v513, %v509
    %v516 = vsel %vm515, 1, 0
    %v517 = vadd.s32 %v513, %v509
    %v518 = vadd.s32 %v514, %v516
    %v519 = vadd.s32 %v518, %v508
    %v520 = vadd.s32 %v519, %v510
    %v521 = vmul.u32 %v476, %v467
    %v522 = vadd.s32 %v498, %v517
    %vm523 = vc.u32 %v498, %v517
    %v524 = vadd.s32 %v520, 1
    %v525 = vsel %vm523, %v524, %v520
    %v526 = vadd.s32 %v521, %v525
    %v527 = vadd.s32 %v526, 536870912
    %v528 = vshrl.u32 %v527, 30
    %v529 = vshll.u32 %v528, 30
    %v530 = vsub.s32 %v526, %v529
    %vm531 = vcmp.lt.s32.totalorder %v530, 0
    %v532 = vsub.s32 0, %v530
    %v533 = vsel %vm531, %v532, %v530
    %v534 = vclz %v533
    %v535 = vsub.s32 %v534, 2
    %vm536 = vcmp.gt.s32.totalorder 0, %v535
    %v537 = vsel %vm536, 0, %v535
    %v538 = vsub.s32 32, %v537
    %v539 = vshll.u32 %v530, %v537
    %v540 = vshrl.u32 %v522, %v538
    %v541 = vor.u32 %v539, %v540
    %v542 = vsub.s32 4294967266, %v537
    %v543 = vadd.s32 %v542, 127
    %v544 = vshll.u32 %v543, 23
    %v545 = vor.u32 4788187, %v544
    %v546 = vand.u32 2147483647, %v545
    %v548 = vcvt.s32.f32 %v541
    %v549 = vmul.f32 %v548, %v546
    %v550 = vxor.u32 %v549, 2147483648
    %v551 = vsel %vm430, %v550, %v549
    %v552 = vsub.s32 4, %v528
    %v553 = vsel %vm430, %v552, %v528
    %v554 = vsel %vm429, %v258, %v551
    %v555 = vsel %vm429, 0, %v553
    %v556 = vmul.f32 %v554, %v554
    %v557 = vmul.f32 %v556, -0.001358992
    %v558 = vadd.f32 %v557, 0.041655596
    %v559 = vmul.f32 %v556, %v558
    %v560 = vadd.f32 %v559, -0.4999988
    %v561 = vmul.f32 %v556, %v560
    %v562 = vadd.f32 1.0, %v561
    %v563 = vmul.f32 %v554, %v554
    %v564 = vmul.f32 %v563, -0.00019511016
    %v565 = vadd.f32 %v564, 0.008332121
    %v566 = vmul.f32 %v563, %v565
    %v567 = vadd.f32 %v566, -0.16666654
    %v568 = vmul.f32 %v563, %v567
    %v569 = vadd.f32 %v568, 1.0
    %v570 = vmul.f32 %v569, %v554
    %vm571 = vweird.f32 %v258
    %v572 = vadd.s32 %v555, 3
    %v573 = vand.u32 %v572, 3
    %vm574 = vcmp.lt.s32.totalorder %v573, 2
    %vm575 = vcmp.eq.s32.totalorder %v573, 0
    %v576 = vxor.u32 %v570, 2147483648
    %v577 = vsel %vm575, %v562, %v576
    %vm578 = vcmp.eq.s32.totalorder %v573, 2
    %v579 = vxor.u32 %v562, 2147483648
    %v580 = vsel %vm578, %v579, %v570
    %v581 = vsel %vm574, %v577, %v580
    %v582 = vsel %vm571, nan, %v581
    %v583 = vand.u32 2147483647, %v259
    %vm584 = vcmp.le.f32.partialorder %v583, 0.7853982
    %vm585 = vcmp.lt.s32.totalorder %v259, 0
    %v586 = vand.u32 %v259, 2139095040
    %v587 = vshrl.u32 %v586, 23
    %v588 = vsub.s32 %v587, 127
    %v589 = vand.u32 2147483647, %v259
    %v590 = vand.u32 %v589, 8388607
    %v591 = vor.u32 %v590, 8388608
    %v592 = vsub.s32 0, %v591
    %v593 = vadd.s32 %v588, 1
    %vm594 = vcmp.gt.s32.totalorder %v593, 0
    %v595 = vsel %vm594, %v593, 0
    %v596 = vshrl.u32 %v595, 5
    %v597 = vand.u32 %v595, 31
    %v598 = vsub.s32 32, %v597
    %v599 = vshrl.u32 683565275, %v598
    %v600 = vshll.u32 683565275, %v597
    %v601 = vshrl.u32 2475754826, %v598
    %v602 = vor.u32 %v600, %v601
    %v603 = vshll.u32 2475754826, %v597
    %v604 = vshrl.u32 2131351028, %v598
    %v605 = vor.u32 %v603, %v604
    %v606 = vshll.u32 2131351028, %v597
    %v607 = vshrl.u32 2102212464, %v598
    %v608 = vor.u32 %v606, %v607
    %v609 = vshll.u32 2102212464, %v597
    %v610 = vshrl.u32 920167782, %v598
    %v611 = vor.u32 %v609, %v610
    %v612 = vshll.u32 920167782, %v597
    %v613 = vshrl.u32 1326507024, %v598
    %v614 = vor.u32 %v612, %v613
    %vm615 = vcmp.lt.s32.totalorder %v596, 1
    %vm616 = vcmp.lt.s32.totalorder %v596, 2
    %vm617 = vcmp.lt.s32.totalorder %v596, 3
    %vm618 = vcmp.lt.s32.totalorder %v596, 4
    %v619 = vsel %vm615, %v599, %v602
    %v620 = vsel %vm618, %v608, 2102212464
    %v621 = vsel %vm617, %v605, %v620
    %v622 = vsel %vm616, %v619, %v621
    %v623 = vsel %vm615, %v602, %v605
    %v624 = vsel %vm618, %v611, 920167782
    %v625 = vsel %vm617, %v608, %v624
    %v626 = vsel %vm616, %v623, %v625
    %v627 = vsel %vm615, %v605, %v608
    %v628 = vsel %vm618, %v614, 1326507024
    %v629 = vsel %vm617, %v611, %v628
    %v630 = vsel %vm616, %v627, %v629
    %v631 = vshll.u32 %v591, 8
    %v632 = vand.u32 %v631, 65535
    %v633 = vshrl.u32 %v631, 16
    %v634 = vand.u32 %v630, 65535
    %v635 = vshrl.u32 %v630, 16
    %v636 = vmul.u32 %v632, %v634
    %v637 = vmul.u32 %v632, %v635
    %v638 = vmul.u32 %v633, %v634
    %v639 = vmul.u32 %v633, %v635
    %v640 = vshll.u32 %v637, 16
    %v641 = vshrl.u32 %v637, 16
    %v642 = vshll.u32 %v638, 16
    %v643 = vshrl.u32 %v638, 16
    %vm644 = vc.u32 %v636, %v640
    %v645 = vsel %vm644, 1, 0
    %v646 = vadd.s32 %v636, %v640
    %v647 = vadd.s32 %v639, %v645
    %vm648 = vc.u32 %v646, %v642
    %v649 = vsel %vm648, 1, 0
    %v650 = vadd.s32 %v646, %v642
    %v651 = vadd.s32 %v647, %v649
    %v652 = vadd.s32 %v651, %v641
    %v653 = vadd.s32 %v652, %v643
    %v654 = vand.u32 %v631, 65535
    %v655 = vshrl.u32 %v631, 16
    %v656 = vand.u32 %v626, 65535
    %v657 = vshrl.u32 %v626, 16
    %v658 = vmul.u32 %v654, %v656
    %v659 = vmul.u32 %v654, %v657
    %v660 = vmul.u32 %v655, %v656
    %v661 = vmul.u32 %v655, %v657
    %v662 = vshll.u32 %v659, 16
    %v663 = vshrl.u32 %v659, 16
    %v664 = vshll.u32 %v660, 16
    %v665 = vshrl.u32 %v660, 16
    %vm666 = vc.u32 %v658, %v662
    %v667 = vsel %vm666, 1, 0
    %v668 = vadd.s32 %v658, %v662
    %v669 = vadd.s32 %v661, %v667
    %vm670 = vc.u32 %v668, %v664
    %v671 = vsel %vm670, 1, 0
    %v672 = vadd.s32 %v668, %v664
    %v673 = vadd.s32 %v669, %v671
    %v674 = vadd.s32 %v673, %v663
    %v675 = vadd.s32 %v674, %v665
    %v676 = vmul.u32 %v631, %v622
    %v677 = vadd.s32 %v653, %v672
    %vm678 = vc.u32 %v653, %v672
    %v679 = vadd.s32 %v675, 1
    %v680 = vsel %vm678, %v679, %v675
    %v681 = vadd.s32 %v676, %v680
    %v682 = vadd.s32 %v681, 536870912
    %v683 = vshrl.u32 %v682, 30
    %v684 = vshll.u32 %v683, 30
    %v685 = vsub.s32 %v681, %v684
    %vm686 = vcmp.lt.s32.totalorder %v685, 0
    %v687 = vsub.s32 0, %v685
    %v688 = vsel %vm686, %v687, %v685
    %v689 = vclz %v688
    %v690 = vsub.s32 %v689, 2
    %vm691 = vcmp.gt.s32.totalorder 0, %v690
    %v692 = vsel %vm691, 0, %v690
    %v693 = vsub.s32 32, %v692
    %v694 = vshll.u32 %v685, %v692
    %v695 = vshrl.u32 %v677, %v693
    %v696 = vor.u32 %v694, %v695
    %v697 = vsub.s32 4294967266, %v692
    %v698 = vadd.s32 %v697, 127
    %v699 = vshll.u32 %v698, 23
    %v700 = vor.u32 4788187, %v699
    %v701 = vand.u32 2147483647, %v700
    %v703 = vcvt.s32.f32 %v696
    %v704 = vmul.f32 %v703, %v701
    %v705 = vxor.u32 %v704, 2147483648
    %v706 = vsel %vm585, %v705, %v704
    %v707 = vsub.s32 4, %v683
    %v708 = vsel %vm585, %v707, %v683
    %v709 = vsel %vm584, %v259, %v706
    %v710 = vsel %vm584, 0, %v708
    %v711 = vmul.f32 %v709, %v709
    %v712 = vmul.f32 %v711, -0.001358992
    %v713 = vadd.f32 %v712, 0.041655596
    %v714 = vmul.f32 %v711, %v713
    %v715 = vadd.f32 %v714, -0.4999988
    %v716 = vmul.f32 %v711, %v715
    %v717 = vadd.f32 1.0, %v716
    %v718 = vmul.f32 %v709, %v709
    %v719 = vmul.f32 %v718, -0.00019511016
    %v720 = vadd.f32 %v719, 0.008332121
    %v721 = vmul.f32 %v718, %v720
    %v722 = vadd.f32 %v721, -0.16666654
    %v723 = vmul.f32 %v718, %v722
    %v724 = vadd.f32 %v723, 1.0
    %v725 = vmul.f32 %v724, %v709
    %vm726 = vweird.f32 %v259
    %v727 = vadd.s32 %v710, 3
    %v728 = vand.u32 %v727, 3
    %vm729 = vcmp.lt.s32.totalorder %v728, 2
    %vm730 = vcmp.eq.s32.totalorder %v728, 0
    %v731 = vxor.u32 %v725, 2147483648
    %v732 = vsel %vm730, %v717, %v731
    %vm733 = vcmp.eq.s32.totalorder %v728, 2
    %v734 = vxor.u32 %v717, 2147483648
    %v735 = vsel %vm733, %v734, %v725
    %v736 = vsel %vm729, %v732, %v735
    %v737 = vsel %vm726, nan, %v736
    %v738 = vand.u32 2147483647, %v260
    %vm739 = vcmp.le.f32.partialorder %v738, 0.7853982
    %vm740 = vcmp.lt.s32.totalorder %v260, 0
    %v741 = vand.u32 %v260, 2139095040
    %v742 = vshrl.u32 %v741, 23
    %v743 = vsub.s32 %v742, 127
    %v744 = vand.u32 2147483647, %v260
    %v745 = vand.u32 %v744, 8388607
    %v746 = vor.u32 %v745, 8388608
    %v747 = vsub.s32 0, %v746
    %v748 = vadd.s32 %v743, 1
    %vm749 = vcmp.gt.s32.totalorder %v748, 0
    %v750 = vsel %vm749, %v748, 0
    %v751 = vshrl.u32 %v750, 5
    %v752 = vand.u32 %v750, 31
    %v753 = vsub.s32 32, %v752
    %v754 = vshrl.u32 683565275, %v753
    %v755 = vshll.u32 683565275, %v752
    %v756 = vshrl.u32 2475754826, %v753
    %v757 = vor.u32 %v755, %v756
    %v758 = vshll.u32 2475754826, %v752
    %v759 = vshrl.u32 2131351028, %v753
    %v760 = vor.u32 %v758, %v759
    %v761 = vshll.u32 2131351028, %v752
    %v762 = vshrl.u32 2102212464, %v753
    %v763 = vor.u32 %v761, %v762
    %v764 = vshll.u32 2102212464, %v752
    %v765 = vshrl.u32 920167782, %v753
    %v766 = vor.u32 %v764, %v765
    %v767 = vshll.u32 920167782, %v752
    %v768 = vshrl.u32 1326507024, %v753
    %v769 = vor.u32 %v767, %v768
    %vm770 = vcmp.lt.s32.totalorder %v751, 1
    %vm771 = vcmp.lt.s32.totalorder %v751, 2
    %vm772 = vcmp.lt.s32.totalorder %v751, 3
    %vm773 = vcmp.lt.s32.totalorder %v751, 4
    %v774 = vsel %vm770, %v754, %v757
    %v775 = vsel %vm773, %v763, 2102212464
    %v776 = vsel %vm772, %v760, %v775
    %v777 = vsel %vm771, %v774, %v776
    %v778 = vsel %vm770, %v757, %v760
    %v779 = vsel %vm773, %v766, 920167782
    %v780 = vsel %vm772, %v763, %v779
    %v781 = vsel %vm771, %v778, %v780
    %v782 = vsel %vm770, %v760, %v763
    %v783 = vsel %vm773, %v769, 1326507024
    %v784 = vsel %vm772, %v766, %v783
    %v785 = vsel %vm771, %v782, %v784
    %v786 = vshll.u32 %v746, 8
    %v787 = vand.u32 %v786, 65535
    %v788 = vshrl.u32 %v786, 16
    %v789 = vand.u32 %v785, 65535
    %v790 = vshrl.u32 %v785, 16
    %v791 = vmul.u32 %v787, %v789
    %v792 = vmul.u32 %v787, %v790
    %v793 = vmul.u32 %v788, %v789
    %v794 = vmul.u32 %v788, %v790
    %v795 = vshll.u32 %v792, 16
    %v796 = vshrl.u32 %v792, 16
    %v797 = vshll.u32 %v793, 16
    %v798 = vshrl.u32 %v793, 16
    %vm799 = vc.u32 %v791, %v795
    %v800 = vsel %vm799, 1, 0
    %v801 = vadd.s32 %v791, %v795
    %v802 = vadd.s32 %v794, %v800
    %vm803 = vc.u32 %v801, %v797
    %v804 = vsel %vm803, 1, 0
    %v805 = vadd.s32 %v801, %v797
    %v806 = vadd.s32 %v802, %v804
    %v807 = vadd.s32 %v806, %v796
    %v808 = vadd.s32 %v807, %v798
    %v809 = vand.u32 %v786, 65535
    %v810 = vshrl.u32 %v786, 16
    %v811 = vand.u32 %v781, 65535
    %v812 = vshrl.u32 %v781, 16
    %v813 = vmul.u32 %v809, %v811
    %v814 = vmul.u32 %v809, %v812
    %v815 = vmul.u32 %v810, %v811
    %v816 = vmul.u32 %v810, %v812
    %v817 = vshll.u32 %v814, 16
    %v818 = vshrl.u32 %v814, 16
    %v819 = vshll.u32 %v815, 16
    %v820 = vshrl.u32 %v815, 16
    %vm821 = vc.u32 %v813, %v817
    %v822 = vsel %vm821, 1, 0
    %v823 = vadd.s32 %v813, %v817
    %v824 = vadd.s32 %v816, %v822
    %vm825 = vc.u32 %v823, %v819
    %v826 = vsel %vm825, 1, 0
    %v827 = vadd.s32 %v823, %v819
    %v828 = vadd.s32 %v824, %v826
    %v829 = vadd.s32 %v828, %v818
    %v830 = vadd.s32 %v829, %v820
    %v831 = vmul.u32 %v786, %v777
    %v832 = vadd.s32 %v808, %v827
    %vm833 = vc.u32 %v808, %v827
    %v834 = vadd.s32 %v830, 1
    %v835 = vsel %vm833, %v834, %v830
    %v836 = vadd.s32 %v831, %v835
    %v837 = vadd.s32 %v836, 536870912
    %v838 = vshrl.u32 %v837, 30
    %v839 = vshll.u32 %v838, 30
    %v840 = vsub.s32 %v836, %v839
    %vm841 = vcmp.lt.s32.totalorder %v840, 0
    %v842 = vsub.s32 0, %v840
    %v843 = vsel %vm841, %v842, %v840
    %v844 = vclz %v843
    %v845 = vsub.s32 %v844, 2
    %vm846 = vcmp.gt.s32.totalorder 0, %v845
    %v847 = vsel %vm846, 0, %v845
    %v848 = vsub.s32 32, %v847
    %v849 = vshll.u32 %v840, %v847
    %v850 = vshrl.u32 %v832, %v848
    %v851 = vor.u32 %v849, %v850
    %v852 = vsub.s32 4294967266, %v847
    %v853 = vadd.s32 %v852, 127
    %v854 = vshll.u32 %v853, 23
    %v855 = vor.u32 4788187, %v854
    %v856 = vand.u32 2147483647, %v855
    %v858 = vcvt.s32.f32 %v851
    %v859 = vmul.f32 %v858, %v856
    %v860 = vxor.u32 %v859, 2147483648
    %v861 = vsel %vm740, %v860, %v859
    %v862 = vsub.s32 4, %v838
    %v863 = vsel %vm740, %v862, %v838
    %v864 = vsel %vm739, %v260, %v861
    %v865 = vsel %vm739, 0, %v863
    %v866 = vmul.f32 %v864, %v864
    %v867 = vmul.f32 %v866, -0.001358992
    %v868 = vadd.f32 %v867, 0.041655596
    %v869 = vmul.f32 %v866, %v868
    %v870 = vadd.f32 %v869, -0.4999988
    %v871 = vmul.f32 %v866, %v870
    %v872 = vadd.f32 1.0, %v871
    %v873 = vmul.f32 %v864, %v864
    %v874 = vmul.f32 %v873, -0.00019511016
    %v875 = vadd.f32 %v874, 0.008332121
    %v876 = vmul.f32 %v873, %v875
    %v877 = vadd.f32 %v876, -0.16666654
    %v878 = vmul.f32 %v873, %v877
    %v879 = vadd.f32 %v878, 1.0
    %v880 = vmul.f32 %v879, %v864
    %vm881 = vweird.f32 %v260
    %v882 = vadd.s32 %v865, 3
    %v883 = vand.u32 %v882, 3
    %vm884 = vcmp.lt.s32.totalorder %v883, 2
    %vm885 = vcmp.eq.s32.totalorder %v883, 0
    %v886 = vxor.u32 %v880, 2147483648
    %v887 = vsel %vm885, %v872, %v886
    %vm888 = vcmp.eq.s32.totalorder %v883, 2
    %v889 = vxor.u32 %v872, 2147483648
    %v890 = vsel %vm888, %v889, %v880
    %v891 = vsel %vm884, %v887, %v890
    %v892 = vsel %vm881, nan, %v891
    %v893 = vand.u32 2147483647, %v261
    %vm894 = vcmp.le.f32.partialorder %v893, 0.7853982
    %vm895 = vcmp.lt.s32.totalorder %v261, 0
    %v896 = vand.u32 %v261, 2139095040
    %v897 = vshrl.u32 %v896, 23
    %v898 = vsub.s32 %v897, 127
    %v899 = vand.u32 2147483647, %v261
    %v900 = vand.u32 %v899, 8388607
    %v901 = vor.u32 %v900, 8388608
    %v902 = vsub.s32 0, %v901
    %v903 = vadd.s32 %v898, 1
    %vm904 = vcmp.gt.s32.totalorder %v903, 0
    %v905 = vsel %vm904, %v903, 0
    %v906 = vshrl.u32 %v905, 5
    %v907 = vand.u32 %v905, 31
    %v908 = vsub.s32 32, %v907
    %v909 = vshrl.u32 683565275, %v908
    %v910 = vshll.u32 683565275, %v907
    %v911 = vshrl.u32 2475754826, %v908
    %v912 = vor.u32 %v910, %v911
    %v913 = vshll.u32 2475754826, %v907
    %v914 = vshrl.u32 2131351028, %v908
    %v915 = vor.u32 %v913, %v914
    %v916 = vshll.u32 2131351028, %v907
    %v917 = vshrl.u32 2102212464, %v908
    %v918 = vor.u32 %v916, %v917
    %v919 = vshll.u32 2102212464, %v907
    %v920 = vshrl.u32 920167782, %v908
    %v921 = vor.u32 %v919, %v920
    %v922 = vshll.u32 920167782, %v907
    %v923 = vshrl.u32 1326507024, %v908
    %v924 = vor.u32 %v922, %v923
    %vm925 = vcmp.lt.s32.totalorder %v906, 1
    %vm926 = vcmp.lt.s32.totalorder %v906, 2
    %vm927 = vcmp.lt.s32.totalorder %v906, 3
    %vm928 = vcmp.lt.s32.totalorder %v906, 4
    %v929 = vsel %vm925, %v909, %v912
    %v930 = vsel %vm928, %v918, 2102212464
    %v931 = vsel %vm927, %v915, %v930
    %v932 = vsel %vm926, %v929, %v931
    %v933 = vsel %vm925, %v912, %v915
    %v934 = vsel %vm928, %v921, 920167782
    %v935 = vsel %vm927, %v918, %v934
    %v936 = vsel %vm926, %v933, %v935
    %v937 = vsel %vm925, %v915, %v918
    %v938 = vsel %vm928, %v924, 1326507024
    %v939 = vsel %vm927, %v921, %v938
    %v940 = vsel %vm926, %v937, %v939
    %v941 = vshll.u32 %v901, 8
    %v942 = vand.u32 %v941, 65535
    %v943 = vshrl.u32 %v941, 16
    %v944 = vand.u32 %v940, 65535
    %v945 = vshrl.u32 %v940, 16
    %v946 = vmul.u32 %v942, %v944
    %v947 = vmul.u32 %v942, %v945
    %v948 = vmul.u32 %v943, %v944
    %v949 = vmul.u32 %v943, %v945
    %v950 = vshll.u32 %v947, 16
    %v951 = vshrl.u32 %v947, 16
    %v952 = vshll.u32 %v948, 16
    %v953 = vshrl.u32 %v948, 16
    %vm954 = vc.u32 %v946, %v950
    %v955 = vsel %vm954, 1, 0
    %v956 = vadd.s32 %v946, %v950
    %v957 = vadd.s32 %v949, %v955
    %vm958 = vc.u32 %v956, %v952
    %v959 = vsel %vm958, 1, 0
    %v960 = vadd.s32 %v956, %v952
    %v961 = vadd.s32 %v957, %v959
    %v962 = vadd.s32 %v961, %v951
    %v963 = vadd.s32 %v962, %v953
    %v964 = vand.u32 %v941, 65535
    %v965 = vshrl.u32 %v941, 16
    %v966 = vand.u32 %v936, 65535
    %v967 = vshrl.u32 %v936, 16
    %v968 = vmul.u32 %v964, %v966
    %v969 = vmul.u32 %v964, %v967
    %v970 = vmul.u32 %v965, %v966
    %v971 = vmul.u32 %v965, %v967
    %v972 = vshll.u32 %v969, 16
    %v973 = vshrl.u32 %v969, 16
    %v974 = vshll.u32 %v970, 16
    %v975 = vshrl.u32 %v970, 16
    %vm976 = vc.u32 %v968, %v972
    %v977 = vsel %vm976, 1, 0
    %v978 = vadd.s32 %v968, %v972
    %v979 = vadd.s32 %v971, %v977
    %vm980 = vc.u32 %v978, %v974
    %v981 = vsel %vm980, 1, 0
    %v982 = vadd.s32 %v978, %v974
    %v983 = vadd.s32 %v979, %v981
    %v984 = vadd.s32 %v983, %v973
    %v985 = vadd.s32 %v984, %v975
    %v986 = vmul.u32 %v941, %v932
    %v987 = vadd.s32 %v963, %v982
    %vm988 = vc.u32 %v963, %v982
    %v989 = vadd.s32 %v985, 1
    %v990 = vsel %vm988, %v989, %v985
    %v991 = vadd.s32 %v986, %v990
    %v992 = vadd.s32 %v991, 536870912
    %v993 = vshrl.u32 %v992, 30
    %v994 = vshll.u32 %v993, 30
    %v995 = vsub.s32 %v991, %v994
    %vm996 = vcmp.lt.s32.totalorder %v995, 0
    %v997 = vsub.s32 0, %v995
    %v998 = vsel %vm996, %v997, %v995
    %v999 = vclz %v998
    %v1000 = vsub.s32 %v999, 2
    %vm1001 = vcmp.gt.s32.totalorder 0, %v1000
    %v1002 = vsel %vm1001, 0, %v1000
    %v1003 = vsub.s32 32, %v1002
    %v1004 = vshll.u32 %v995, %v1002
    %v1005 = vshrl.u32 %v987, %v1003
    %v1006 = vor.u32 %v1004, %v1005
    %v1007 = vsub.s32 4294967266, %v1002
    %v1008 = vadd.s32 %v1007, 127
    %v1009 = vshll.u32 %v1008, 23
    %v1010 = vor.u32 4788187, %v1009
    %v1011 = vand.u32 2147483647, %v1010
    %v1013 = vcvt.s32.f32 %v1006
    %v1014 = vmul.f32 %v1013, %v1011
    %v1015 = vxor.u32 %v1014, 2147483648
    %v1016 = vsel %vm895, %v1015, %v1014
    %v1017 = vsub.s32 4, %v993
    %v1018 = vsel %vm895, %v1017, %v993
    %v1019 = vsel %vm894, %v261, %v1016
    %v1020 = vsel %vm894, 0, %v1018
    %v1021 = vmul.f32 %v1019, %v1019
    %v1022 = vmul.f32 %v1021, -0.001358992
    %v1023 = vadd.f32 %v1022, 0.041655596
    %v1024 = vmul.f32 %v1021, %v1023
    %v1025 = vadd.f32 %v1024, -0.4999988
    %v1026 = vmul.f32 %v1021, %v1025
    %v1027 = vadd.f32 1.0, %v1026
    %v1028 = vmul.f32 %v1019, %v1019
    %v1029 = vmul.f32 %v1028, -0.00019511016
    %v1030 = vadd.f32 %v1029, 0.008332121
    %v1031 = vmul.f32 %v1028, %v1030
    %v1032 = vadd.f32 %v1031, -0.16666654
    %v1033 = vmul.f32 %v1028, %v1032
    %v1034 = vadd.f32 %v1033, 1.0
    %v1035 = vmul.f32 %v1034, %v1019
    %vm1036 = vweird.f32 %v261
    %v1037 = vadd.s32 %v1020, 3
    %v1038 = vand.u32 %v1037, 3
    %vm1039 = vcmp.lt.s32.totalorder %v1038, 2
    %vm1040 = vcmp.eq.s32.totalorder %v1038, 0
    %v1041 = vxor.u32 %v1035, 2147483648
    %v1042 = vsel %vm1040, %v1027, %v1041
    %vm1043 = vcmp.eq.s32.totalorder %v1038, 2
    %v1044 = vxor.u32 %v1027, 2147483648
    %v1045 = vsel %vm1043, %v1044, %v1035
    %v1046 = vsel %vm1039, %v1042, %v1045
    %v1047 = vsel %vm1036, nan, %v1046
    %v1048 = vand.u32 2147483647, %v262
    %vm1049 = vcmp.le.f32.partialorder %v1048, 0.7853982
    %vm1050 = vcmp.lt.s32.totalorder %v262, 0
    %v1051 = vand.u32 %v262, 2139095040
    %v1052 = vshrl.u32 %v1051, 23
    %v1053 = vsub.s32 %v1052, 127
    %v1054 = vand.u32 2147483647, %v262
    %v1055 = vand.u32 %v1054, 8388607
    %v1056 = vor.u32 %v1055, 8388608
    %v1057 = vsub.s32 0, %v1056
    %v1058 = vadd.s32 %v1053, 1
    %vm1059 = vcmp.gt.s32.totalorder %v1058, 0
    %v1060 = vsel %vm1059, %v1058, 0
    %v1061 = vshrl.u32 %v1060, 5
    %v1062 = vand.u32 %v1060, 31
    %v1063 = vsub.s32 32, %v1062
    %v1064 = vshrl.u32 683565275, %v1063
    %v1065 = vshll.u32 683565275, %v1062
    %v1066 = vshrl.u32 2475754826, %v1063
    %v1067 = vor.u32 %v1065, %v1066
    %v1068 = vshll.u32 2475754826, %v1062
    %v1069 = vshrl.u32 2131351028, %v1063
    %v1070 = vor.u32 %v1068, %v1069
    %v1071 = vshll.u32 2131351028, %v1062
    %v1072 = vshrl.u32 2102212464, %v1063
    %v1073 = vor.u32 %v1071, %v1072
    %v1074 = vshll.u32 2102212464, %v1062
    %v1075 = vshrl.u32 920167782, %v1063
    %v1076 = vor.u32 %v1074, %v1075
    %v1077 = vshll.u32 920167782, %v1062
    %v1078 = vshrl.u32 1326507024, %v1063
    %v1079 = vor.u32 %v1077, %v1078
    %vm1080 = vcmp.lt.s32.totalorder %v1061, 1
    %vm1081 = vcmp.lt.s32.totalorder %v1061, 2
    %vm1082 = vcmp.lt.s32.totalorder %v1061, 3
    %vm1083 = vcmp.lt.s32.totalorder %v1061, 4
    %v1084 = vsel %vm1080, %v1064, %v1067
    %v1085 = vsel %vm1083, %v1073, 2102212464
    %v1086 = vsel %vm1082, %v1070, %v1085
    %v1087 = vsel %vm1081, %v1084, %v1086
    %v1088 = vsel %vm1080, %v1067, %v1070
    %v1089 = vsel %vm1083, %v1076, 920167782
    %v1090 = vsel %vm1082, %v1073, %v1089
    %v1091 = vsel %vm1081, %v1088, %v1090
    %v1092 = vsel %vm1080, %v1070, %v1073
    %v1093 = vsel %vm1083, %v1079, 1326507024
    %v1094 = vsel %vm1082, %v1076, %v1093
    %v1095 = vsel %vm1081, %v1092, %v1094
    %v1096 = vshll.u32 %v1056, 8
    %v1097 = vand.u32 %v1096, 65535
    %v1098 = vshrl.u32 %v1096, 16
    %v1099 = vand.u32 %v1095, 65535
    %v1100 = vshrl.u32 %v1095, 16
    %v1101 = vmul.u32 %v1097, %v1099
    %v1102 = vmul.u32 %v1097, %v1100
    %v1103 = vmul.u32 %v1098, %v1099
    %v1104 = vmul.u32 %v1098, %v1100
    %v1105 = vshll.u32 %v1102, 16
    %v1106 = vshrl.u32 %v1102, 16
    %v1107 = vshll.u32 %v1103, 16
    %v1108 = vshrl.u32 %v1103, 16
    %vm1109 = vc.u32 %v1101, %v1105
    %v1110 = vsel %vm1109, 1, 0
    %v1111 = vadd.s32 %v1101, %v1105
    %v1112 = vadd.s32 %v1104, %v1110
    %vm1113 = vc.u32 %v1111, %v1107
    %v1114 = vsel %vm1113, 1, 0
    %v1115 = vadd.s32 %v1111, %v1107
    %v1116 = vadd.s32 %v1112, %v1114
    %v1117 = vadd.s32 %v1116, %v1106
    %v1118 = vadd.s32 %v1117, %v1108
    %v1119 = vand.u32 %v1096, 65535
    %v1120 = vshrl.u32 %v1096, 16
    %v1121 = vand.u32 %v1091, 65535
    %v1122 = vshrl.u32 %v1091, 16
    %v1123 = vmul.u32 %v1119, %v1121
    %v1124 = vmul.u32 %v1119, %v1122
    %v1125 = vmul.u32 %v1120, %v1121
    %v1126 = vmul.u32 %v1120, %v1122
    %v1127 = vshll.u32 %v1124, 16
    %v1128 = vshrl.u32 %v1124, 16
    %v1129 = vshll.u32 %v1125, 16
    %v1130 = vshrl.u32 %v1125, 16
    %vm1131 = vc.u32 %v1123, %v1127
    %v1132 = vsel %vm1131, 1, 0
    %v1133 = vadd.s32 %v1123, %v1127
    %v1134 = vadd.s32 %v1126, %v1132
    %vm1135 = vc.u32 %v1133, %v1129
    %v1136 = vsel %vm1135, 1, 0
    %v1137 = vadd.s32 %v1133, %v1129
    %v1138 = vadd.s32 %v1134, %v1136
    %v1139 = vadd.s32 %v1138, %v1128
    %v1140 = vadd.s32 %v1139, %v1130
    %v1141 = vmul.u32 %v1096, %v1087
    %v1142 = vadd.s32 %v1118, %v1137
    %vm1143 = vc.u32 %v1118, %v1137
    %v1144 = vadd.s32 %v1140, 1
    %v1145 = vsel %vm1143, %v1144, %v1140
    %v1146 = vadd.s32 %v1141, %v1145
    %v1147 = vadd.s32 %v1146, 536870912
    %v1148 = vshrl.u32 %v1147, 30
    %v1149 = vshll.u32 %v1148, 30
    %v1150 = vsub.s32 %v1146, %v1149
    %vm1151 = vcmp.lt.s32.totalorder %v1150, 0
    %v1152 = vsub.s32 0, %v1150
    %v1153 = vsel %vm1151, %v1152, %v1150
    %v1154 = vclz %v1153
    %v1155 = vsub.s32 %v1154, 2
    %vm1156 = vcmp.gt.s32.totalorder 0, %v1155
    %v1157 = vsel %vm1156, 0, %v1155
    %v1158 = vsub.s32 32, %v1157
    %v1159 = vshll.u32 %v1150, %v1157
    %v1160 = vshrl.u32 %v1142, %v1158
    %v1161 = vor.u32 %v1159, %v1160
    %v1162 = vsub.s32 4294967266, %v1157
    %v1163 = vadd.s32 %v1162, 127
    %v1164 = vshll.u32 %v1163, 23
    %v1165 = vor.u32 4788187, %v1164
    %v1166 = vand.u32 2147483647, %v1165
    %v1168 = vcvt.s32.f32 %v1161
    %v1169 = vmul.f32 %v1168, %v1166
    %v1170 = vxor.u32 %v1169, 2147483648
    %v1171 = vsel %vm1050, %v1170, %v1169
    %v1172 = vsub.s32 4, %v1148
    %v1173 = vsel %vm1050, %v1172, %v1148
    %v1174 = vsel %vm1049, %v262, %v1171
    %v1175 = vsel %vm1049, 0, %v1173
    %v1176 = vmul.f32 %v1174, %v1174
    %v1177 = vmul.f32 %v1176, -0.001358992
    %v1178 = vadd.f32 %v1177, 0.041655596
    %v1179 = vmul.f32 %v1176, %v1178
    %v1180 = vadd.f32 %v1179, -0.4999988
    %v1181 = vmul.f32 %v1176, %v1180
    %v1182 = vadd.f32 1.0, %v1181
    %v1183 = vmul.f32 %v1174, %v1174
    %v1184 = vmul.f32 %v1183, -0.00019511016
    %v1185 = vadd.f32 %v1184, 0.008332121
    %v1186 = vmul.f32 %v1183, %v1185
    %v1187 = vadd.f32 %v1186, -0.16666654
    %v1188 = vmul.f32 %v1183, %v1187
    %v1189 = vadd.f32 %v1188, 1.0
    %v1190 = vmul.f32 %v1189, %v1174
    %vm1191 = vweird.f32 %v262
    %v1192 = vadd.s32 %v1175, 3
    %v1193 = vand.u32 %v1192, 3
    %vm1194 = vcmp.lt.s32.totalorder %v1193, 2
    %vm1195 = vcmp.eq.s32.totalorder %v1193, 0
    %v1196 = vxor.u32 %v1190, 2147483648
    %v1197 = vsel %vm1195, %v1182, %v1196
    %vm1198 = vcmp.eq.s32.totalorder %v1193, 2
    %v1199 = vxor.u32 %v1182, 2147483648
    %v1200 = vsel %vm1198, %v1199, %v1190
    %v1201 = vsel %vm1194, %v1197, %v1200
    %v1202 = vsel %vm1191, nan, %v1201
    %v1203 = vand.u32 2147483647, %v263
    %vm1204 = vcmp.le.f32.partialorder %v1203, 0.7853982
    %vm1205 = vcmp.lt.s32.totalorder %v263, 0
    %v1206 = vand.u32 %v263, 2139095040
    %v1207 = vshrl.u32 %v1206, 23
    %v1208 = vsub.s32 %v1207, 127
    %v1209 = vand.u32 2147483647, %v263
    %v1210 = vand.u32 %v1209, 8388607
    %v1211 = vor.u32 %v1210, 8388608
    %v1212 = vsub.s32 0, %v1211
    %v1213 = vadd.s32 %v1208, 1
    %vm1214 = vcmp.gt.s32.totalorder %v1213, 0
    %v1215 = vsel %vm1214, %v1213, 0
    %v1216 = vshrl.u32 %v1215, 5
    %v1217 = vand.u32 %v1215, 31
    %v1218 = vsub.s32 32, %v1217
    %v1219 = vshrl.u32 683565275, %v1218
    %v1220 = vshll.u32 683565275, %v1217
    %v1221 = vshrl.u32 2475754826, %v1218
    %v1222 = vor.u32 %v1220, %v1221
    %v1223 = vshll.u32 2475754826, %v1217
    %v1224 = vshrl.u32 2131351028, %v1218
    %v1225 = vor.u32 %v1223, %v1224
    %v1226 = vshll.u32 2131351028, %v1217
    %v1227 = vshrl.u32 2102212464, %v1218
    %v1228 = vor.u32 %v1226, %v1227
    %v1229 = vshll.u32 2102212464, %v1217
    %v1230 = vshrl.u32 920167782, %v1218
    %v1231 = vor.u32 %v1229, %v1230
    %v1232 = vshll.u32 920167782, %v1217
    %v1233 = vshrl.u32 1326507024, %v1218
    %v1234 = vor.u32 %v1232, %v1233
    %vm1235 = vcmp.lt.s32.totalorder %v1216, 1
    %vm1236 = vcmp.lt.s32.totalorder %v1216, 2
    %vm1237 = vcmp.lt.s32.totalorder %v1216, 3
    %vm1238 = vcmp.lt.s32.totalorder %v1216, 4
    %v1239 = vsel %vm1235, %v1219, %v1222
    %v1240 = vsel %vm1238, %v1228, 2102212464
    %v1241 = vsel %vm1237, %v1225, %v1240
    %v1242 = vsel %vm1236, %v1239, %v1241
    %v1243 = vsel %vm1235, %v1222, %v1225
    %v1244 = vsel %vm1238, %v1231, 920167782
    %v1245 = vsel %vm1237, %v1228, %v1244
    %v1246 = vsel %vm1236, %v1243, %v1245
    %v1247 = vsel %vm1235, %v1225, %v1228
    %v1248 = vsel %vm1238, %v1234, 1326507024
    %v1249 = vsel %vm1237, %v1231, %v1248
    %v1250 = vsel %vm1236, %v1247, %v1249
    %v1251 = vshll.u32 %v1211, 8
    %v1252 = vand.u32 %v1251, 65535
    %v1253 = vshrl.u32 %v1251, 16
    %v1254 = vand.u32 %v1250, 65535
    %v1255 = vshrl.u32 %v1250, 16
    %v1256 = vmul.u32 %v1252, %v1254
    %v1257 = vmul.u32 %v1252, %v1255
    %v1258 = vmul.u32 %v1253, %v1254
    %v1259 = vmul.u32 %v1253, %v1255
    %v1260 = vshll.u32 %v1257, 16
    %v1261 = vshrl.u32 %v1257, 16
    %v1262 = vshll.u32 %v1258, 16
    %v1263 = vshrl.u32 %v1258, 16
    %vm1264 = vc.u32 %v1256, %v1260
    %v1265 = vsel %vm1264, 1, 0
    %v1266 = vadd.s32 %v1256, %v1260
    %v1267 = vadd.s32 %v1259, %v1265
    %vm1268 = vc.u32 %v1266, %v1262
    %v1269 = vsel %vm1268, 1, 0
    %v1270 = vadd.s32 %v1266, %v1262
    %v1271 = vadd.s32 %v1267, %v1269
    %v1272 = vadd.s32 %v1271, %v1261
    %v1273 = vadd.s32 %v1272, %v1263
    %v1274 = vand.u32 %v1251, 65535
    %v1275 = vshrl.u32 %v1251, 16
    %v1276 = vand.u32 %v1246, 65535
    %v1277 = vshrl.u32 %v1246, 16
    %v1278 = vmul.u32 %v1274, %v1276
    %v1279 = vmul.u32 %v1274, %v1277
    %v1280 = vmul.u32 %v1275, %v1276
    %v1281 = vmul.u32 %v1275, %v1277
    %v1282 = vshll.u32 %v1279, 16
    %v1283 = vshrl.u32 %v1279, 16
    %v1284 = vshll.u32 %v1280, 16
    %v1285 = vshrl.u32 %v1280, 16
    %vm1286 = vc.u32 %v1278, %v1282
    %v1287 = vsel %vm1286, 1, 0
    %v1288 = vadd.s32 %v1278, %v1282
    %v1289 = vadd.s32 %v1281, %v1287
    %vm1290 = vc.u32 %v1288, %v1284
    %v1291 = vsel %vm1290, 1, 0
    %v1292 = vadd.s32 %v1288, %v1284
    %v1293 = vadd.s32 %v1289, %v1291
    %v1294 = vadd.s32 %v1293, %v1283
    %v1295 = vadd.s32 %v1294, %v1285
    %v1296 = vmul.u32 %v1251, %v1242
    %v1297 = vadd.s32 %v1273, %v1292
    %vm1298 = vc.u32 %v1273, %v1292
    %v1299 = vadd.s32 %v1295, 1
    %v1300 = vsel %vm1298, %v1299, %v1295
    %v1301 = vadd.s32 %v1296, %v1300
    %v1302 = vadd.s32 %v1301, 536870912
    %v1303 = vshrl.u32 %v1302, 30
    %v1304 = vshll.u32 %v1303, 30
    %v1305 = vsub.s32 %v1301, %v1304
    %vm1306 = vcmp.lt.s32.totalorder %v1305, 0
    %v1307 = vsub.s32 0, %v1305
    %v1308 = vsel %vm1306, %v1307, %v1305
    %v1309 = vclz %v1308
    %v1310 = vsub.s32 %v1309, 2
    %vm1311 = vcmp.gt.s32.totalorder 0, %v1310
    %v1312 = vsel %vm1311, 0, %v1310
    %v1313 = vsub.s32 32, %v1312
    %v1314 = vshll.u32 %v1305, %v1312
    %v1315 = vshrl.u32 %v1297, %v1313
    %v1316 = vor.u32 %v1314, %v1315
    %v1317 = vsub.s32 4294967266, %v1312
    %v1318 = vadd.s32 %v1317, 127
    %v1319 = vshll.u32 %v1318, 23
    %v1320 = vor.u32 4788187, %v1319
    %v1321 = vand.u32 2147483647, %v1320
    %v1323 = vcvt.s32.f32 %v1316
    %v1324 = vmul.f32 %v1323, %v1321
    %v1325 = vxor.u32 %v1324, 2147483648
    %v1326 = vsel %vm1205, %v1325, %v1324
    %v1327 = vsub.s32 4, %v1303
    %v1328 = vsel %vm1205, %v1327, %v1303
    %v1329 = vsel %vm1204, %v263, %v1326
    %v1330 = vsel %vm1204, 0, %v1328
    %v1331 = vmul.f32 %v1329, %v1329
    %v1332 = vmul.f32 %v1331, -0.001358992
    %v1333 = vadd.f32 %v1332, 0.041655596
    %v1334 = vmul.f32 %v1331, %v1333
    %v1335 = vadd.f32 %v1334, -0.4999988
    %v1336 = vmul.f32 %v1331, %v1335
    %v1337 = vadd.f32 1.0, %v1336
    %v1338 = vmul.f32 %v1329, %v1329
    %v1339 = vmul.f32 %v1338, -0.00019511016
    %v1340 = vadd.f32 %v1339, 0.008332121
    %v1341 = vmul.f32 %v1338, %v1340
    %v1342 = vadd.f32 %v1341, -0.16666654
    %v1343 = vmul.f32 %v1338, %v1342
    %v1344 = vadd.f32 %v1343, 1.0
    %v1345 = vmul.f32 %v1344, %v1329
    %vm1346 = vweird.f32 %v263
    %v1347 = vadd.s32 %v1330, 3
    %v1348 = vand.u32 %v1347, 3
    %vm1349 = vcmp.lt.s32.totalorder %v1348, 2
    %vm1350 = vcmp.eq.s32.totalorder %v1348, 0
    %v1351 = vxor.u32 %v1345, 2147483648
    %v1352 = vsel %vm1350, %v1337, %v1351
    %vm1353 = vcmp.eq.s32.totalorder %v1348, 2
    %v1354 = vxor.u32 %v1337, 2147483648
    %v1355 = vsel %vm1353, %v1354, %v1345
    %v1356 = vsel %vm1349, %v1352, %v1355
    %v1357 = vsel %vm1346, nan, %v1356
    %v1358 = vand.u32 2147483647, %v264
    %vm1359 = vcmp.le.f32.partialorder %v1358, 0.7853982
    %vm1360 = vcmp.lt.s32.totalorder %v264, 0
    %v1361 = vand.u32 %v264, 2139095040
    %v1362 = vshrl.u32 %v1361, 23
    %v1363 = vsub.s32 %v1362, 127
    %v1364 = vand.u32 2147483647, %v264
    %v1365 = vand.u32 %v1364, 8388607
    %v1366 = vor.u32 %v1365, 8388608
    %v1367 = vsub.s32 0, %v1366
    %v1368 = vadd.s32 %v1363, 1
    %vm1369 = vcmp.gt.s32.totalorder %v1368, 0
    %v1370 = vsel %vm1369, %v1368, 0
    %v1371 = vshrl.u32 %v1370, 5
    %v1372 = vand.u32 %v1370, 31
    %v1373 = vsub.s32 32, %v1372
    %v1374 = vshrl.u32 683565275, %v1373
    %v1375 = vshll.u32 683565275, %v1372
    %v1376 = vshrl.u32 2475754826, %v1373
    %v1377 = vor.u32 %v1375, %v1376
    %v1378 = vshll.u32 2475754826, %v1372
    %v1379 = vshrl.u32 2131351028, %v1373
    %v1380 = vor.u32 %v1378, %v1379
    %v1381 = vshll.u32 2131351028, %v1372
    %v1382 = vshrl.u32 2102212464, %v1373
    %v1383 = vor.u32 %v1381, %v1382
    %v1384 = vshll.u32 2102212464, %v1372
    %v1385 = vshrl.u32 920167782, %v1373
    %v1386 = vor.u32 %v1384, %v1385
    %v1387 = vshll.u32 920167782, %v1372
    %v1388 = vshrl.u32 1326507024, %v1373
    %v1389 = vor.u32 %v1387, %v1388
    %vm1390 = vcmp.lt.s32.totalorder %v1371, 1
    %vm1391 = vcmp.lt.s32.totalorder %v1371, 2
    %vm1392 = vcmp.lt.s32.totalorder %v1371, 3
    %vm1393 = vcmp.lt.s32.totalorder %v1371, 4
    %v1394 = vsel %vm1390, %v1374, %v1377
    %v1395 = vsel %vm1393, %v1383, 2102212464
    %v1396 = vsel %vm1392, %v1380, %v1395
    %v1397 = vsel %vm1391, %v1394, %v1396
    %v1398 = vsel %vm1390, %v1377, %v1380
    %v1399 = vsel %vm1393, %v1386, 920167782
    %v1400 = vsel %vm1392, %v1383, %v1399
    %v1401 = vsel %vm1391, %v1398, %v1400
    %v1402 = vsel %vm1390, %v1380, %v1383
    %v1403 = vsel %vm1393, %v1389, 1326507024
    %v1404 = vsel %vm1392, %v1386, %v1403
    %v1405 = vsel %vm1391, %v1402, %v1404
    %v1406 = vshll.u32 %v1366, 8
    %v1407 = vand.u32 %v1406, 65535
    %v1408 = vshrl.u32 %v1406, 16
    %v1409 = vand.u32 %v1405, 65535
    %v1410 = vshrl.u32 %v1405, 16
    %v1411 = vmul.u32 %v1407, %v1409
    %v1412 = vmul.u32 %v1407, %v1410
    %v1413 = vmul.u32 %v1408, %v1409
    %v1414 = vmul.u32 %v1408, %v1410
    %v1415 = vshll.u32 %v1412, 16
    %v1416 = vshrl.u32 %v1412, 16
    %v1417 = vshll.u32 %v1413, 16
    %v1418 = vshrl.u32 %v1413, 16
    %vm1419 = vc.u32 %v1411, %v1415
    %v1420 = vsel %vm1419, 1, 0
    %v1421 = vadd.s32 %v1411, %v1415
    %v1422 = vadd.s32 %v1414, %v1420
    %vm1423 = vc.u32 %v1421, %v1417
    %v1424 = vsel %vm1423, 1, 0
    %v1425 = vadd.s32 %v1421, %v1417
    %v1426 = vadd.s32 %v1422, %v1424
    %v1427 = vadd.s32 %v1426, %v1416
    %v1428 = vadd.s32 %v1427, %v1418
    %v1429 = vand.u32 %v1406, 65535
    %v1430 = vshrl.u32 %v1406, 16
    %v1431 = vand.u32 %v1401, 65535
    %v1432 = vshrl.u32 %v1401, 16
    %v1433 = vmul.u32 %v1429, %v1431
    %v1434 = vmul.u32 %v1429, %v1432
    %v1435 = vmul.u32 %v1430, %v1431
    %v1436 = vmul.u32 %v1430, %v1432
    %v1437 = vshll.u32 %v1434, 16
    %v1438 = vshrl.u32 %v1434, 16
    %v1439 = vshll.u32 %v1435, 16
    %v1440 = vshrl.u32 %v1435, 16
    %vm1441 = vc.u32 %v1433, %v1437
    %v1442 = vsel %vm1441, 1, 0
    %v1443 = vadd.s32 %v1433, %v1437
    %v1444 = vadd.s32 %v1436, %v1442
    %vm1445 = vc.u32 %v1443, %v1439
    %v1446 = vsel %vm1445, 1, 0
    %v1447 = vadd.s32 %v1443, %v1439
    %v1448 = vadd.s32 %v1444, %v1446
    %v1449 = vadd.s32 %v1448, %v1438
    %v1450 = vadd.s32 %v1449, %v1440
    %v1451 = vmul.u32 %v1406, %v1397
    %v1452 = vadd.s32 %v1428, %v1447
    %vm1453 = vc.u32 %v1428, %v1447
    %v1454 = vadd.s32 %v1450, 1
    %v1455 = vsel %vm1453, %v1454, %v1450
    %v1456 = vadd.s32 %v1451, %v1455
    %v1457 = vadd.s32 %v1456, 536870912
    %v1458 = vshrl.u32 %v1457, 30
    %v1459 = vshll.u32 %v1458, 30
    %v1460 = vsub.s32 %v1456, %v1459
    %vm1461 = vcmp.lt.s32.totalorder %v1460, 0
    %v1462 = vsub.s32 0, %v1460
    %v1463 = vsel %vm1461, %v1462, %v1460
    %v1464 = vclz %v1463
    %v1465 = vsub.s32 %v1464, 2
    %vm1466 = vcmp.gt.s32.totalorder 0, %v1465
    %v1467 = vsel %vm1466, 0, %v1465
    %v1468 = vsub.s32 32, %v1467
    %v1469 = vshll.u32 %v1460, %v1467
    %v1470 = vshrl.u32 %v1452, %v1468
    %v1471 = vor.u32 %v1469, %v1470
    %v1472 = vsub.s32 4294967266, %v1467
    %v1473 = vadd.s32 %v1472, 127
    %v1474 = vshll.u32 %v1473, 23
    %v1475 = vor.u32 4788187, %v1474
    %v1476 = vand.u32 2147483647, %v1475
    %v1478 = vcvt.s32.f32 %v1471
    %v1479 = vmul.f32 %v1478, %v1476
    %v1480 = vxor.u32 %v1479, 2147483648
    %v1481 = vsel %vm1360, %v1480, %v1479
    %v1482 = vsub.s32 4, %v1458
    %v1483 = vsel %vm1360, %v1482, %v1458
    %v1484 = vsel %vm1359, %v264, %v1481
    %v1485 = vsel %vm1359, 0, %v1483
    %v1486 = vmul.f32 %v1484, %v1484
    %v1487 = vmul.f32 %v1486, -0.001358992
    %v1488 = vadd.f32 %v1487, 0.041655596
    %v1489 = vmul.f32 %v1486, %v1488
    %v1490 = vadd.f32 %v1489, -0.4999988
    %v1491 = vmul.f32 %v1486, %v1490
    %v1492 = vadd.f32 1.0, %v1491
    %v1493 = vmul.f32 %v1484, %v1484
    %v1494 = vmul.f32 %v1493, -0.00019511016
    %v1495 = vadd.f32 %v1494, 0.008332121
    %v1496 = vmul.f32 %v1493, %v1495
    %v1497 = vadd.f32 %v1496, -0.16666654
    %v1498 = vmul.f32 %v1493, %v1497
    %v1499 = vadd.f32 %v1498, 1.0
    %v1500 = vmul.f32 %v1499, %v1484
    %vm1501 = vweird.f32 %v264
    %v1502 = vadd.s32 %v1485, 3
    %v1503 = vand.u32 %v1502, 3
    %vm1504 = vcmp.lt.s32.totalorder %v1503, 2
    %vm1505 = vcmp.eq.s32.totalorder %v1503, 0
    %v1506 = vxor.u32 %v1500, 2147483648
    %v1507 = vsel %vm1505, %v1492, %v1506
    %vm1508 = vcmp.eq.s32.totalorder %v1503, 2
    %v1509 = vxor.u32 %v1492, 2147483648
    %v1510 = vsel %vm1508, %v1509, %v1500
    %v1511 = vsel %vm1504, %v1507, %v1510
    %v1512 = vsel %vm1501, nan, %v1511
    %v1513 = vand.u32 2147483647, %v265
    %vm1514 = vcmp.le.f32.partialorder %v1513, 0.7853982
    %vm1515 = vcmp.lt.s32.totalorder %v265, 0
    %v1516 = vand.u32 %v265, 2139095040
    %v1517 = vshrl.u32 %v1516, 23
    %v1518 = vsub.s32 %v1517, 127
    %v1519 = vand.u32 2147483647, %v265
    %v1520 = vand.u32 %v1519, 8388607
    %v1521 = vor.u32 %v1520, 8388608
    %v1522 = vsub.s32 0, %v1521
    %v1523 = vadd.s32 %v1518, 1
    %vm1524 = vcmp.gt.s32.totalorder %v1523, 0
    %v1525 = vsel %vm1524, %v1523, 0
    %v1526 = vshrl.u32 %v1525, 5
    %v1527 = vand.u32 %v1525, 31
    %v1528 = vsub.s32 32, %v1527
    %v1529 = vshrl.u32 683565275, %v1528
    %v1530 = vshll.u32 683565275, %v1527
    %v1531 = vshrl.u32 2475754826, %v1528
    %v1532 = vor.u32 %v1530, %v1531
    %v1533 = vshll.u32 2475754826, %v1527
    %v1534 = vshrl.u32 2131351028, %v1528
    %v1535 = vor.u32 %v1533, %v1534
    %v1536 = vshll.u32 2131351028, %v1527
    %v1537 = vshrl.u32 2102212464, %v1528
    %v1538 = vor.u32 %v1536, %v1537
    %v1539 = vshll.u32 2102212464, %v1527
    %v1540 = vshrl.u32 920167782, %v1528
    %v1541 = vor.u32 %v1539, %v1540
    %v1542 = vshll.u32 920167782, %v1527
    %v1543 = vshrl.u32 1326507024, %v1528
    %v1544 = vor.u32 %v1542, %v1543
    %vm1545 = vcmp.lt.s32.totalorder %v1526, 1
    %vm1546 = vcmp.lt.s32.totalorder %v1526, 2
    %vm1547 = vcmp.lt.s32.totalorder %v1526, 3
    %vm1548 = vcmp.lt.s32.totalorder %v1526, 4
    %v1549 = vsel %vm1545, %v1529, %v1532
    %v1550 = vsel %vm1548, %v1538, 2102212464
    %v1551 = vsel %vm1547, %v1535, %v1550
    %v1552 = vsel %vm1546, %v1549, %v1551
    %v1553 = vsel %vm1545, %v1532, %v1535
    %v1554 = vsel %vm1548, %v1541, 920167782
    %v1555 = vsel %vm1547, %v1538, %v1554
    %v1556 = vsel %vm1546, %v1553, %v1555
    %v1557 = vsel %vm1545, %v1535, %v1538
    %v1558 = vsel %vm1548, %v1544, 1326507024
    %v1559 = vsel %vm1547, %v1541, %v1558
    %v1560 = vsel %vm1546, %v1557, %v1559
    %v1561 = vshll.u32 %v1521, 8
    %v1562 = vand.u32 %v1561, 65535
    %v1563 = vshrl.u32 %v1561, 16
    %v1564 = vand.u32 %v1560, 65535
    %v1565 = vshrl.u32 %v1560, 16
    %v1566 = vmul.u32 %v1562, %v1564
    %v1567 = vmul.u32 %v1562, %v1565
    %v1568 = vmul.u32 %v1563, %v1564
    %v1569 = vmul.u32 %v1563, %v1565
    %v1570 = vshll.u32 %v1567, 16
    %v1571 = vshrl.u32 %v1567, 16
    %v1572 = vshll.u32 %v1568, 16
    %v1573 = vshrl.u32 %v1568, 16
    %vm1574 = vc.u32 %v1566, %v1570
    %v1575 = vsel %vm1574, 1, 0
    %v1576 = vadd.s32 %v1566, %v1570
    %v1577 = vadd.s32 %v1569, %v1575
    %vm1578 = vc.u32 %v1576, %v1572
    %v1579 = vsel %vm1578, 1, 0
    %v1580 = vadd.s32 %v1576, %v1572
    %v1581 = vadd.s32 %v1577, %v1579
    %v1582 = vadd.s32 %v1581, %v1571
    %v1583 = vadd.s32 %v1582, %v1573
    %v1584 = vand.u32 %v1561, 65535
    %v1585 = vshrl.u32 %v1561, 16
    %v1586 = vand.u32 %v1556, 65535
    %v1587 = vshrl.u32 %v1556, 16
    %v1588 = vmul.u32 %v1584, %v1586
    %v1589 = vmul.u32 %v1584, %v1587
    %v1590 = vmul.u32 %v1585, %v1586
    %v1591 = vmul.u32 %v1585, %v1587
    %v1592 = vshll.u32 %v1589, 16
    %v1593 = vshrl.u32 %v1589, 16
    %v1594 = vshll.u32 %v1590, 16
    %v1595 = vshrl.u32 %v1590, 16
    %vm1596 = vc.u32 %v1588, %v1592
    %v1597 = vsel %vm1596, 1, 0
    %v1598 = vadd.s32 %v1588, %v1592
    %v1599 = vadd.s32 %v1591, %v1597
    %vm1600 = vc.u32 %v1598, %v1594
    %v1601 = vsel %vm1600, 1, 0
    %v1602 = vadd.s32 %v1598, %v1594
    %v1603 = vadd.s32 %v1599, %v1601
    %v1604 = vadd.s32 %v1603, %v1593
    %v1605 = vadd.s32 %v1604, %v1595
    %v1606 = vmul.u32 %v1561, %v1552
    %v1607 = vadd.s32 %v1583, %v1602
    %vm1608 = vc.u32 %v1583, %v1602
    %v1609 = vadd.s32 %v1605, 1
    %v1610 = vsel %vm1608, %v1609, %v1605
    %v1611 = vadd.s32 %v1606, %v1610
    %v1612 = vadd.s32 %v1611, 536870912
    %v1613 = vshrl.u32 %v1612, 30
    %v1614 = vshll.u32 %v1613, 30
    %v1615 = vsub.s32 %v1611, %v1614
    %vm1616 = vcmp.lt.s32.totalorder %v1615, 0
    %v1617 = vsub.s32 0, %v1615
    %v1618 = vsel %vm1616, %v1617, %v1615
    %v1619 = vclz %v1618
    %v1620 = vsub.s32 %v1619, 2
    %vm1621 = vcmp.gt.s32.totalorder 0, %v1620
    %v1622 = vsel %vm1621, 0, %v1620
    %v1623 = vsub.s32 32, %v1622
    %v1624 = vshll.u32 %v1615, %v1622
    %v1625 = vshrl.u32 %v1607, %v1623
    %v1626 = vor.u32 %v1624, %v1625
    %v1627 = vsub.s32 4294967266, %v1622
    %v1628 = vadd.s32 %v1627, 127
    %v1629 = vshll.u32 %v1628, 23
    %v1630 = vor.u32 4788187, %v1629
    %v1631 = vand.u32 2147483647, %v1630
    %v1633 = vcvt.s32.f32 %v1626
    %v1634 = vmul.f32 %v1633, %v1631
    %v1635 = vxor.u32 %v1634, 2147483648
    %v1636 = vsel %vm1515, %v1635, %v1634
    %v1637 = vsub.s32 4, %v1613
    %v1638 = vsel %vm1515, %v1637, %v1613
    %v1639 = vsel %vm1514, %v265, %v1636
    %v1640 = vsel %vm1514, 0, %v1638
    %v1641 = vmul.f32 %v1639, %v1639
    %v1642 = vmul.f32 %v1641, -0.001358992
    %v1643 = vadd.f32 %v1642, 0.041655596
    %v1644 = vmul.f32 %v1641, %v1643
    %v1645 = vadd.f32 %v1644, -0.4999988
    %v1646 = vmul.f32 %v1641, %v1645
    %v1647 = vadd.f32 1.0, %v1646
    %v1648 = vmul.f32 %v1639, %v1639
    %v1649 = vmul.f32 %v1648, -0.00019511016
    %v1650 = vadd.f32 %v1649, 0.008332121
    %v1651 = vmul.f32 %v1648, %v1650
    %v1652 = vadd.f32 %v1651, -0.16666654
    %v1653 = vmul.f32 %v1648, %v1652
    %v1654 = vadd.f32 %v1653, 1.0
    %v1655 = vmul.f32 %v1654, %v1639
    %vm1656 = vweird.f32 %v265
    %v1657 = vadd.s32 %v1640, 3
    %v1658 = vand.u32 %v1657, 3
    %vm1659 = vcmp.lt.s32.totalorder %v1658, 2
    %vm1660 = vcmp.eq.s32.totalorder %v1658, 0
    %v1661 = vxor.u32 %v1655, 2147483648
    %v1662 = vsel %vm1660, %v1647, %v1661
    %vm1663 = vcmp.eq.s32.totalorder %v1658, 2
    %v1664 = vxor.u32 %v1647, 2147483648
    %v1665 = vsel %vm1663, %v1664, %v1655
    %v1666 = vsel %vm1659, %v1662, %v1665
    %v1667 = vsel %vm1656, nan, %v1666
    %v1668 = vand.u32 2147483647, %v266
    %vm1669 = vcmp.le.f32.partialorder %v1668, 0.7853982
    %vm1670 = vcmp.lt.s32.totalorder %v266, 0
    %v1671 = vand.u32 %v266, 2139095040
    %v1672 = vshrl.u32 %v1671, 23
    %v1673 = vsub.s32 %v1672, 127
    %v1674 = vand.u32 2147483647, %v266
    %v1675 = vand.u32 %v1674, 8388607
    %v1676 = vor.u32 %v1675, 8388608
    %v1677 = vsub.s32 0, %v1676
    %v1678 = vadd.s32 %v1673, 1
    %vm1679 = vcmp.gt.s32.totalorder %v1678, 0
    %v1680 = vsel %vm1679, %v1678, 0
    %v1681 = vshrl.u32 %v1680, 5
    %v1682 = vand.u32 %v1680, 31
    %v1683 = vsub.s32 32, %v1682
    %v1684 = vshrl.u32 683565275, %v1683
    %v1685 = vshll.u32 683565275, %v1682
    %v1686 = vshrl.u32 2475754826, %v1683
    %v1687 = vor.u32 %v1685, %v1686
    %v1688 = vshll.u32 2475754826, %v1682
    %v1689 = vshrl.u32 2131351028, %v1683
    %v1690 = vor.u32 %v1688, %v1689
    %v1691 = vshll.u32 2131351028, %v1682
    %v1692 = vshrl.u32 2102212464, %v1683
    %v1693 = vor.u32 %v1691, %v1692
    %v1694 = vshll.u32 2102212464, %v1682
    %v1695 = vshrl.u32 920167782, %v1683
    %v1696 = vor.u32 %v1694, %v1695
    %v1697 = vshll.u32 920167782, %v1682
    %v1698 = vshrl.u32 1326507024, %v1683
    %v1699 = vor.u32 %v1697, %v1698
    %vm1700 = vcmp.lt.s32.totalorder %v1681, 1
    %vm1701 = vcmp.lt.s32.totalorder %v1681, 2
    %vm1702 = vcmp.lt.s32.totalorder %v1681, 3
    %vm1703 = vcmp.lt.s32.totalorder %v1681, 4
    %v1704 = vsel %vm1700, %v1684, %v1687
    %v1705 = vsel %vm1703, %v1693, 2102212464
    %v1706 = vsel %vm1702, %v1690, %v1705
    %v1707 = vsel %vm1701, %v1704, %v1706
    %v1708 = vsel %vm1700, %v1687, %v1690
    %v1709 = vsel %vm1703, %v1696, 920167782
    %v1710 = vsel %vm1702, %v1693, %v1709
    %v1711 = vsel %vm1701, %v1708, %v1710
    %v1712 = vsel %vm1700, %v1690, %v1693
    %v1713 = vsel %vm1703, %v1699, 1326507024
    %v1714 = vsel %vm1702, %v1696, %v1713
    %v1715 = vsel %vm1701, %v1712, %v1714
    %v1716 = vshll.u32 %v1676, 8
    %v1717 = vand.u32 %v1716, 65535
    %v1718 = vshrl.u32 %v1716, 16
    %v1719 = vand.u32 %v1715, 65535
    %v1720 = vshrl.u32 %v1715, 16
    %v1721 = vmul.u32 %v1717, %v1719
    %v1722 = vmul.u32 %v1717, %v1720
    %v1723 = vmul.u32 %v1718, %v1719
    %v1724 = vmul.u32 %v1718, %v1720
    %v1725 = vshll.u32 %v1722, 16
    %v1726 = vshrl.u32 %v1722, 16
    %v1727 = vshll.u32 %v1723, 16
    %v1728 = vshrl.u32 %v1723, 16
    %vm1729 = vc.u32 %v1721, %v1725
    %v1730 = vsel %vm1729, 1, 0
    %v1731 = vadd.s32 %v1721, %v1725
    %v1732 = vadd.s32 %v1724, %v1730
    %vm1733 = vc.u32 %v1731, %v1727
    %v1734 = vsel %vm1733, 1, 0
    %v1735 = vadd.s32 %v1731, %v1727
    %v1736 = vadd.s32 %v1732, %v1734
    %v1737 = vadd.s32 %v1736, %v1726
    %v1738 = vadd.s32 %v1737, %v1728
    %v1739 = vand.u32 %v1716, 65535
    %v1740 = vshrl.u32 %v1716, 16
    %v1741 = vand.u32 %v1711, 65535
    %v1742 = vshrl.u32 %v1711, 16
    %v1743 = vmul.u32 %v1739, %v1741
    %v1744 = vmul.u32 %v1739, %v1742
    %v1745 = vmul.u32 %v1740, %v1741
    %v1746 = vmul.u32 %v1740, %v1742
    %v1747 = vshll.u32 %v1744, 16
    %v1748 = vshrl.u32 %v1744, 16
    %v1749 = vshll.u32 %v1745, 16
    %v1750 = vshrl.u32 %v1745, 16
    %vm1751 = vc.u32 %v1743, %v1747
    %v1752 = vsel %vm1751, 1, 0
    %v1753 = vadd.s32 %v1743, %v1747
    %v1754 = vadd.s32 %v1746, %v1752
    %vm1755 = vc.u32 %v1753, %v1749
    %v1756 = vsel %vm1755, 1, 0
    %v1757 = vadd.s32 %v1753, %v1749
    %v1758 = vadd.s32 %v1754, %v1756
    %v1759 = vadd.s32 %v1758, %v1748
    %v1760 = vadd.s32 %v1759, %v1750
    %v1761 = vmul.u32 %v1716, %v1707
    %v1762 = vadd.s32 %v1738, %v1757
    %vm1763 = vc.u32 %v1738, %v1757
    %v1764 = vadd.s32 %v1760, 1
    %v1765 = vsel %vm1763, %v1764, %v1760
    %v1766 = vadd.s32 %v1761, %v1765
    %v1767 = vadd.s32 %v1766, 536870912
    %v1768 = vshrl.u32 %v1767, 30
    %v1769 = vshll.u32 %v1768, 30
    %v1770 = vsub.s32 %v1766, %v1769
    %vm1771 = vcmp.lt.s32.totalorder %v1770, 0
    %v1772 = vsub.s32 0, %v1770
    %v1773 = vsel %vm1771, %v1772, %v1770
    %v1774 = vclz %v1773
    %v1775 = vsub.s32 %v1774, 2
    %vm1776 = vcmp.gt.s32.totalorder 0, %v1775
    %v1777 = vsel %vm1776, 0, %v1775
    %v1778 = vsub.s32 32, %v1777
    %v1779 = vshll.u32 %v1770, %v1777
    %v1780 = vshrl.u32 %v1762, %v1778
    %v1781 = vor.u32 %v1779, %v1780
    %v1782 = vsub.s32 4294967266, %v1777
    %v1783 = vadd.s32 %v1782, 127
    %v1784 = vshll.u32 %v1783, 23
    %v1785 = vor.u32 4788187, %v1784
    %v1786 = vand.u32 2147483647, %v1785
    %v1788 = vcvt.s32.f32 %v1781
    %v1789 = vmul.f32 %v1788, %v1786
    %v1790 = vxor.u32 %v1789, 2147483648
    %v1791 = vsel %vm1670, %v1790, %v1789
    %v1792 = vsub.s32 4, %v1768
    %v1793 = vsel %vm1670, %v1792, %v1768
    %v1794 = vsel %vm1669, %v266, %v1791
    %v1795 = vsel %vm1669, 0, %v1793
    %v1796 = vmul.f32 %v1794, %v1794
    %v1797 = vmul.f32 %v1796, -0.001358992
    %v1798 = vadd.f32 %v1797, 0.041655596
    %v1799 = vmul.f32 %v1796, %v1798
    %v1800 = vadd.f32 %v1799, -0.4999988
    %v1801 = vmul.f32 %v1796, %v1800
    %v1802 = vadd.f32 1.0, %v1801
    %v1803 = vmul.f32 %v1794, %v1794
    %v1804 = vmul.f32 %v1803, -0.00019511016
    %v1805 = vadd.f32 %v1804, 0.008332121
    %v1806 = vmul.f32 %v1803, %v1805
    %v1807 = vadd.f32 %v1806, -0.16666654
    %v1808 = vmul.f32 %v1803, %v1807
    %v1809 = vadd.f32 %v1808, 1.0
    %v1810 = vmul.f32 %v1809, %v1794
    %vm1811 = vweird.f32 %v266
    %v1812 = vadd.s32 %v1795, 3
    %v1813 = vand.u32 %v1812, 3
    %vm1814 = vcmp.lt.s32.totalorder %v1813, 2
    %vm1815 = vcmp.eq.s32.totalorder %v1813, 0
    %v1816 = vxor.u32 %v1810, 2147483648
    %v1817 = vsel %vm1815, %v1802, %v1816
    %vm1818 = vcmp.eq.s32.totalorder %v1813, 2
    %v1819 = vxor.u32 %v1802, 2147483648
    %v1820 = vsel %vm1818, %v1819, %v1810
    %v1821 = vsel %vm1814, %v1817, %v1820
    %v1822 = vsel %vm1811, nan, %v1821
    %v1823 = vand.u32 2147483647, %v267
    %vm1824 = vcmp.le.f32.partialorder %v1823, 0.7853982
    %vm1825 = vcmp.lt.s32.totalorder %v267, 0
    %v1826 = vand.u32 %v267, 2139095040
    %v1827 = vshrl.u32 %v1826, 23
    %v1828 = vsub.s32 %v1827, 127
    %v1829 = vand.u32 2147483647, %v267
    %v1830 = vand.u32 %v1829, 8388607
    %v1831 = vor.u32 %v1830, 8388608
    %v1832 = vsub.s32 0, %v1831
    %v1833 = vadd.s32 %v1828, 1
    %vm1834 = vcmp.gt.s32.totalorder %v1833, 0
    %v1835 = vsel %vm1834, %v1833, 0
    %v1836 = vshrl.u32 %v1835, 5
    %v1837 = vand.u32 %v1835, 31
    %v1838 = vsub.s32 32, %v1837
    %v1839 = vshrl.u32 683565275, %v1838
    %v1840 = vshll.u32 683565275, %v1837
    %v1841 = vshrl.u32 2475754826, %v1838
    %v1842 = vor.u32 %v1840, %v1841
    %v1843 = vshll.u32 2475754826, %v1837
    %v1844 = vshrl.u32 2131351028, %v1838
    %v1845 = vor.u32 %v1843, %v1844
    %v1846 = vshll.u32 2131351028, %v1837
    %v1847 = vshrl.u32 2102212464, %v1838
    %v1848 = vor.u32 %v1846, %v1847
    %v1849 = vshll.u32 2102212464, %v1837
    %v1850 = vshrl.u32 920167782, %v1838
    %v1851 = vor.u32 %v1849, %v1850
    %v1852 = vshll.u32 920167782, %v1837
    %v1853 = vshrl.u32 1326507024, %v1838
    %v1854 = vor.u32 %v1852, %v1853
    %vm1855 = vcmp.lt.s32.totalorder %v1836, 1
    %vm1856 = vcmp.lt.s32.totalorder %v1836, 2
    %vm1857 = vcmp.lt.s32.totalorder %v1836, 3
    %vm1858 = vcmp.lt.s32.totalorder %v1836, 4
    %v1859 = vsel %vm1855, %v1839, %v1842
    %v1860 = vsel %vm1858, %v1848, 2102212464
    %v1861 = vsel %vm1857, %v1845, %v1860
    %v1862 = vsel %vm1856, %v1859, %v1861
    %v1863 = vsel %vm1855, %v1842, %v1845
    %v1864 = vsel %vm1858, %v1851, 920167782
    %v1865 = vsel %vm1857, %v1848, %v1864
    %v1866 = vsel %vm1856, %v1863, %v1865
    %v1867 = vsel %vm1855, %v1845, %v1848
    %v1868 = vsel %vm1858, %v1854, 1326507024
    %v1869 = vsel %vm1857, %v1851, %v1868
    %v1870 = vsel %vm1856, %v1867, %v1869
    %v1871 = vshll.u32 %v1831, 8
    %v1872 = vand.u32 %v1871, 65535
    %v1873 = vshrl.u32 %v1871, 16
    %v1874 = vand.u32 %v1870, 65535
    %v1875 = vshrl.u32 %v1870, 16
    %v1876 = vmul.u32 %v1872, %v1874
    %v1877 = vmul.u32 %v1872, %v1875
    %v1878 = vmul.u32 %v1873, %v1874
    %v1879 = vmul.u32 %v1873, %v1875
    %v1880 = vshll.u32 %v1877, 16
    %v1881 = vshrl.u32 %v1877, 16
    %v1882 = vshll.u32 %v1878, 16
    %v1883 = vshrl.u32 %v1878, 16
    %vm1884 = vc.u32 %v1876, %v1880
    %v1885 = vsel %vm1884, 1, 0
    %v1886 = vadd.s32 %v1876, %v1880
    %v1887 = vadd.s32 %v1879, %v1885
    %vm1888 = vc.u32 %v1886, %v1882
    %v1889 = vsel %vm1888, 1, 0
    %v1890 = vadd.s32 %v1886, %v1882
    %v1891 = vadd.s32 %v1887, %v1889
    %v1892 = vadd.s32 %v1891, %v1881
    %v1893 = vadd.s32 %v1892, %v1883
    %v1894 = vand.u32 %v1871, 65535
    %v1895 = vshrl.u32 %v1871, 16
    %v1896 = vand.u32 %v1866, 65535
    %v1897 = vshrl.u32 %v1866, 16
    %v1898 = vmul.u32 %v1894, %v1896
    %v1899 = vmul.u32 %v1894, %v1897
    %v1900 = vmul.u32 %v1895, %v1896
    %v1901 = vmul.u32 %v1895, %v1897
    %v1902 = vshll.u32 %v1899, 16
    %v1903 = vshrl.u32 %v1899, 16
    %v1904 = vshll.u32 %v1900, 16
    %v1905 = vshrl.u32 %v1900, 16
    %vm1906 = vc.u32 %v1898, %v1902
    %v1907 = vsel %vm1906, 1, 0
    %v1908 = vadd.s32 %v1898, %v1902
    %v1909 = vadd.s32 %v1901, %v1907
    %vm1910 = vc.u32 %v1908, %v1904
    %v1911 = vsel %vm1910, 1, 0
    %v1912 = vadd.s32 %v1908, %v1904
    %v1913 = vadd.s32 %v1909, %v1911
    %v1914 = vadd.s32 %v1913, %v1903
    %v1915 = vadd.s32 %v1914, %v1905
    %v1916 = vmul.u32 %v1871, %v1862
    %v1917 = vadd.s32 %v1893, %v1912
    %vm1918 = vc.u32 %v1893, %v1912
    %v1919 = vadd.s32 %v1915, 1
    %v1920 = vsel %vm1918, %v1919, %v1915
    %v1921 = vadd.s32 %v1916, %v1920
    %v1922 = vadd.s32 %v1921, 536870912
    %v1923 = vshrl.u32 %v1922, 30
    %v1924 = vshll.u32 %v1923, 30
    %v1925 = vsub.s32 %v1921, %v1924
    %vm1926 = vcmp.lt.s32.totalorder %v1925, 0
    %v1927 = vsub.s32 0, %v1925
    %v1928 = vsel %vm1926, %v1927, %v1925
    %v1929 = vclz %v1928
    %v1930 = vsub.s32 %v1929, 2
    %vm1931 = vcmp.gt.s32.totalorder 0, %v1930
    %v1932 = vsel %vm1931, 0, %v1930
    %v1933 = vsub.s32 32, %v1932
    %v1934 = vshll.u32 %v1925, %v1932
    %v1935 = vshrl.u32 %v1917, %v1933
    %v1936 = vor.u32 %v1934, %v1935
    %v1937 = vsub.s32 4294967266, %v1932
    %v1938 = vadd.s32 %v1937, 127
    %v1939 = vshll.u32 %v1938, 23
    %v1940 = vor.u32 4788187, %v1939
    %v1941 = vand.u32 2147483647, %v1940
    %v1943 = vcvt.s32.f32 %v1936
    %v1944 = vmul.f32 %v1943, %v1941
    %v1945 = vxor.u32 %v1944, 2147483648
    %v1946 = vsel %vm1825, %v1945, %v1944
    %v1947 = vsub.s32 4, %v1923
    %v1948 = vsel %vm1825, %v1947, %v1923
    %v1949 = vsel %vm1824, %v267, %v1946
    %v1950 = vsel %vm1824, 0, %v1948
    %v1951 = vmul.f32 %v1949, %v1949
    %v1952 = vmul.f32 %v1951, -0.001358992
    %v1953 = vadd.f32 %v1952, 0.041655596
    %v1954 = vmul.f32 %v1951, %v1953
    %v1955 = vadd.f32 %v1954, -0.4999988
    %v1956 = vmul.f32 %v1951, %v1955
    %v1957 = vadd.f32 1.0, %v1956
    %v1958 = vmul.f32 %v1949, %v1949
    %v1959 = vmul.f32 %v1958, -0.00019511016
    %v1960 = vadd.f32 %v1959, 0.008332121
    %v1961 = vmul.f32 %v1958, %v1960
    %v1962 = vadd.f32 %v1961, -0.16666654
    %v1963 = vmul.f32 %v1958, %v1962
    %v1964 = vadd.f32 %v1963, 1.0
    %v1965 = vmul.f32 %v1964, %v1949
    %vm1966 = vweird.f32 %v267
    %v1967 = vadd.s32 %v1950, 3
    %v1968 = vand.u32 %v1967, 3
    %vm1969 = vcmp.lt.s32.totalorder %v1968, 2
    %vm1970 = vcmp.eq.s32.totalorder %v1968, 0
    %v1971 = vxor.u32 %v1965, 2147483648
    %v1972 = vsel %vm1970, %v1957, %v1971
    %vm1973 = vcmp.eq.s32.totalorder %v1968, 2
    %v1974 = vxor.u32 %v1957, 2147483648
    %v1975 = vsel %vm1973, %v1974, %v1965
    %v1976 = vsel %vm1969, %v1972, %v1975
    %v1977 = vsel %vm1966, nan, %v1976
    %v1978 = vand.u32 2147483647, %v268
    %vm1979 = vcmp.le.f32.partialorder %v1978, 0.7853982
    %vm1980 = vcmp.lt.s32.totalorder %v268, 0
    %v1981 = vand.u32 %v268, 2139095040
    %v1982 = vshrl.u32 %v1981, 23
    %v1983 = vsub.s32 %v1982, 127
    %v1984 = vand.u32 2147483647, %v268
    %v1985 = vand.u32 %v1984, 8388607
    %v1986 = vor.u32 %v1985, 8388608
    %v1987 = vsub.s32 0, %v1986
    %v1988 = vadd.s32 %v1983, 1
    %vm1989 = vcmp.gt.s32.totalorder %v1988, 0
    %v1990 = vsel %vm1989, %v1988, 0
    %v1991 = vshrl.u32 %v1990, 5
    %v1992 = vand.u32 %v1990, 31
    %v1993 = vsub.s32 32, %v1992
    %v1994 = vshrl.u32 683565275, %v1993
    %v1995 = vshll.u32 683565275, %v1992
    %v1996 = vshrl.u32 2475754826, %v1993
    %v1997 = vor.u32 %v1995, %v1996
    %v1998 = vshll.u32 2475754826, %v1992
    %v1999 = vshrl.u32 2131351028, %v1993
    %v2000 = vor.u32 %v1998, %v1999
    %v2001 = vshll.u32 2131351028, %v1992
    %v2002 = vshrl.u32 2102212464, %v1993
    %v2003 = vor.u32 %v2001, %v2002
    %v2004 = vshll.u32 2102212464, %v1992
    %v2005 = vshrl.u32 920167782, %v1993
    %v2006 = vor.u32 %v2004, %v2005
    %v2007 = vshll.u32 920167782, %v1992
    %v2008 = vshrl.u32 1326507024, %v1993
    %v2009 = vor.u32 %v2007, %v2008
    %vm2010 = vcmp.lt.s32.totalorder %v1991, 1
    %vm2011 = vcmp.lt.s32.totalorder %v1991, 2
    %vm2012 = vcmp.lt.s32.totalorder %v1991, 3
    %vm2013 = vcmp.lt.s32.totalorder %v1991, 4
    %v2014 = vsel %vm2010, %v1994, %v1997
    %v2015 = vsel %vm2013, %v2003, 2102212464
    %v2016 = vsel %vm2012, %v2000, %v2015
    %v2017 = vsel %vm2011, %v2014, %v2016
    %v2018 = vsel %vm2010, %v1997, %v2000
    %v2019 = vsel %vm2013, %v2006, 920167782
    %v2020 = vsel %vm2012, %v2003, %v2019
    %v2021 = vsel %vm2011, %v2018, %v2020
    %v2022 = vsel %vm2010, %v2000, %v2003
    %v2023 = vsel %vm2013, %v2009, 1326507024
    %v2024 = vsel %vm2012, %v2006, %v2023
    %v2025 = vsel %vm2011, %v2022, %v2024
    %v2026 = vshll.u32 %v1986, 8
    %v2027 = vand.u32 %v2026, 65535
    %v2028 = vshrl.u32 %v2026, 16
    %v2029 = vand.u32 %v2025, 65535
    %v2030 = vshrl.u32 %v2025, 16
    %v2031 = vmul.u32 %v2027, %v2029
    %v2032 = vmul.u32 %v2027, %v2030
    %v2033 = vmul.u32 %v2028, %v2029
    %v2034 = vmul.u32 %v2028, %v2030
    %v2035 = vshll.u32 %v2032, 16
    %v2036 = vshrl.u32 %v2032, 16
    %v2037 = vshll.u32 %v2033, 16
    %v2038 = vshrl.u32 %v2033, 16
    %vm2039 = vc.u32 %v2031, %v2035
    %v2040 = vsel %vm2039, 1, 0
    %v2041 = vadd.s32 %v2031, %v2035
    %v2042 = vadd.s32 %v2034, %v2040
    %vm2043 = vc.u32 %v2041, %v2037
    %v2044 = vsel %vm2043, 1, 0
    %v2045 = vadd.s32 %v2041, %v2037
    %v2046 = vadd.s32 %v2042, %v2044
    %v2047 = vadd.s32 %v2046, %v2036
    %v2048 = vadd.s32 %v2047, %v2038
    %v2049 = vand.u32 %v2026, 65535
    %v2050 = vshrl.u32 %v2026, 16
    %v2051 = vand.u32 %v2021, 65535
    %v2052 = vshrl.u32 %v2021, 16
    %v2053 = vmul.u32 %v2049, %v2051
    %v2054 = vmul.u32 %v2049, %v2052
    %v2055 = vmul.u32 %v2050, %v2051
    %v2056 = vmul.u32 %v2050, %v2052
    %v2057 = vshll.u32 %v2054, 16
    %v2058 = vshrl.u32 %v2054, 16
    %v2059 = vshll.u32 %v2055, 16
    %v2060 = vshrl.u32 %v2055, 16
    %vm2061 = vc.u32 %v2053, %v2057
    %v2062 = vsel %vm2061, 1, 0
    %v2063 = vadd.s32 %v2053, %v2057
    %v2064 = vadd.s32 %v2056, %v2062
    %vm2065 = vc.u32 %v2063, %v2059
    %v2066 = vsel %vm2065, 1, 0
    %v2067 = vadd.s32 %v2063, %v2059
    %v2068 = vadd.s32 %v2064, %v2066
    %v2069 = vadd.s32 %v2068, %v2058
    %v2070 = vadd.s32 %v2069, %v2060
    %v2071 = vmul.u32 %v2026, %v2017
    %v2072 = vadd.s32 %v2048, %v2067
    %vm2073 = vc.u32 %v2048, %v2067
    %v2074 = vadd.s32 %v2070, 1
    %v2075 = vsel %vm2073, %v2074, %v2070
    %v2076 = vadd.s32 %v2071, %v2075
    %v2077 = vadd.s32 %v2076, 536870912
    %v2078 = vshrl.u32 %v2077, 30
    %v2079 = vshll.u32 %v2078, 30
    %v2080 = vsub.s32 %v2076, %v2079
    %vm2081 = vcmp.lt.s32.totalorder %v2080, 0
    %v2082 = vsub.s32 0, %v2080
    %v2083 = vsel %vm2081, %v2082, %v2080
    %v2084 = vclz %v2083
    %v2085 = vsub.s32 %v2084, 2
    %vm2086 = vcmp.gt.s32.totalorder 0, %v2085
    %v2087 = vsel %vm2086, 0, %v2085
    %v2088 = vsub.s32 32, %v2087
    %v2089 = vshll.u32 %v2080, %v2087
    %v2090 = vshrl.u32 %v2072, %v2088
    %v2091 = vor.u32 %v2089, %v2090
    %v2092 = vsub.s32 4294967266, %v2087
    %v2093 = vadd.s32 %v2092, 127
    %v2094 = vshll.u32 %v2093, 23
    %v2095 = vor.u32 4788187, %v2094
    %v2096 = vand.u32 2147483647, %v2095
    %v2098 = vcvt.s32.f32 %v2091
    %v2099 = vmul.f32 %v2098, %v2096
    %v2100 = vxor.u32 %v2099, 2147483648
    %v2101 = vsel %vm1980, %v2100, %v2099
    %v2102 = vsub.s32 4, %v2078
    %v2103 = vsel %vm1980, %v2102, %v2078
    %v2104 = vsel %vm1979, %v268, %v2101
    %v2105 = vsel %vm1979, 0, %v2103
    %v2106 = vmul.f32 %v2104, %v2104
    %v2107 = vmul.f32 %v2106, -0.001358992
    %v2108 = vadd.f32 %v2107, 0.041655596
    %v2109 = vmul.f32 %v2106, %v2108
    %v2110 = vadd.f32 %v2109, -0.4999988
    %v2111 = vmul.f32 %v2106, %v2110
    %v2112 = vadd.f32 1.0, %v2111
    %v2113 = vmul.f32 %v2104, %v2104
    %v2114 = vmul.f32 %v2113, -0.00019511016
    %v2115 = vadd.f32 %v2114, 0.008332121
    %v2116 = vmul.f32 %v2113, %v2115
    %v2117 = vadd.f32 %v2116, -0.16666654
    %v2118 = vmul.f32 %v2113, %v2117
    %v2119 = vadd.f32 %v2118, 1.0
    %v2120 = vmul.f32 %v2119, %v2104
    %vm2121 = vweird.f32 %v268
    %v2122 = vadd.s32 %v2105, 3
    %v2123 = vand.u32 %v2122, 3
    %vm2124 = vcmp.lt.s32.totalorder %v2123, 2
    %vm2125 = vcmp.eq.s32.totalorder %v2123, 0
    %v2126 = vxor.u32 %v2120, 2147483648
    %v2127 = vsel %vm2125, %v2112, %v2126
    %vm2128 = vcmp.eq.s32.totalorder %v2123, 2
    %v2129 = vxor.u32 %v2112, 2147483648
    %v2130 = vsel %vm2128, %v2129, %v2120
    %v2131 = vsel %vm2124, %v2127, %v2130
    %v2132 = vsel %vm2121, nan, %v2131
    %v2133 = vand.u32 2147483647, %v269
    %vm2134 = vcmp.le.f32.partialorder %v2133, 0.7853982
    %vm2135 = vcmp.lt.s32.totalorder %v269, 0
    %v2136 = vand.u32 %v269, 2139095040
    %v2137 = vshrl.u32 %v2136, 23
    %v2138 = vsub.s32 %v2137, 127
    %v2139 = vand.u32 2147483647, %v269
    %v2140 = vand.u32 %v2139, 8388607
    %v2141 = vor.u32 %v2140, 8388608
    %v2142 = vsub.s32 0, %v2141
    %v2143 = vadd.s32 %v2138, 1
    %vm2144 = vcmp.gt.s32.totalorder %v2143, 0
    %v2145 = vsel %vm2144, %v2143, 0
    %v2146 = vshrl.u32 %v2145, 5
    %v2147 = vand.u32 %v2145, 31
    %v2148 = vsub.s32 32, %v2147
    %v2149 = vshrl.u32 683565275, %v2148
    %v2150 = vshll.u32 683565275, %v2147
    %v2151 = vshrl.u32 2475754826, %v2148
    %v2152 = vor.u32 %v2150, %v2151
    %v2153 = vshll.u32 2475754826, %v2147
    %v2154 = vshrl.u32 2131351028, %v2148
    %v2155 = vor.u32 %v2153, %v2154
    %v2156 = vshll.u32 2131351028, %v2147
    %v2157 = vshrl.u32 2102212464, %v2148
    %v2158 = vor.u32 %v2156, %v2157
    %v2159 = vshll.u32 2102212464, %v2147
    %v2160 = vshrl.u32 920167782, %v2148
    %v2161 = vor.u32 %v2159, %v2160
    %v2162 = vshll.u32 920167782, %v2147
    %v2163 = vshrl.u32 1326507024, %v2148
    %v2164 = vor.u32 %v2162, %v2163
    %vm2165 = vcmp.lt.s32.totalorder %v2146, 1
    %vm2166 = vcmp.lt.s32.totalorder %v2146, 2
    %vm2167 = vcmp.lt.s32.totalorder %v2146, 3
    %vm2168 = vcmp.lt.s32.totalorder %v2146, 4
    %v2169 = vsel %vm2165, %v2149, %v2152
    %v2170 = vsel %vm2168, %v2158, 2102212464
    %v2171 = vsel %vm2167, %v2155, %v2170
    %v2172 = vsel %vm2166, %v2169, %v2171
    %v2173 = vsel %vm2165, %v2152, %v2155
    %v2174 = vsel %vm2168, %v2161, 920167782
    %v2175 = vsel %vm2167, %v2158, %v2174
    %v2176 = vsel %vm2166, %v2173, %v2175
    %v2177 = vsel %vm2165, %v2155, %v2158
    %v2178 = vsel %vm2168, %v2164, 1326507024
    %v2179 = vsel %vm2167, %v2161, %v2178
    %v2180 = vsel %vm2166, %v2177, %v2179
    %v2181 = vshll.u32 %v2141, 8
    %v2182 = vand.u32 %v2181, 65535
    %v2183 = vshrl.u32 %v2181, 16
    %v2184 = vand.u32 %v2180, 65535
    %v2185 = vshrl.u32 %v2180, 16
    %v2186 = vmul.u32 %v2182, %v2184
    %v2187 = vmul.u32 %v2182, %v2185
    %v2188 = vmul.u32 %v2183, %v2184
    %v2189 = vmul.u32 %v2183, %v2185
    %v2190 = vshll.u32 %v2187, 16
    %v2191 = vshrl.u32 %v2187, 16
    %v2192 = vshll.u32 %v2188, 16
    %v2193 = vshrl.u32 %v2188, 16
    %vm2194 = vc.u32 %v2186, %v2190
    %v2195 = vsel %vm2194, 1, 0
    %v2196 = vadd.s32 %v2186, %v2190
    %v2197 = vadd.s32 %v2189, %v2195
    %vm2198 = vc.u32 %v2196, %v2192
    %v2199 = vsel %vm2198, 1, 0
    %v2200 = vadd.s32 %v2196, %v2192
    %v2201 = vadd.s32 %v2197, %v2199
    %v2202 = vadd.s32 %v2201, %v2191
    %v2203 = vadd.s32 %v2202, %v2193
    %v2204 = vand.u32 %v2181, 65535
    %v2205 = vshrl.u32 %v2181, 16
    %v2206 = vand.u32 %v2176, 65535
    %v2207 = vshrl.u32 %v2176, 16
    %v2208 = vmul.u32 %v2204, %v2206
    %v2209 = vmul.u32 %v2204, %v2207
    %v2210 = vmul.u32 %v2205, %v2206
    %v2211 = vmul.u32 %v2205, %v2207
    %v2212 = vshll.u32 %v2209, 16
    %v2213 = vshrl.u32 %v2209, 16
    %v2214 = vshll.u32 %v2210, 16
    %v2215 = vshrl.u32 %v2210, 16
    %vm2216 = vc.u32 %v2208, %v2212
    %v2217 = vsel %vm2216, 1, 0
    %v2218 = vadd.s32 %v2208, %v2212
    %v2219 = vadd.s32 %v2211, %v2217
    %vm2220 = vc.u32 %v2218, %v2214
    %v2221 = vsel %vm2220, 1, 0
    %v2222 = vadd.s32 %v2218, %v2214
    %v2223 = vadd.s32 %v2219, %v2221
    %v2224 = vadd.s32 %v2223, %v2213
    %v2225 = vadd.s32 %v2224, %v2215
    %v2226 = vmul.u32 %v2181, %v2172
    %v2227 = vadd.s32 %v2203, %v2222
    %vm2228 = vc.u32 %v2203, %v2222
    %v2229 = vadd.s32 %v2225, 1
    %v2230 = vsel %vm2228, %v2229, %v2225
    %v2231 = vadd.s32 %v2226, %v2230
    %v2232 = vadd.s32 %v2231, 536870912
    %v2233 = vshrl.u32 %v2232, 30
    %v2234 = vshll.u32 %v2233, 30
    %v2235 = vsub.s32 %v2231, %v2234
    %vm2236 = vcmp.lt.s32.totalorder %v2235, 0
    %v2237 = vsub.s32 0, %v2235
    %v2238 = vsel %vm2236, %v2237, %v2235
    %v2239 = vclz %v2238
    %v2240 = vsub.s32 %v2239, 2
    %vm2241 = vcmp.gt.s32.totalorder 0, %v2240
    %v2242 = vsel %vm2241, 0, %v2240
    %v2243 = vsub.s32 32, %v2242
    %v2244 = vshll.u32 %v2235, %v2242
    %v2245 = vshrl.u32 %v2227, %v2243
    %v2246 = vor.u32 %v2244, %v2245
    %v2247 = vsub.s32 4294967266, %v2242
    %v2248 = vadd.s32 %v2247, 127
    %v2249 = vshll.u32 %v2248, 23
    %v2250 = vor.u32 4788187, %v2249
    %v2251 = vand.u32 2147483647, %v2250
    %v2253 = vcvt.s32.f32 %v2246
    %v2254 = vmul.f32 %v2253, %v2251
    %v2255 = vxor.u32 %v2254, 2147483648
    %v2256 = vsel %vm2135, %v2255, %v2254
    %v2257 = vsub.s32 4, %v2233
    %v2258 = vsel %vm2135, %v2257, %v2233
    %v2259 = vsel %vm2134, %v269, %v2256
    %v2260 = vsel %vm2134, 0, %v2258
    %v2261 = vmul.f32 %v2259, %v2259
    %v2262 = vmul.f32 %v2261, -0.001358992
    %v2263 = vadd.f32 %v2262, 0.041655596
    %v2264 = vmul.f32 %v2261, %v2263
    %v2265 = vadd.f32 %v2264, -0.4999988
    %v2266 = vmul.f32 %v2261, %v2265
    %v2267 = vadd.f32 1.0, %v2266
    %v2268 = vmul.f32 %v2259, %v2259
    %v2269 = vmul.f32 %v2268, -0.00019511016
    %v2270 = vadd.f32 %v2269, 0.008332121
    %v2271 = vmul.f32 %v2268, %v2270
    %v2272 = vadd.f32 %v2271, -0.16666654
    %v2273 = vmul.f32 %v2268, %v2272
    %v2274 = vadd.f32 %v2273, 1.0
    %v2275 = vmul.f32 %v2274, %v2259
    %vm2276 = vweird.f32 %v269
    %v2277 = vadd.s32 %v2260, 3
    %v2278 = vand.u32 %v2277, 3
    %vm2279 = vcmp.lt.s32.totalorder %v2278, 2
    %vm2280 = vcmp.eq.s32.totalorder %v2278, 0
    %v2281 = vxor.u32 %v2275, 2147483648
    %v2282 = vsel %vm2280, %v2267, %v2281
    %vm2283 = vcmp.eq.s32.totalorder %v2278, 2
    %v2284 = vxor.u32 %v2267, 2147483648
    %v2285 = vsel %vm2283, %v2284, %v2275
    %v2286 = vsel %vm2279, %v2282, %v2285
    %v2287 = vsel %vm2276, nan, %v2286
    %v2288 = vand.u32 2147483647, %v270
    %vm2289 = vcmp.le.f32.partialorder %v2288, 0.7853982
    %vm2290 = vcmp.lt.s32.totalorder %v270, 0
    %v2291 = vand.u32 %v270, 2139095040
    %v2292 = vshrl.u32 %v2291, 23
    %v2293 = vsub.s32 %v2292, 127
    %v2294 = vand.u32 2147483647, %v270
    %v2295 = vand.u32 %v2294, 8388607
    %v2296 = vor.u32 %v2295, 8388608
    %v2297 = vsub.s32 0, %v2296
    %v2298 = vadd.s32 %v2293, 1
    %vm2299 = vcmp.gt.s32.totalorder %v2298, 0
    %v2300 = vsel %vm2299, %v2298, 0
    %v2301 = vshrl.u32 %v2300, 5
    %v2302 = vand.u32 %v2300, 31
    %v2303 = vsub.s32 32, %v2302
    %v2304 = vshrl.u32 683565275, %v2303
    %v2305 = vshll.u32 683565275, %v2302
    %v2306 = vshrl.u32 2475754826, %v2303
    %v2307 = vor.u32 %v2305, %v2306
    %v2308 = vshll.u32 2475754826, %v2302
    %v2309 = vshrl.u32 2131351028, %v2303
    %v2310 = vor.u32 %v2308, %v2309
    %v2311 = vshll.u32 2131351028, %v2302
    %v2312 = vshrl.u32 2102212464, %v2303
    %v2313 = vor.u32 %v2311, %v2312
    %v2314 = vshll.u32 2102212464, %v2302
    %v2315 = vshrl.u32 920167782, %v2303
    %v2316 = vor.u32 %v2314, %v2315
    %v2317 = vshll.u32 920167782, %v2302
    %v2318 = vshrl.u32 1326507024, %v2303
    %v2319 = vor.u32 %v2317, %v2318
    %vm2320 = vcmp.lt.s32.totalorder %v2301, 1
    %vm2321 = vcmp.lt.s32.totalorder %v2301, 2
    %vm2322 = vcmp.lt.s32.totalorder %v2301, 3
    %vm2323 = vcmp.lt.s32.totalorder %v2301, 4
    %v2324 = vsel %vm2320, %v2304, %v2307
    %v2325 = vsel %vm2323, %v2313, 2102212464
    %v2326 = vsel %vm2322, %v2310, %v2325
    %v2327 = vsel %vm2321, %v2324, %v2326
    %v2328 = vsel %vm2320, %v2307, %v2310
    %v2329 = vsel %vm2323, %v2316, 920167782
    %v2330 = vsel %vm2322, %v2313, %v2329
    %v2331 = vsel %vm2321, %v2328, %v2330
    %v2332 = vsel %vm2320, %v2310, %v2313
    %v2333 = vsel %vm2323, %v2319, 1326507024
    %v2334 = vsel %vm2322, %v2316, %v2333
    %v2335 = vsel %vm2321, %v2332, %v2334
    %v2336 = vshll.u32 %v2296, 8
    %v2337 = vand.u32 %v2336, 65535
    %v2338 = vshrl.u32 %v2336, 16
    %v2339 = vand.u32 %v2335, 65535
    %v2340 = vshrl.u32 %v2335, 16
    %v2341 = vmul.u32 %v2337, %v2339
    %v2342 = vmul.u32 %v2337, %v2340
    %v2343 = vmul.u32 %v2338, %v2339
    %v2344 = vmul.u32 %v2338, %v2340
    %v2345 = vshll.u32 %v2342, 16
    %v2346 = vshrl.u32 %v2342, 16
    %v2347 = vshll.u32 %v2343, 16
    %v2348 = vshrl.u32 %v2343, 16
    %vm2349 = vc.u32 %v2341, %v2345
    %v2350 = vsel %vm2349, 1, 0
    %v2351 = vadd.s32 %v2341, %v2345
    %v2352 = vadd.s32 %v2344, %v2350
    %vm2353 = vc.u32 %v2351, %v2347
    %v2354 = vsel %vm2353, 1, 0
    %v2355 = vadd.s32 %v2351, %v2347
    %v2356 = vadd.s32 %v2352, %v2354
    %v2357 = vadd.s32 %v2356, %v2346
    %v2358 = vadd.s32 %v2357, %v2348
    %v2359 = vand.u32 %v2336, 65535
    %v2360 = vshrl.u32 %v2336, 16
    %v2361 = vand.u32 %v2331, 65535
    %v2362 = vshrl.u32 %v2331, 16
    %v2363 = vmul.u32 %v2359, %v2361
    %v2364 = vmul.u32 %v2359, %v2362
    %v2365 = vmul.u32 %v2360, %v2361
    %v2366 = vmul.u32 %v2360, %v2362
    %v2367 = vshll.u32 %v2364, 16
    %v2368 = vshrl.u32 %v2364, 16
    %v2369 = vshll.u32 %v2365, 16
    %v2370 = vshrl.u32 %v2365, 16
    %vm2371 = vc.u32 %v2363, %v2367
    %v2372 = vsel %vm2371, 1, 0
    %v2373 = vadd.s32 %v2363, %v2367
    %v2374 = vadd.s32 %v2366, %v2372
    %vm2375 = vc.u32 %v2373, %v2369
    %v2376 = vsel %vm2375, 1, 0
    %v2377 = vadd.s32 %v2373, %v2369
    %v2378 = vadd.s32 %v2374, %v2376
    %v2379 = vadd.s32 %v2378, %v2368
    %v2380 = vadd.s32 %v2379, %v2370
    %v2381 = vmul.u32 %v2336, %v2327
    %v2382 = vadd.s32 %v2358, %v2377
    %vm2383 = vc.u32 %v2358, %v2377
    %v2384 = vadd.s32 %v2380, 1
    %v2385 = vsel %vm2383, %v2384, %v2380
    %v2386 = vadd.s32 %v2381, %v2385
    %v2387 = vadd.s32 %v2386, 536870912
    %v2388 = vshrl.u32 %v2387, 30
    %v2389 = vshll.u32 %v2388, 30
    %v2390 = vsub.s32 %v2386, %v2389
    %vm2391 = vcmp.lt.s32.totalorder %v2390, 0
    %v2392 = vsub.s32 0, %v2390
    %v2393 = vsel %vm2391, %v2392, %v2390
    %v2394 = vclz %v2393
    %v2395 = vsub.s32 %v2394, 2
    %vm2396 = vcmp.gt.s32.totalorder 0, %v2395
    %v2397 = vsel %vm2396, 0, %v2395
    %v2398 = vsub.s32 32, %v2397
    %v2399 = vshll.u32 %v2390, %v2397
    %v2400 = vshrl.u32 %v2382, %v2398
    %v2401 = vor.u32 %v2399, %v2400
    %v2402 = vsub.s32 4294967266, %v2397
    %v2403 = vadd.s32 %v2402, 127
    %v2404 = vshll.u32 %v2403, 23
    %v2405 = vor.u32 4788187, %v2404
    %v2406 = vand.u32 2147483647, %v2405
    %v2408 = vcvt.s32.f32 %v2401
    %v2409 = vmul.f32 %v2408, %v2406
    %v2410 = vxor.u32 %v2409, 2147483648
    %v2411 = vsel %vm2290, %v2410, %v2409
    %v2412 = vsub.s32 4, %v2388
    %v2413 = vsel %vm2290, %v2412, %v2388
    %v2414 = vsel %vm2289, %v270, %v2411
    %v2415 = vsel %vm2289, 0, %v2413
    %v2416 = vmul.f32 %v2414, %v2414
    %v2417 = vmul.f32 %v2416, -0.001358992
    %v2418 = vadd.f32 %v2417, 0.041655596
    %v2419 = vmul.f32 %v2416, %v2418
    %v2420 = vadd.f32 %v2419, -0.4999988
    %v2421 = vmul.f32 %v2416, %v2420
    %v2422 = vadd.f32 1.0, %v2421
    %v2423 = vmul.f32 %v2414, %v2414
    %v2424 = vmul.f32 %v2423, -0.00019511016
    %v2425 = vadd.f32 %v2424, 0.008332121
    %v2426 = vmul.f32 %v2423, %v2425
    %v2427 = vadd.f32 %v2426, -0.16666654
    %v2428 = vmul.f32 %v2423, %v2427
    %v2429 = vadd.f32 %v2428, 1.0
    %v2430 = vmul.f32 %v2429, %v2414
    %vm2431 = vweird.f32 %v270
    %v2432 = vadd.s32 %v2415, 3
    %v2433 = vand.u32 %v2432, 3
    %vm2434 = vcmp.lt.s32.totalorder %v2433, 2
    %vm2435 = vcmp.eq.s32.totalorder %v2433, 0
    %v2436 = vxor.u32 %v2430, 2147483648
    %v2437 = vsel %vm2435, %v2422, %v2436
    %vm2438 = vcmp.eq.s32.totalorder %v2433, 2
    %v2439 = vxor.u32 %v2422, 2147483648
    %v2440 = vsel %vm2438, %v2439, %v2430
    %v2441 = vsel %vm2434, %v2437, %v2440
    %v2442 = vsel %vm2431, nan, %v2441
    %v2443 = vand.u32 2147483647, %v271
    %vm2444 = vcmp.le.f32.partialorder %v2443, 0.7853982
    %vm2445 = vcmp.lt.s32.totalorder %v271, 0
    %v2446 = vand.u32 %v271, 2139095040
    %v2447 = vshrl.u32 %v2446, 23
    %v2448 = vsub.s32 %v2447, 127
    %v2449 = vand.u32 2147483647, %v271
    %v2450 = vand.u32 %v2449, 8388607
    %v2451 = vor.u32 %v2450, 8388608
    %v2452 = vsub.s32 0, %v2451
    %v2453 = vadd.s32 %v2448, 1
    %vm2454 = vcmp.gt.s32.totalorder %v2453, 0
    %v2455 = vsel %vm2454, %v2453, 0
    %v2456 = vshrl.u32 %v2455, 5
    %v2457 = vand.u32 %v2455, 31
    %v2458 = vsub.s32 32, %v2457
    %v2459 = vshrl.u32 683565275, %v2458
    %v2460 = vshll.u32 683565275, %v2457
    %v2461 = vshrl.u32 2475754826, %v2458
    %v2462 = vor.u32 %v2460, %v2461
    %v2463 = vshll.u32 2475754826, %v2457
    %v2464 = vshrl.u32 2131351028, %v2458
    %v2465 = vor.u32 %v2463, %v2464
    %v2466 = vshll.u32 2131351028, %v2457
    %v2467 = vshrl.u32 2102212464, %v2458
    %v2468 = vor.u32 %v2466, %v2467
    %v2469 = vshll.u32 2102212464, %v2457
    %v2470 = vshrl.u32 920167782, %v2458
    %v2471 = vor.u32 %v2469, %v2470
    %v2472 = vshll.u32 920167782, %v2457
    %v2473 = vshrl.u32 1326507024, %v2458
    %v2474 = vor.u32 %v2472, %v2473
    %vm2475 = vcmp.lt.s32.totalorder %v2456, 1
    %vm2476 = vcmp.lt.s32.totalorder %v2456, 2
    %vm2477 = vcmp.lt.s32.totalorder %v2456, 3
    %vm2478 = vcmp.lt.s32.totalorder %v2456, 4
    %v2479 = vsel %vm2475, %v2459, %v2462
    %v2480 = vsel %vm2478, %v2468, 2102212464
    %v2481 = vsel %vm2477, %v2465, %v2480
    %v2482 = vsel %vm2476, %v2479, %v2481
    %v2483 = vsel %vm2475, %v2462, %v2465
    %v2484 = vsel %vm2478, %v2471, 920167782
    %v2485 = vsel %vm2477, %v2468, %v2484
    %v2486 = vsel %vm2476, %v2483, %v2485
    %v2487 = vsel %vm2475, %v2465, %v2468
    %v2488 = vsel %vm2478, %v2474, 1326507024
    %v2489 = vsel %vm2477, %v2471, %v2488
    %v2490 = vsel %vm2476, %v2487, %v2489
    %v2491 = vshll.u32 %v2451, 8
    %v2492 = vand.u32 %v2491, 65535
    %v2493 = vshrl.u32 %v2491, 16
    %v2494 = vand.u32 %v2490, 65535
    %v2495 = vshrl.u32 %v2490, 16
    %v2496 = vmul.u32 %v2492, %v2494
    %v2497 = vmul.u32 %v2492, %v2495
    %v2498 = vmul.u32 %v2493, %v2494
    %v2499 = vmul.u32 %v2493, %v2495
    %v2500 = vshll.u32 %v2497, 16
    %v2501 = vshrl.u32 %v2497, 16
    %v2502 = vshll.u32 %v2498, 16
    %v2503 = vshrl.u32 %v2498, 16
    %vm2504 = vc.u32 %v2496, %v2500
    %v2505 = vsel %vm2504, 1, 0
    %v2506 = vadd.s32 %v2496, %v2500
    %v2507 = vadd.s32 %v2499, %v2505
    %vm2508 = vc.u32 %v2506, %v2502
    %v2509 = vsel %vm2508, 1, 0
    %v2510 = vadd.s32 %v2506, %v2502
    %v2511 = vadd.s32 %v2507, %v2509
    %v2512 = vadd.s32 %v2511, %v2501
    %v2513 = vadd.s32 %v2512, %v2503
    %v2514 = vand.u32 %v2491, 65535
    %v2515 = vshrl.u32 %v2491, 16
    %v2516 = vand.u32 %v2486, 65535
    %v2517 = vshrl.u32 %v2486, 16
    %v2518 = vmul.u32 %v2514, %v2516
    %v2519 = vmul.u32 %v2514, %v2517
    %v2520 = vmul.u32 %v2515, %v2516
    %v2521 = vmul.u32 %v2515, %v2517
    %v2522 = vshll.u32 %v2519, 16
    %v2523 = vshrl.u32 %v2519, 16
    %v2524 = vshll.u32 %v2520, 16
    %v2525 = vshrl.u32 %v2520, 16
    %vm2526 = vc.u32 %v2518, %v2522
    %v2527 = vsel %vm2526, 1, 0
    %v2528 = vadd.s32 %v2518, %v2522
    %v2529 = vadd.s32 %v2521, %v2527
    %vm2530 = vc.u32 %v2528, %v2524
    %v2531 = vsel %vm2530, 1, 0
    %v2532 = vadd.s32 %v2528, %v2524
    %v2533 = vadd.s32 %v2529, %v2531
    %v2534 = vadd.s32 %v2533, %v2523
    %v2535 = vadd.s32 %v2534, %v2525
    %v2536 = vmul.u32 %v2491, %v2482
    %v2537 = vadd.s32 %v2513, %v2532
    %vm2538 = vc.u32 %v2513, %v2532
    %v2539 = vadd.s32 %v2535, 1
    %v2540 = vsel %vm2538, %v2539, %v2535
    %v2541 = vadd.s32 %v2536, %v2540
    %v2542 = vadd.s32 %v2541, 536870912
    %v2543 = vshrl.u32 %v2542, 30
    %v2544 = vshll.u32 %v2543, 30
    %v2545 = vsub.s32 %v2541, %v2544
    %vm2546 = vcmp.lt.s32.totalorder %v2545, 0
    %v2547 = vsub.s32 0, %v2545
    %v2548 = vsel %vm2546, %v2547, %v2545
    %v2549 = vclz %v2548
    %v2550 = vsub.s32 %v2549, 2
    %vm2551 = vcmp.gt.s32.totalorder 0, %v2550
    %v2552 = vsel %vm2551, 0, %v2550
    %v2553 = vsub.s32 32, %v2552
    %v2554 = vshll.u32 %v2545, %v2552
    %v2555 = vshrl.u32 %v2537, %v2553
    %v2556 = vor.u32 %v2554, %v2555
    %v2557 = vsub.s32 4294967266, %v2552
    %v2558 = vadd.s32 %v2557, 127
    %v2559 = vshll.u32 %v2558, 23
    %v2560 = vor.u32 4788187, %v2559
    %v2561 = vand.u32 2147483647, %v2560
    %v2563 = vcvt.s32.f32 %v2556
    %v2564 = vmul.f32 %v2563, %v2561
    %v2565 = vxor.u32 %v2564, 2147483648
    %v2566 = vsel %vm2445, %v2565, %v2564
    %v2567 = vsub.s32 4, %v2543
    %v2568 = vsel %vm2445, %v2567, %v2543
    %v2569 = vsel %vm2444, %v271, %v2566
    %v2570 = vsel %vm2444, 0, %v2568
    %v2571 = vmul.f32 %v2569, %v2569
    %v2572 = vmul.f32 %v2571, -0.001358992
    %v2573 = vadd.f32 %v2572, 0.041655596
    %v2574 = vmul.f32 %v2571, %v2573
    %v2575 = vadd.f32 %v2574, -0.4999988
    %v2576 = vmul.f32 %v2571, %v2575
    %v2577 = vadd.f32 1.0, %v2576
    %v2578 = vmul.f32 %v2569, %v2569
    %v2579 = vmul.f32 %v2578, -0.00019511016
    %v2580 = vadd.f32 %v2579, 0.008332121
    %v2581 = vmul.f32 %v2578, %v2580
    %v2582 = vadd.f32 %v2581, -0.16666654
    %v2583 = vmul.f32 %v2578, %v2582
    %v2584 = vadd.f32 %v2583, 1.0
    %v2585 = vmul.f32 %v2584, %v2569
    %vm2586 = vweird.f32 %v271
    %v2587 = vadd.s32 %v2570, 3
    %v2588 = vand.u32 %v2587, 3
    %vm2589 = vcmp.lt.s32.totalorder %v2588, 2
    %vm2590 = vcmp.eq.s32.totalorder %v2588, 0
    %v2591 = vxor.u32 %v2585, 2147483648
    %v2592 = vsel %vm2590, %v2577, %v2591
    %vm2593 = vcmp.eq.s32.totalorder %v2588, 2
    %v2594 = vxor.u32 %v2577, 2147483648
    %v2595 = vsel %vm2593, %v2594, %v2585
    %v2596 = vsel %vm2589, %v2592, %v2595
    %v2597 = vsel %vm2586, nan, %v2596
    %v2598 = vand.u32 2147483647, %v272
    %vm2599 = vcmp.le.f32.partialorder %v2598, 0.7853982
    %vm2600 = vcmp.lt.s32.totalorder %v272, 0
    %v2601 = vand.u32 %v272, 2139095040
    %v2602 = vshrl.u32 %v2601, 23
    %v2603 = vsub.s32 %v2602, 127
    %v2604 = vand.u32 2147483647, %v272
    %v2605 = vand.u32 %v2604, 8388607
    %v2606 = vor.u32 %v2605, 8388608
    %v2607 = vsub.s32 0, %v2606
    %v2608 = vadd.s32 %v2603, 1
    %vm2609 = vcmp.gt.s32.totalorder %v2608, 0
    %v2610 = vsel %vm2609, %v2608, 0
    %v2611 = vshrl.u32 %v2610, 5
    %v2612 = vand.u32 %v2610, 31
    %v2613 = vsub.s32 32, %v2612
    %v2614 = vshrl.u32 683565275, %v2613
    %v2615 = vshll.u32 683565275, %v2612
    %v2616 = vshrl.u32 2475754826, %v2613
    %v2617 = vor.u32 %v2615, %v2616
    %v2618 = vshll.u32 2475754826, %v2612
    %v2619 = vshrl.u32 2131351028, %v2613
    %v2620 = vor.u32 %v2618, %v2619
    %v2621 = vshll.u32 2131351028, %v2612
    %v2622 = vshrl.u32 2102212464, %v2613
    %v2623 = vor.u32 %v2621, %v2622
    %v2624 = vshll.u32 2102212464, %v2612
    %v2625 = vshrl.u32 920167782, %v2613
    %v2626 = vor.u32 %v2624, %v2625
    %v2627 = vshll.u32 920167782, %v2612
    %v2628 = vshrl.u32 1326507024, %v2613
    %v2629 = vor.u32 %v2627, %v2628
    %vm2630 = vcmp.lt.s32.totalorder %v2611, 1
    %vm2631 = vcmp.lt.s32.totalorder %v2611, 2
    %vm2632 = vcmp.lt.s32.totalorder %v2611, 3
    %vm2633 = vcmp.lt.s32.totalorder %v2611, 4
    %v2634 = vsel %vm2630, %v2614, %v2617
    %v2635 = vsel %vm2633, %v2623, 2102212464
    %v2636 = vsel %vm2632, %v2620, %v2635
    %v2637 = vsel %vm2631, %v2634, %v2636
    %v2638 = vsel %vm2630, %v2617, %v2620
    %v2639 = vsel %vm2633, %v2626, 920167782
    %v2640 = vsel %vm2632, %v2623, %v2639
    %v2641 = vsel %vm2631, %v2638, %v2640
    %v2642 = vsel %vm2630, %v2620, %v2623
    %v2643 = vsel %vm2633, %v2629, 1326507024
    %v2644 = vsel %vm2632, %v2626, %v2643
    %v2645 = vsel %vm2631, %v2642, %v2644
    %v2646 = vshll.u32 %v2606, 8
    %v2647 = vand.u32 %v2646, 65535
    %v2648 = vshrl.u32 %v2646, 16
    %v2649 = vand.u32 %v2645, 65535
    %v2650 = vshrl.u32 %v2645, 16
    %v2651 = vmul.u32 %v2647, %v2649
    %v2652 = vmul.u32 %v2647, %v2650
    %v2653 = vmul.u32 %v2648, %v2649
    %v2654 = vmul.u32 %v2648, %v2650
    %v2655 = vshll.u32 %v2652, 16
    %v2656 = vshrl.u32 %v2652, 16
    %v2657 = vshll.u32 %v2653, 16
    %v2658 = vshrl.u32 %v2653, 16
    %vm2659 = vc.u32 %v2651, %v2655
    %v2660 = vsel %vm2659, 1, 0
    %v2661 = vadd.s32 %v2651, %v2655
    %v2662 = vadd.s32 %v2654, %v2660
    %vm2663 = vc.u32 %v2661, %v2657
    %v2664 = vsel %vm2663, 1, 0
    %v2665 = vadd.s32 %v2661, %v2657
    %v2666 = vadd.s32 %v2662, %v2664
    %v2667 = vadd.s32 %v2666, %v2656
    %v2668 = vadd.s32 %v2667, %v2658
    %v2669 = vand.u32 %v2646, 65535
    %v2670 = vshrl.u32 %v2646, 16
    %v2671 = vand.u32 %v2641, 65535
    %v2672 = vshrl.u32 %v2641, 16
    %v2673 = vmul.u32 %v2669, %v2671
    %v2674 = vmul.u32 %v2669, %v2672
    %v2675 = vmul.u32 %v2670, %v2671
    %v2676 = vmul.u32 %v2670, %v2672
    %v2677 = vshll.u32 %v2674, 16
    %v2678 = vshrl.u32 %v2674, 16
    %v2679 = vshll.u32 %v2675, 16
    %v2680 = vshrl.u32 %v2675, 16
    %vm2681 = vc.u32 %v2673, %v2677
    %v2682 = vsel %vm2681, 1, 0
    %v2683 = vadd.s32 %v2673, %v2677
    %v2684 = vadd.s32 %v2676, %v2682
    %vm2685 = vc.u32 %v2683, %v2679
    %v2686 = vsel %vm2685, 1, 0
    %v2687 = vadd.s32 %v2683, %v2679
    %v2688 = vadd.s32 %v2684, %v2686
    %v2689 = vadd.s32 %v2688, %v2678
    %v2690 = vadd.s32 %v2689, %v2680
    %v2691 = vmul.u32 %v2646, %v2637
    %v2692 = vadd.s32 %v2668, %v2687
    %vm2693 = vc.u32 %v2668, %v2687
    %v2694 = vadd.s32 %v2690, 1
    %v2695 = vsel %vm2693, %v2694, %v2690
    %v2696 = vadd.s32 %v2691, %v2695
    %v2697 = vadd.s32 %v2696, 536870912
    %v2698 = vshrl.u32 %v2697, 30
    %v2699 = vshll.u32 %v2698, 30
    %v2700 = vsub.s32 %v2696, %v2699
    %vm2701 = vcmp.lt.s32.totalorder %v2700, 0
    %v2702 = vsub.s32 0, %v2700
    %v2703 = vsel %vm2701, %v2702, %v2700
    %v2704 = vclz %v2703
    %v2705 = vsub.s32 %v2704, 2
    %vm2706 = vcmp.gt.s32.totalorder 0, %v2705
    %v2707 = vsel %vm2706, 0, %v2705
    %v2708 = vsub.s32 32, %v2707
    %v2709 = vshll.u32 %v2700, %v2707
    %v2710 = vshrl.u32 %v2692, %v2708
    %v2711 = vor.u32 %v2709, %v2710
    %v2712 = vsub.s32 4294967266, %v2707
    %v2713 = vadd.s32 %v2712, 127
    %v2714 = vshll.u32 %v2713, 23
    %v2715 = vor.u32 4788187, %v2714
    %v2716 = vand.u32 2147483647, %v2715
    %v2718 = vcvt.s32.f32 %v2711
    %v2719 = vmul.f32 %v2718, %v2716
    %v2720 = vxor.u32 %v2719, 2147483648
    %v2721 = vsel %vm2600, %v2720, %v2719
    %v2722 = vsub.s32 4, %v2698
    %v2723 = vsel %vm2600, %v2722, %v2698
    %v2724 = vsel %vm2599, %v272, %v2721
    %v2725 = vsel %vm2599, 0, %v2723
    %v2726 = vmul.f32 %v2724, %v2724
    %v2727 = vmul.f32 %v2726, -0.001358992
    %v2728 = vadd.f32 %v2727, 0.041655596
    %v2729 = vmul.f32 %v2726, %v2728
    %v2730 = vadd.f32 %v2729, -0.4999988
    %v2731 = vmul.f32 %v2726, %v2730
    %v2732 = vadd.f32 1.0, %v2731
    %v2733 = vmul.f32 %v2724, %v2724
    %v2734 = vmul.f32 %v2733, -0.00019511016
    %v2735 = vadd.f32 %v2734, 0.008332121
    %v2736 = vmul.f32 %v2733, %v2735
    %v2737 = vadd.f32 %v2736, -0.16666654
    %v2738 = vmul.f32 %v2733, %v2737
    %v2739 = vadd.f32 %v2738, 1.0
    %v2740 = vmul.f32 %v2739, %v2724
    %vm2741 = vweird.f32 %v272
    %v2742 = vadd.s32 %v2725, 3
    %v2743 = vand.u32 %v2742, 3
    %vm2744 = vcmp.lt.s32.totalorder %v2743, 2
    %vm2745 = vcmp.eq.s32.totalorder %v2743, 0
    %v2746 = vxor.u32 %v2740, 2147483648
    %v2747 = vsel %vm2745, %v2732, %v2746
    %vm2748 = vcmp.eq.s32.totalorder %v2743, 2
    %v2749 = vxor.u32 %v2732, 2147483648
    %v2750 = vsel %vm2748, %v2749, %v2740
    %v2751 = vsel %vm2744, %v2747, %v2750
    %v2752 = vsel %vm2741, nan, %v2751
    %v2753 = vld [vmem:[%s0] sm:$0xff]
    %v2754 = vld [vmem:[%s0 + $0x8] sm:$0xff]
    %v2755 = vld [vmem:[%s0 + $0x10] sm:$0xff]
    %v2756 = vld [vmem:[%s0 + $0x18] sm:$0xff]
    %v2757 = vld [vmem:[%s0 + $0x20] sm:$0xff]
    %v2758 = vld [vmem:[%s0 + $0x28] sm:$0xff]
    %v2759 = vld [vmem:[%s0 + $0x30] sm:$0xff]
    %v2760 = vld [vmem:[%s0 + $0x38] sm:$0xff]
    %v2761 = vld [vmem:[%s0 + $0x40] sm:$0xff]
    %v2762 = vld [vmem:[%s0 + $0x48] sm:$0xff]
    %v2763 = vld [vmem:[%s0 + $0x50] sm:$0xff]
    %v2764 = vld [vmem:[%s0 + $0x58] sm:$0xff]
    %v2765 = vld [vmem:[%s0 + $0x60] sm:$0xff]
    %v2766 = vld [vmem:[%s0 + $0x68] sm:$0xff]
    %v2767 = vld [vmem:[%s0 + $0x70] sm:$0xff]
    %v2768 = vld [vmem:[%s0 + $0x78] sm:$0xff]
    %v2769 = vld [vmem:[#allocation7] sm:$0xff]
    %v2770 = vld [vmem:[#allocation7 + $0x8] sm:$0xff]
    %v2771 = vld [vmem:[#allocation7 + $0x10] sm:$0xff]
    %v2772 = vld [vmem:[#allocation7 + $0x18] sm:$0xff]
    %v2773 = vld [vmem:[#allocation7 + $0x20] sm:$0xff]
    %v2774 = vld [vmem:[#allocation7 + $0x28] sm:$0xff]
    %v2775 = vld [vmem:[#allocation7 + $0x30] sm:$0xff]
    %v2776 = vld [vmem:[#allocation7 + $0x38] sm:$0xff]
    %v2777 = vld [vmem:[#allocation7 + $0x40] sm:$0xff]
    %v2778 = vld [vmem:[#allocation7 + $0x48] sm:$0xff]
    %v2779 = vld [vmem:[#allocation7 + $0x50] sm:$0xff]
    %v2780 = vld [vmem:[#allocation7 + $0x58] sm:$0xff]
    %v2781 = vld [vmem:[#allocation7 + $0x60] sm:$0xff]
    %v2782 = vld [vmem:[#allocation7 + $0x68] sm:$0xff]
    %v2783 = vld [vmem:[#allocation7 + $0x70] sm:$0xff]
    %v2784 = vld [vmem:[#allocation7 + $0x78] sm:$0xff]
    %v2785 = vld [vmem:[#allocation7 + $0x80] sm:$0xff]
    %v2786 = vld [vmem:[#allocation7 + $0x88] sm:$0xff]
    %v2787 = vld [vmem:[#allocation7 + $0x90] sm:$0xff]
    %v2788 = vld [vmem:[#allocation7 + $0x98] sm:$0xff]
    %v2789 = vld [vmem:[#allocation7 + $0xa0] sm:$0xff]
    %v2790 = vld [vmem:[#allocation7 + $0xa8] sm:$0xff]
    %v2791 = vld [vmem:[#allocation7 + $0xb0] sm:$0xff]
    %v2792 = vld [vmem:[#allocation7 + $0xb8] sm:$0xff]
    %v2793 = vld [vmem:[#allocation7 + $0xc0] sm:$0xff]
    %v2794 = vld [vmem:[#allocation7 + $0xc8] sm:$0xff]
    %v2795 = vld [vmem:[#allocation7 + $0xd0] sm:$0xff]
    %v2796 = vld [vmem:[#allocation7 + $0xd8] sm:$0xff]
    %v2797 = vld [vmem:[#allocation7 + $0xe0] sm:$0xff]
    %v2798 = vld [vmem:[#allocation7 + $0xe8] sm:$0xff]
    %v2799 = vld [vmem:[#allocation7 + $0xf0] sm:$0xff]
    %v2800 = vld [vmem:[#allocation7 + $0xf8] sm:$0xff]
    %v2801 = vpack.c.bf16 %v582, %v427
    %v2802 = vpack.c.bf16 %v892, %v737
    %v2803 = vpack.c.bf16 %v1202, %v1047
    %v2804 = vpack.c.bf16 %v1512, %v1357
    %v2805 = vpack.c.bf16 %v1822, %v1667
    %v2806 = vpack.c.bf16 %v2132, %v1977
    %v2807 = vpack.c.bf16 %v2442, %v2287
    %v2808 = vpack.c.bf16 %v2752, %v2597
    %v2809 = vld [vmem:[#allocation8] sm:$0xff]
    %v2810 = vld [vmem:[#allocation8 + $0x8] sm:$0xff]
    %v2811 = vld [vmem:[#allocation8 + $0x10] sm:$0xff]
    %v2812 = vld [vmem:[#allocation8 + $0x18] sm:$0xff]
    %v2813 = vld [vmem:[#allocation8 + $0x20] sm:$0xff]
    %v2814 = vld [vmem:[#allocation8 + $0x28] sm:$0xff]
    %v2815 = vld [vmem:[#allocation8 + $0x30] sm:$0xff]
    %v2816 = vld [vmem:[#allocation8 + $0x38] sm:$0xff]
    %v2817 = vld [vmem:[#allocation8 + $0x40] sm:$0xff]
    %v2818 = vld [vmem:[#allocation8 + $0x48] sm:$0xff]
    %v2819 = vld [vmem:[#allocation8 + $0x50] sm:$0xff]
    %v2820 = vld [vmem:[#allocation8 + $0x58] sm:$0xff]
    %v2821 = vld [vmem:[#allocation8 + $0x60] sm:$0xff]
    %v2822 = vld [vmem:[#allocation8 + $0x68] sm:$0xff]
    %v2823 = vld [vmem:[#allocation8 + $0x70] sm:$0xff]
    %v2824 = vld [vmem:[#allocation8 + $0x78] sm:$0xff]
    %v2841 = vunpack.c.l.b16 %v2809
    %v2842 = vunpack.c.h.b16 %v2809
    %v2843 = vunpack.c.l.b16 %v2810
    %v2844 = vunpack.c.h.b16 %v2810
    %v2845 = vunpack.c.l.b16 %v2811
    %v2846 = vunpack.c.h.b16 %v2811
    %v2847 = vunpack.c.l.b16 %v2812
    %v2848 = vunpack.c.h.b16 %v2812
    %v2849 = vunpack.c.l.b16 %v2813
    %v2850 = vunpack.c.h.b16 %v2813
    %v2851 = vunpack.c.l.b16 %v2814
    %v2852 = vunpack.c.h.b16 %v2814
    %v2853 = vunpack.c.l.b16 %v2815
    %v2854 = vunpack.c.h.b16 %v2815
    %v2855 = vunpack.c.l.b16 %v2816
    %v2856 = vunpack.c.h.b16 %v2816
    %v2857 = vunpack.c.l.b16 %v2817
    %v2858 = vunpack.c.h.b16 %v2817
    %v2859 = vunpack.c.l.b16 %v2818
    %v2860 = vunpack.c.h.b16 %v2818
    %v2861 = vunpack.c.l.b16 %v2819
    %v2862 = vunpack.c.h.b16 %v2819
    %v2863 = vunpack.c.l.b16 %v2820
    %v2864 = vunpack.c.h.b16 %v2820
    %v2865 = vunpack.c.l.b16 %v2821
    %v2866 = vunpack.c.h.b16 %v2821
    %v2867 = vunpack.c.l.b16 %v2822
    %v2868 = vunpack.c.h.b16 %v2822
    %v2869 = vunpack.c.l.b16 %v2823
    %v2870 = vunpack.c.h.b16 %v2823
    %v2871 = vunpack.c.l.b16 %v2824
    %v2872 = vunpack.c.h.b16 %v2824
    %v2873 = vpack.c.b16 %v2843, %v2841
    %v2874 = vpack.c.b16 %v2844, %v2842
    %v2875 = vpack.c.b16 %v2847, %v2845
    %v2876 = vpack.c.b16 %v2848, %v2846
    %v2877 = vpack.c.b16 %v2851, %v2849
    %v2878 = vpack.c.b16 %v2852, %v2850
    %v2879 = vpack.c.b16 %v2855, %v2853
    %v2880 = vpack.c.b16 %v2856, %v2854
    %v2881 = vpack.c.b16 %v2859, %v2857
    %v2882 = vpack.c.b16 %v2860, %v2858
    %v2883 = vpack.c.b16 %v2863, %v2861
    %v2884 = vpack.c.b16 %v2864, %v2862
    %v2885 = vpack.c.b16 %v2867, %v2865
    %v2886 = vpack.c.b16 %v2868, %v2866
    %v2887 = vpack.c.b16 %v2871, %v2869
    %v2888 = vpack.c.b16 %v2872, %v2870
    %2905 = vmatpush.bf16.msra.mxu0 %v2887
    %2906 = vmatpush.bf16.msra.mxu0 %v2885
    %2907 = vmatpush.bf16.msra.mxu0 %v2883
    %2908 = vmatpush.bf16.msra.mxu0 %v2881
    %2909 = vmatpush.bf16.msra.mxu0 %v2879
    %2910 = vmatpush.bf16.msra.mxu0 %v2877
    %2911 = vmatpush.bf16.msra.mxu0 %v2875
    %2912 = vmatpush.bf16.msra.mxu0 %v2873
    %2913 = vmatmul.bf16.gmra.mxu0 %v2801
    %v2914 = vpop.f32.mrf.mxu0
    %v2915 = vadd.f32 0.0, %v2914
    %v2916 = vpop.f32.mrf.mxu0
    %v2917 = vadd.f32 0.0, %v2916
    %2918 = vmatmul.bf16.gmra.mxu0 %v2802
    %v2919 = vpop.f32.mrf.mxu0
    %v2920 = vadd.f32 0.0, %v2919
    %v2921 = vpop.f32.mrf.mxu0
    %v2922 = vadd.f32 0.0, %v2921
    %2923 = vmatmul.bf16.gmra.mxu0 %v2803
    %v2924 = vpop.f32.mrf.mxu0
    %v2925 = vadd.f32 0.0, %v2924
    %v2926 = vpop.f32.mrf.mxu0
    %v2927 = vadd.f32 0.0, %v2926
    %2928 = vmatmul.bf16.gmra.mxu0 %v2804
    %v2929 = vpop.f32.mrf.mxu0
    %v2930 = vadd.f32 0.0, %v2929
    %v2931 = vpop.f32.mrf.mxu0
    %v2932 = vadd.f32 0.0, %v2931
    %2933 = vmatmul.bf16.gmra.mxu0 %v2805
    %v2934 = vpop.f32.mrf.mxu0
    %v2935 = vadd.f32 0.0, %v2934
    %v2936 = vpop.f32.mrf.mxu0
    %v2937 = vadd.f32 0.0, %v2936
    %2938 = vmatmul.bf16.gmra.mxu0 %v2806
    %v2939 = vpop.f32.mrf.mxu0
    %v2940 = vadd.f32 0.0, %v2939
    %v2941 = vpop.f32.mrf.mxu0
    %v2942 = vadd.f32 0.0, %v2941
    %2943 = vmatmul.bf16.gmra.mxu0 %v2807
    %v2944 = vpop.f32.mrf.mxu0
    %v2945 = vadd.f32 0.0, %v2944
    %v2946 = vpop.f32.mrf.mxu0
    %v2947 = vadd.f32 0.0, %v2946
    %2948 = vmatmul.bf16.gmra.mxu0 %v2808
    %v2949 = vpop.f32.mrf.mxu0
    %v2950 = vadd.f32 0.0, %v2949
    %v2951 = vpop.f32.mrf.mxu0
    %v2952 = vadd.f32 0.0, %v2951
    %2953 = vdwg.mxu0
    %2954 = vmatpush.bf16.msra.mxu0 %v2888
    %2955 = vmatpush.bf16.msra.mxu0 %v2886
    %2956 = vmatpush.bf16.msra.mxu0 %v2884
    %2957 = vmatpush.bf16.msra.mxu0 %v2882
    %2958 = vmatpush.bf16.msra.mxu0 %v2880
    %2959 = vmatpush.bf16.msra.mxu0 %v2878
    %2960 = vmatpush.bf16.msra.mxu0 %v2876
    %2961 = vmatpush.bf16.msra.mxu0 %v2874
    %2962 = vmatmul.bf16.gmra.mxu0 %v2801
    %v2963 = vpop.f32.mrf.mxu0
    %v2964 = vadd.f32 0.0, %v2963
    %v2965 = vpop.f32.mrf.mxu0
    %v2966 = vadd.f32 0.0, %v2965
    %2967 = vmatmul.bf16.gmra.mxu0 %v2802
    %v2968 = vpop.f32.mrf.mxu0
    %v2969 = vadd.f32 0.0, %v2968
    %v2970 = vpop.f32.mrf.mxu0
    %v2971 = vadd.f32 0.0, %v2970
    %2972 = vmatmul.bf16.gmra.mxu0 %v2803
    %v2973 = vpop.f32.mrf.mxu0
    %v2974 = vadd.f32 0.0, %v2973
    %v2975 = vpop.f32.mrf.mxu0
    %v2976 = vadd.f32 0.0, %v2975
    %2977 = vmatmul.bf16.gmra.mxu0 %v2804
    %v2978 = vpop.f32.mrf.mxu0
    %v2979 = vadd.f32 0.0, %v2978
    %v2980 = vpop.f32.mrf.mxu0
    %v2981 = vadd.f32 0.0, %v2980
    %2982 = vmatmul.bf16.gmra.mxu0 %v2805
    %v2983 = vpop.f32.mrf.mxu0
    %v2984 = vadd.f32 0.0, %v2983
    %v2985 = vpop.f32.mrf.mxu0
    %v2986 = vadd.f32 0.0, %v2985
    %2987 = vmatmul.bf16.gmra.mxu0 %v2806
    %v2988 = vpop.f32.mrf.mxu0
    %v2989 = vadd.f32 0.0, %v2988
    %v2990 = vpop.f32.mrf.mxu0
    %v2991 = vadd.f32 0.0, %v2990
    %2992 = vmatmul.bf16.gmra.mxu0 %v2807
    %v2993 = vpop.f32.mrf.mxu0
    %v2994 = vadd.f32 0.0, %v2993
    %v2995 = vpop.f32.mrf.mxu0
    %v2996 = vadd.f32 0.0, %v2995
    %2997 = vmatmul.bf16.gmra.mxu0 %v2808
    %v2998 = vpop.f32.mrf.mxu0
    %v2999 = vadd.f32 0.0, %v2998
    %v3000 = vpop.f32.mrf.mxu0
    %v3001 = vadd.f32 0.0, %v3000
    %3002 = vdwg.mxu0
    %v3019 = vunpack.c.l.b16 %v2753
    %v3020 = vunpack.c.h.b16 %v2753
    %v3021 = vunpack.c.l.b16 %v2754
    %v3022 = vunpack.c.h.b16 %v2754
    %v3023 = vunpack.c.l.b16 %v2755
    %v3024 = vunpack.c.h.b16 %v2755
    %v3025 = vunpack.c.l.b16 %v2756
    %v3026 = vunpack.c.h.b16 %v2756
    %v3027 = vunpack.c.l.b16 %v2757
    %v3028 = vunpack.c.h.b16 %v2757
    %v3029 = vunpack.c.l.b16 %v2758
    %v3030 = vunpack.c.h.b16 %v2758
    %v3031 = vunpack.c.l.b16 %v2759
    %v3032 = vunpack.c.h.b16 %v2759
    %v3033 = vunpack.c.l.b16 %v2760
    %v3034 = vunpack.c.h.b16 %v2760
    %v3035 = vunpack.c.l.b16 %v2761
    %v3036 = vunpack.c.h.b16 %v2761
    %v3037 = vunpack.c.l.b16 %v2762
    %v3038 = vunpack.c.h.b16 %v2762
    %v3039 = vunpack.c.l.b16 %v2763
    %v3040 = vunpack.c.h.b16 %v2763
    %v3041 = vunpack.c.l.b16 %v2764
    %v3042 = vunpack.c.h.b16 %v2764
    %v3043 = vunpack.c.l.b16 %v2765
    %v3044 = vunpack.c.h.b16 %v2765
    %v3045 = vunpack.c.l.b16 %v2766
    %v3046 = vunpack.c.h.b16 %v2766
    %v3047 = vunpack.c.l.b16 %v2767
    %v3048 = vunpack.c.h.b16 %v2767
    %v3049 = vunpack.c.l.b16 %v2768
    %v3050 = vunpack.c.h.b16 %v2768
    %v3051 = vpack.c.b16 %v3021, %v3019
    %v3052 = vpack.c.b16 %v3022, %v3020
    %v3053 = vpack.c.b16 %v3025, %v3023
    %v3054 = vpack.c.b16 %v3026, %v3024
    %v3055 = vpack.c.b16 %v3029, %v3027
    %v3056 = vpack.c.b16 %v3030, %v3028
    %v3057 = vpack.c.b16 %v3033, %v3031
    %v3058 = vpack.c.b16 %v3034, %v3032
    %v3059 = vpack.c.b16 %v3037, %v3035
    %v3060 = vpack.c.b16 %v3038, %v3036
    %v3061 = vpack.c.b16 %v3041, %v3039
    %v3062 = vpack.c.b16 %v3042, %v3040
    %v3063 = vpack.c.b16 %v3045, %v3043
    %v3064 = vpack.c.b16 %v3046, %v3044
    %v3065 = vpack.c.b16 %v3049, %v3047
    %v3066 = vpack.c.b16 %v3050, %v3048
    %v3115 = vunpack.c.l.b16 %v2769
    %v3116 = vunpack.c.h.b16 %v2769
    %v3117 = vunpack.c.l.b16 %v2770
    %v3118 = vunpack.c.h.b16 %v2770
    %v3119 = vunpack.c.l.b16 %v2771
    %v3120 = vunpack.c.h.b16 %v2771
    %v3121 = vunpack.c.l.b16 %v2772
    %v3122 = vunpack.c.h.b16 %v2772
    %v3123 = vunpack.c.l.b16 %v2773
    %v3124 = vunpack.c.h.b16 %v2773
    %v3125 = vunpack.c.l.b16 %v2774
    %v3126 = vunpack.c.h.b16 %v2774
    %v3127 = vunpack.c.l.b16 %v2775
    %v3128 = vunpack.c.h.b16 %v2775
    %v3129 = vunpack.c.l.b16 %v2776
    %v3130 = vunpack.c.h.b16 %v2776
    %v3131 = vunpack.c.l.b16 %v2777
    %v3132 = vunpack.c.h.b16 %v2777
    %v3133 = vunpack.c.l.b16 %v2778
    %v3134 = vunpack.c.h.b16 %v2778
    %v3135 = vunpack.c.l.b16 %v2779
    %v3136 = vunpack.c.h.b16 %v2779
    %v3137 = vunpack.c.l.b16 %v2780
    %v3138 = vunpack.c.h.b16 %v2780
    %v3139 = vunpack.c.l.b16 %v2781
    %v3140 = vunpack.c.h.b16 %v2781
    %v3141 = vunpack.c.l.b16 %v2782
    %v3142 = vunpack.c.h.b16 %v2782
    %v3143 = vunpack.c.l.b16 %v2783
    %v3144 = vunpack.c.h.b16 %v2783
    %v3145 = vunpack.c.l.b16 %v2784
    %v3146 = vunpack.c.h.b16 %v2784
    %v3147 = vunpack.c.l.b16 %v2785
    %v3148 = vunpack.c.h.b16 %v2785
    %v3149 = vunpack.c.l.b16 %v2786
    %v3150 = vunpack.c.h.b16 %v2786
    %v3151 = vunpack.c.l.b16 %v2787
    %v3152 = vunpack.c.h.b16 %v2787
    %v3153 = vunpack.c.l.b16 %v2788
    %v3154 = vunpack.c.h.b16 %v2788
    %v3155 = vunpack.c.l.b16 %v2789
    %v3156 = vunpack.c.h.b16 %v2789
    %v3157 = vunpack.c.l.b16 %v2790
    %v3158 = vunpack.c.h.b16 %v2790
    %v3159 = vunpack.c.l.b16 %v2791
    %v3160 = vunpack.c.h.b16 %v2791
    %v3161 = vunpack.c.l.b16 %v2792
    %v3162 = vunpack.c.h.b16 %v2792
    %v3163 = vunpack.c.l.b16 %v2793
    %v3164 = vunpack.c.h.b16 %v2793
    %v3165 = vunpack.c.l.b16 %v2794
    %v3166 = vunpack.c.h.b16 %v2794
    %v3167 = vunpack.c.l.b16 %v2795
    %v3168 = vunpack.c.h.b16 %v2795
    %v3169 = vunpack.c.l.b16 %v2796
    %v3170 = vunpack.c.h.b16 %v2796
    %v3171 = vunpack.c.l.b16 %v2797
    %v3172 = vunpack.c.h.b16 %v2797
    %v3173 = vunpack.c.l.b16 %v2798
    %v3174 = vunpack.c.h.b16 %v2798
    %v3175 = vunpack.c.l.b16 %v2799
    %v3176 = vunpack.c.h.b16 %v2799
    %v3177 = vunpack.c.l.b16 %v2800
    %v3178 = vunpack.c.h.b16 %v2800
    %v3179 = vpack.c.b16 %v3117, %v3115
    %v3180 = vpack.c.b16 %v3118, %v3116
    %v3181 = vpack.c.b16 %v3121, %v3119
    %v3182 = vpack.c.b16 %v3122, %v3120
    %v3183 = vpack.c.b16 %v3125, %v3123
    %v3184 = vpack.c.b16 %v3126, %v3124
    %v3185 = vpack.c.b16 %v3129, %v3127
    %v3186 = vpack.c.b16 %v3130, %v3128
    %v3187 = vpack.c.b16 %v3133, %v3131
    %v3188 = vpack.c.b16 %v3134, %v3132
    %v3189 = vpack.c.b16 %v3137, %v3135
    %v3190 = vpack.c.b16 %v3138, %v3136
    %v3191 = vpack.c.b16 %v3141, %v3139
    %v3192 = vpack.c.b16 %v3142, %v3140
    %v3193 = vpack.c.b16 %v3145, %v3143
    %v3194 = vpack.c.b16 %v3146, %v3144
    %v3195 = vpack.c.b16 %v3149, %v3147
    %v3196 = vpack.c.b16 %v3150, %v3148
    %v3197 = vpack.c.b16 %v3153, %v3151
    %v3198 = vpack.c.b16 %v3154, %v3152
    %v3199 = vpack.c.b16 %v3157, %v3155
    %v3200 = vpack.c.b16 %v3158, %v3156
    %v3201 = vpack.c.b16 %v3161, %v3159
    %v3202 = vpack.c.b16 %v3162, %v3160
    %v3203 = vpack.c.b16 %v3165, %v3163
    %v3204 = vpack.c.b16 %v3166, %v3164
    %v3205 = vpack.c.b16 %v3169, %v3167
    %v3206 = vpack.c.b16 %v3170, %v3168
    %v3207 = vpack.c.b16 %v3173, %v3171
    %v3208 = vpack.c.b16 %v3174, %v3172
    %v3209 = vpack.c.b16 %v3177, %v3175
    %v3210 = vpack.c.b16 %v3178, %v3176
    %3243 = vmatpush.bf16.msra.mxu0 %v3193
    %3244 = vmatpush.bf16.msra.mxu0 %v3191
    %3245 = vmatpush.bf16.msra.mxu0 %v3189
    %3246 = vmatpush.bf16.msra.mxu0 %v3187
    %3247 = vmatpush.bf16.msra.mxu0 %v3185
    %3248 = vmatpush.bf16.msra.mxu0 %v3183
    %3249 = vmatpush.bf16.msra.mxu0 %v3181
    %3250 = vmatpush.bf16.msra.mxu0 %v3179
    %3251 = vmatmul.bf16.gmra.mxu0 %v3051
    %v3252 = vpop.f32.mrf.mxu0
    %v3253 = vadd.f32 %v2915, %v3252
    %v3254 = vpop.f32.mrf.mxu0
    %v3255 = vadd.f32 %v2917, %v3254
    %3256 = vmatmul.bf16.gmra.mxu0 %v3053
    %v3257 = vpop.f32.mrf.mxu0
    %v3258 = vadd.f32 %v2920, %v3257
    %v3259 = vpop.f32.mrf.mxu0
    %v3260 = vadd.f32 %v2922, %v3259
    %3261 = vmatmul.bf16.gmra.mxu0 %v3055
    %v3262 = vpop.f32.mrf.mxu0
    %v3263 = vadd.f32 %v2925, %v3262
    %v3264 = vpop.f32.mrf.mxu0
    %v3265 = vadd.f32 %v2927, %v3264
    %3266 = vmatmul.bf16.gmra.mxu0 %v3057
    %v3267 = vpop.f32.mrf.mxu0
    %v3268 = vadd.f32 %v2930, %v3267
    %v3269 = vpop.f32.mrf.mxu0
    %v3270 = vadd.f32 %v2932, %v3269
    %3271 = vmatmul.bf16.gmra.mxu0 %v3059
    %v3272 = vpop.f32.mrf.mxu0
    %v3273 = vadd.f32 %v2935, %v3272
    %v3274 = vpop.f32.mrf.mxu0
    %v3275 = vadd.f32 %v2937, %v3274
    %3276 = vmatmul.bf16.gmra.mxu0 %v3061
    %v3277 = vpop.f32.mrf.mxu0
    %v3278 = vadd.f32 %v2940, %v3277
    %v3279 = vpop.f32.mrf.mxu0
    %v3280 = vadd.f32 %v2942, %v3279
    %3281 = vmatmul.bf16.gmra.mxu0 %v3063
    %v3282 = vpop.f32.mrf.mxu0
    %v3283 = vadd.f32 %v2945, %v3282
    %v3284 = vpop.f32.mrf.mxu0
    %v3285 = vadd.f32 %v2947, %v3284
    %3286 = vmatmul.bf16.gmra.mxu0 %v3065
    %v3287 = vpop.f32.mrf.mxu0
    %v3288 = vadd.f32 %v2950, %v3287
    %v3289 = vpop.f32.mrf.mxu0
    %v3290 = vadd.f32 %v2952, %v3289
    %3291 = vdwg.mxu0
    %3292 = vmatpush.bf16.msra.mxu0 %v3209
    %3293 = vmatpush.bf16.msra.mxu0 %v3207
    %3294 = vmatpush.bf16.msra.mxu0 %v3205
    %3295 = vmatpush.bf16.msra.mxu0 %v3203
    %3296 = vmatpush.bf16.msra.mxu0 %v3201
    %3297 = vmatpush.bf16.msra.mxu0 %v3199
    %3298 = vmatpush.bf16.msra.mxu0 %v3197
    %3299 = vmatpush.bf16.msra.mxu0 %v3195
    %3300 = vmatmul.bf16.gmra.mxu0 %v3052
    %v3301 = vpop.f32.mrf.mxu0
    %v3302 = vadd.f32 %v3253, %v3301
    %v3303 = vpop.f32.mrf.mxu0
    %v3304 = vadd.f32 %v3255, %v3303
    %3305 = vmatmul.bf16.gmra.mxu0 %v3054
    %v3306 = vpop.f32.mrf.mxu0
    %v3307 = vadd.f32 %v3258, %v3306
    %v3308 = vpop.f32.mrf.mxu0
    %v3309 = vadd.f32 %v3260, %v3308
    %3310 = vmatmul.bf16.gmra.mxu0 %v3056
    %v3311 = vpop.f32.mrf.mxu0
    %v3312 = vadd.f32 %v3263, %v3311
    %v3313 = vpop.f32.mrf.mxu0
    %v3314 = vadd.f32 %v3265, %v3313
    %3315 = vmatmul.bf16.gmra.mxu0 %v3058
    %v3316 = vpop.f32.mrf.mxu0
    %v3317 = vadd.f32 %v3268, %v3316
    %v3318 = vpop.f32.mrf.mxu0
    %v3319 = vadd.f32 %v3270, %v3318
    %3320 = vmatmul.bf16.gmra.mxu0 %v3060
    %v3321 = vpop.f32.mrf.mxu0
    %v3322 = vadd.f32 %v3273, %v3321
    %v3323 = vpop.f32.mrf.mxu0
    %v3324 = vadd.f32 %v3275, %v3323
    %3325 = vmatmul.bf16.gmra.mxu0 %v3062
    %v3326 = vpop.f32.mrf.mxu0
    %v3327 = vadd.f32 %v3278, %v3326
    %v3328 = vpop.f32.mrf.mxu0
    %v3329 = vadd.f32 %v3280, %v3328
    %3330 = vmatmul.bf16.gmra.mxu0 %v3064
    %v3331 = vpop.f32.mrf.mxu0
    %v3332 = vadd.f32 %v3283, %v3331
    %v3333 = vpop.f32.mrf.mxu0
    %v3334 = vadd.f32 %v3285, %v3333
    %3335 = vmatmul.bf16.gmra.mxu0 %v3066
    %v3336 = vpop.f32.mrf.mxu0
    %v3337 = vadd.f32 %v3288, %v3336
    %v3338 = vpop.f32.mrf.mxu0
    %v3339 = vadd.f32 %v3290, %v3338
    %3340 = vdwg.mxu0
    %3341 = vmatpush.bf16.msra.mxu0 %v3194
    %3342 = vmatpush.bf16.msra.mxu0 %v3192
    %3343 = vmatpush.bf16.msra.mxu0 %v3190
    %3344 = vmatpush.bf16.msra.mxu0 %v3188
    %3345 = vmatpush.bf16.msra.mxu0 %v3186
    %3346 = vmatpush.bf16.msra.mxu0 %v3184
    %3347 = vmatpush.bf16.msra.mxu0 %v3182
    %3348 = vmatpush.bf16.msra.mxu0 %v3180
    %3349 = vmatmul.bf16.gmra.mxu0 %v3051
    %v3350 = vpop.f32.mrf.mxu0
    %v3351 = vadd.f32 %v2964, %v3350
    %v3352 = vpop.f32.mrf.mxu0
    %v3353 = vadd.f32 %v2966, %v3352
    %3354 = vmatmul.bf16.gmra.mxu0 %v3053
    %v3355 = vpop.f32.mrf.mxu0
    %v3356 = vadd.f32 %v2969, %v3355
    %v3357 = vpop.f32.mrf.mxu0
    %v3358 = vadd.f32 %v2971, %v3357
    %3359 = vmatmul.bf16.gmra.mxu0 %v3055
    %v3360 = vpop.f32.mrf.mxu0
    %v3361 = vadd.f32 %v2974, %v3360
    %v3362 = vpop.f32.mrf.mxu0
    %v3363 = vadd.f32 %v2976, %v3362
    %3364 = vmatmul.bf16.gmra.mxu0 %v3057
    %v3365 = vpop.f32.mrf.mxu0
    %v3366 = vadd.f32 %v2979, %v3365
    %v3367 = vpop.f32.mrf.mxu0
    %v3368 = vadd.f32 %v2981, %v3367
    %3369 = vmatmul.bf16.gmra.mxu0 %v3059
    %v3370 = vpop.f32.mrf.mxu0
    %v3371 = vadd.f32 %v2984, %v3370
    %v3372 = vpop.f32.mrf.mxu0
    %v3373 = vadd.f32 %v2986, %v3372
    %3374 = vmatmul.bf16.gmra.mxu0 %v3061
    %v3375 = vpop.f32.mrf.mxu0
    %v3376 = vadd.f32 %v2989, %v3375
    %v3377 = vpop.f32.mrf.mxu0
    %v3378 = vadd.f32 %v2991, %v3377
    %3379 = vmatmul.bf16.gmra.mxu0 %v3063
    %v3380 = vpop.f32.mrf.mxu0
    %v3381 = vadd.f32 %v2994, %v3380
    %v3382 = vpop.f32.mrf.mxu0
    %v3383 = vadd.f32 %v2996, %v3382
    %3384 = vmatmul.bf16.gmra.mxu0 %v3065
    %v3385 = vpop.f32.mrf.mxu0
    %v3386 = vadd.f32 %v2999, %v3385
    %v3387 = vpop.f32.mrf.mxu0
    %v3388 = vadd.f32 %v3001, %v3387
    %3389 = vdwg.mxu0
    %3390 = vmatpush.bf16.msra.mxu0 %v3210
    %3391 = vmatpush.bf16.msra.mxu0 %v3208
    %3392 = vmatpush.bf16.msra.mxu0 %v3206
    %3393 = vmatpush.bf16.msra.mxu0 %v3204
    %3394 = vmatpush.bf16.msra.mxu0 %v3202
    %3395 = vmatpush.bf16.msra.mxu0 %v3200
    %3396 = vmatpush.bf16.msra.mxu0 %v3198
    %3397 = vmatpush.bf16.msra.mxu0 %v3196
    %3398 = vmatmul.bf16.gmra.mxu0 %v3052
    %v3399 = vpop.f32.mrf.mxu0
    %v3400 = vadd.f32 %v3351, %v3399
    %v3401 = vpop.f32.mrf.mxu0
    %v3402 = vadd.f32 %v3353, %v3401
    %3403 = vmatmul.bf16.gmra.mxu0 %v3054
    %v3404 = vpop.f32.mrf.mxu0
    %v3405 = vadd.f32 %v3356, %v3404
    %v3406 = vpop.f32.mrf.mxu0
    %v3407 = vadd.f32 %v3358, %v3406
    %3408 = vmatmul.bf16.gmra.mxu0 %v3056
    %v3409 = vpop.f32.mrf.mxu0
    %v3410 = vadd.f32 %v3361, %v3409
    %v3411 = vpop.f32.mrf.mxu0
    %v3412 = vadd.f32 %v3363, %v3411
    %3413 = vmatmul.bf16.gmra.mxu0 %v3058
    %v3414 = vpop.f32.mrf.mxu0
    %v3415 = vadd.f32 %v3366, %v3414
    %v3416 = vpop.f32.mrf.mxu0
    %v3417 = vadd.f32 %v3368, %v3416
    %3418 = vmatmul.bf16.gmra.mxu0 %v3060
    %v3419 = vpop.f32.mrf.mxu0
    %v3420 = vadd.f32 %v3371, %v3419
    %v3421 = vpop.f32.mrf.mxu0
    %v3422 = vadd.f32 %v3373, %v3421
    %3423 = vmatmul.bf16.gmra.mxu0 %v3062
    %v3424 = vpop.f32.mrf.mxu0
    %v3425 = vadd.f32 %v3376, %v3424
    %v3426 = vpop.f32.mrf.mxu0
    %v3427 = vadd.f32 %v3378, %v3426
    %3428 = vmatmul.bf16.gmra.mxu0 %v3064
    %v3429 = vpop.f32.mrf.mxu0
    %v3430 = vadd.f32 %v3381, %v3429
    %v3431 = vpop.f32.mrf.mxu0
    %v3432 = vadd.f32 %v3383, %v3431
    %3433 = vmatmul.bf16.gmra.mxu0 %v3066
    %v3434 = vpop.f32.mrf.mxu0
    %v3435 = vadd.f32 %v3386, %v3434
    %v3436 = vpop.f32.mrf.mxu0
    %v3437 = vadd.f32 %v3388, %v3436
    %3438 = vdwg.mxu0
    %v3439 = vld [vmem:[#allocation10] sm:$0x3]
    %v3441 = vperm.slane %v3439, 0
    %v3442 = vperm.slane %v3439, 1
    %v3445 = vadd.f32 %v3302, %v3441
    %v3446 = vadd.f32 %v3400, %v3442
    %v3447 = vadd.f32 %v3304, %v3441
    %v3448 = vadd.f32 %v3402, %v3442
    %v3449 = vadd.f32 %v3307, %v3441
    %v3450 = vadd.f32 %v3405, %v3442
    %v3451 = vadd.f32 %v3309, %v3441
    %v3452 = vadd.f32 %v3407, %v3442
    %v3453 = vadd.f32 %v3312, %v3441
    %v3454 = vadd.f32 %v3410, %v3442
    %v3455 = vadd.f32 %v3314, %v3441
    %v3456 = vadd.f32 %v3412, %v3442
    %v3457 = vadd.f32 %v3317, %v3441
    %v3458 = vadd.f32 %v3415, %v3442
    %v3459 = vadd.f32 %v3319, %v3441
    %v3460 = vadd.f32 %v3417, %v3442
    %v3461 = vadd.f32 %v3322, %v3441
    %v3462 = vadd.f32 %v3420, %v3442
    %v3463 = vadd.f32 %v3324, %v3441
    %v3464 = vadd.f32 %v3422, %v3442
    %v3465 = vadd.f32 %v3327, %v3441
    %v3466 = vadd.f32 %v3425, %v3442
    %v3467 = vadd.f32 %v3329, %v3441
    %v3468 = vadd.f32 %v3427, %v3442
    %v3469 = vadd.f32 %v3332, %v3441
    %v3470 = vadd.f32 %v3430, %v3442
    %v3471 = vadd.f32 %v3334, %v3441
    %v3472 = vadd.f32 %v3432, %v3442
    %v3473 = vadd.f32 %v3337, %v3441
    %v3474 = vadd.f32 %v3435, %v3442
    %v3475 = vadd.f32 %v3339, %v3441
    %v3476 = vadd.f32 %v3437, %v3442
    %v3477 = vmin.f32 %v3445, 40.0
    %v3478 = vmin.f32 %v3446, 40.0
    %v3479 = vmin.f32 %v3447, 40.0
    %v3480 = vmin.f32 %v3448, 40.0
    %v3481 = vmin.f32 %v3449, 40.0
    %v3482 = vmin.f32 %v3450, 40.0
    %v3483 = vmin.f32 %v3451, 40.0
    %v3484 = vmin.f32 %v3452, 40.0
    %v3485 = vmin.f32 %v3453, 40.0
    %v3486 = vmin.f32 %v3454, 40.0
    %v3487 = vmin.f32 %v3455, 40.0
    %v3488 = vmin.f32 %v3456, 40.0
    %v3489 = vmin.f32 %v3457, 40.0
    %v3490 = vmin.f32 %v3458, 40.0
    %v3491 = vmin.f32 %v3459, 40.0
    %v3492 = vmin.f32 %v3460, 40.0
    %v3493 = vmin.f32 %v3461, 40.0
    %v3494 = vmin.f32 %v3462, 40.0
    %v3495 = vmin.f32 %v3463, 40.0
    %v3496 = vmin.f32 %v3464, 40.0
    %v3497 = vmin.f32 %v3465, 40.0
    %v3498 = vmin.f32 %v3466, 40.0
    %v3499 = vmin.f32 %v3467, 40.0
    %v3500 = vmin.f32 %v3468, 40.0
    %v3501 = vmin.f32 %v3469, 40.0
    %v3502 = vmin.f32 %v3470, 40.0
    %v3503 = vmin.f32 %v3471, 40.0
    %v3504 = vmin.f32 %v3472, 40.0
    %v3505 = vmin.f32 %v3473, 40.0
    %v3506 = vmin.f32 %v3474, 40.0
    %v3507 = vmin.f32 %v3475, 40.0
    %v3508 = vmin.f32 %v3476, 40.0
    %v3509 = vmul.f32 %v3477, 1.442695
    %v3510 = vpow.pop %v3509
    %v3511 = vmul.f32 %v3478, 1.442695
    %v3512 = vpow.pop %v3511
    %v3513 = vmul.f32 %v3479, 1.442695
    %v3514 = vpow.pop %v3513
    %v3515 = vmul.f32 %v3480, 1.442695
    %v3516 = vpow.pop %v3515
    %v3517 = vmul.f32 %v3481, 1.442695
    %v3518 = vpow.pop %v3517
    %v3519 = vmul.f32 %v3482, 1.442695
    %v3520 = vpow.pop %v3519
    %v3521 = vmul.f32 %v3483, 1.442695
    %v3522 = vpow.pop %v3521
    %v3523 = vmul.f32 %v3484, 1.442695
    %v3524 = vpow.pop %v3523
    %v3525 = vmul.f32 %v3485, 1.442695
    %v3526 = vpow.pop %v3525
    %v3527 = vmul.f32 %v3486, 1.442695
    %v3528 = vpow.pop %v3527
    %v3529 = vmul.f32 %v3487, 1.442695
    %v3530 = vpow.pop %v3529
    %v3531 = vmul.f32 %v3488, 1.442695
    %v3532 = vpow.pop %v3531
    %v3533 = vmul.f32 %v3489, 1.442695
    %v3534 = vpow.pop %v3533
    %v3535 = vmul.f32 %v3490, 1.442695
    %v3536 = vpow.pop %v3535
    %v3537 = vmul.f32 %v3491, 1.442695
    %v3538 = vpow.pop %v3537
    %v3539 = vmul.f32 %v3492, 1.442695
    %v3540 = vpow.pop %v3539
    %v3541 = vmul.f32 %v3493, 1.442695
    %v3542 = vpow.pop %v3541
    %v3543 = vmul.f32 %v3494, 1.442695
    %v3544 = vpow.pop %v3543
    %v3545 = vmul.f32 %v3495, 1.442695
    %v3546 = vpow.pop %v3545
    %v3547 = vmul.f32 %v3496, 1.442695
    %v3548 = vpow.pop %v3547
    %v3549 = vmul.f32 %v3497, 1.442695
    %v3550 = vpow.pop %v3549
    %v3551 = vmul.f32 %v3498, 1.442695
    %v3552 = vpow.pop %v3551
    %v3553 = vmul.f32 %v3499, 1.442695
    %v3554 = vpow.pop %v3553
    %v3555 = vmul.f32 %v3500, 1.442695
    %v3556 = vpow.pop %v3555
    %v3557 = vmul.f32 %v3501, 1.442695
    %v3558 = vpow.pop %v3557
    %v3559 = vmul.f32 %v3502, 1.442695
    %v3560 = vpow.pop %v3559
    %v3561 = vmul.f32 %v3503, 1.442695
    %v3562 = vpow.pop %v3561
    %v3563 = vmul.f32 %v3504, 1.442695
    %v3564 = vpow.pop %v3563
    %v3565 = vmul.f32 %v3505, 1.442695
    %v3566 = vpow.pop %v3565
    %v3567 = vmul.f32 %v3506, 1.442695
    %v3568 = vpow.pop %v3567
    %v3569 = vmul.f32 %v3507, 1.442695
    %v3570 = vpow.pop %v3569
    %v3571 = vmul.f32 %v3508, 1.442695
    %v3572 = vpow.pop %v3571
    %v3573 = vadd.f32 %v3510, 2.0
    %v3574 = vadd.f32 %v3512, 2.0
    %v3575 = vadd.f32 %v3514, 2.0
    %v3576 = vadd.f32 %v3516, 2.0
    %v3577 = vadd.f32 %v3518, 2.0
    %v3578 = vadd.f32 %v3520, 2.0
    %v3579 = vadd.f32 %v3522, 2.0
    %v3580 = vadd.f32 %v3524, 2.0
    %v3581 = vadd.f32 %v3526, 2.0
    %v3582 = vadd.f32 %v3528, 2.0
    %v3583 = vadd.f32 %v3530, 2.0
    %v3584 = vadd.f32 %v3532, 2.0
    %v3585 = vadd.f32 %v3534, 2.0
    %v3586 = vadd.f32 %v3536, 2.0
    %v3587 = vadd.f32 %v3538, 2.0
    %v3588 = vadd.f32 %v3540, 2.0
    %v3589 = vadd.f32 %v3542, 2.0
    %v3590 = vadd.f32 %v3544, 2.0
    %v3591 = vadd.f32 %v3546, 2.0
    %v3592 = vadd.f32 %v3548, 2.0
    %v3593 = vadd.f32 %v3550, 2.0
    %v3594 = vadd.f32 %v3552, 2.0
    %v3595 = vadd.f32 %v3554, 2.0
    %v3596 = vadd.f32 %v3556, 2.0
    %v3597 = vadd.f32 %v3558, 2.0
    %v3598 = vadd.f32 %v3560, 2.0
    %v3599 = vadd.f32 %v3562, 2.0
    %v3600 = vadd.f32 %v3564, 2.0
    %v3601 = vadd.f32 %v3566, 2.0
    %v3602 = vadd.f32 %v3568, 2.0
    %v3603 = vadd.f32 %v3570, 2.0
    %v3604 = vadd.f32 %v3572, 2.0
    %v3605 = vmul.f32 %v3510, %v3573
    %v3606 = vmul.f32 %v3512, %v3574
    %v3607 = vmul.f32 %v3514, %v3575
    %v3608 = vmul.f32 %v3516, %v3576
    %v3609 = vmul.f32 %v3518, %v3577
    %v3610 = vmul.f32 %v3520, %v3578
    %v3611 = vmul.f32 %v3522, %v3579
    %v3612 = vmul.f32 %v3524, %v3580
    %v3613 = vmul.f32 %v3526, %v3581
    %v3614 = vmul.f32 %v3528, %v3582
    %v3615 = vmul.f32 %v3530, %v3583
    %v3616 = vmul.f32 %v3532, %v3584
    %v3617 = vmul.f32 %v3534, %v3585
    %v3618 = vmul.f32 %v3536, %v3586
    %v3619 = vmul.f32 %v3538, %v3587
    %v3620 = vmul.f32 %v3540, %v3588
    %v3621 = vmul.f32 %v3542, %v3589
    %v3622 = vmul.f32 %v3544, %v3590
    %v3623 = vmul.f32 %v3546, %v3591
    %v3624 = vmul.f32 %v3548, %v3592
    %v3625 = vmul.f32 %v3550, %v3593
    %v3626 = vmul.f32 %v3552, %v3594
    %v3627 = vmul.f32 %v3554, %v3595
    %v3628 = vmul.f32 %v3556, %v3596
    %v3629 = vmul.f32 %v3558, %v3597
    %v3630 = vmul.f32 %v3560, %v3598
    %v3631 = vmul.f32 %v3562, %v3599
    %v3632 = vmul.f32 %v3564, %v3600
    %v3633 = vmul.f32 %v3566, %v3601
    %v3634 = vmul.f32 %v3568, %v3602
    %v3635 = vmul.f32 %v3570, %v3603
    %v3636 = vmul.f32 %v3572, %v3604
    %v3637 = vmul.f32 %v3445, %v3605
    %v3638 = vmul.f32 %v3446, %v3606
    %v3639 = vmul.f32 %v3447, %v3607
    %v3640 = vmul.f32 %v3448, %v3608
    %v3641 = vmul.f32 %v3449, %v3609
    %v3642 = vmul.f32 %v3450, %v3610
    %v3643 = vmul.f32 %v3451, %v3611
    %v3644 = vmul.f32 %v3452, %v3612
    %v3645 = vmul.f32 %v3453, %v3613
    %v3646 = vmul.f32 %v3454, %v3614
    %v3647 = vmul.f32 %v3455, %v3615
    %v3648 = vmul.f32 %v3456, %v3616
    %v3649 = vmul.f32 %v3457, %v3617
    %v3650 = vmul.f32 %v3458, %v3618
    %v3651 = vmul.f32 %v3459, %v3619
    %v3652 = vmul.f32 %v3460, %v3620
    %v3653 = vmul.f32 %v3461, %v3621
    %v3654 = vmul.f32 %v3462, %v3622
    %v3655 = vmul.f32 %v3463, %v3623
    %v3656 = vmul.f32 %v3464, %v3624
    %v3657 = vmul.f32 %v3465, %v3625
    %v3658 = vmul.f32 %v3466, %v3626
    %v3659 = vmul.f32 %v3467, %v3627
    %v3660 = vmul.f32 %v3468, %v3628
    %v3661 = vmul.f32 %v3469, %v3629
    %v3662 = vmul.f32 %v3470, %v3630
    %v3663 = vmul.f32 %v3471, %v3631
    %v3664 = vmul.f32 %v3472, %v3632
    %v3665 = vmul.f32 %v3473, %v3633
    %v3666 = vmul.f32 %v3474, %v3634
    %v3667 = vmul.f32 %v3475, %v3635
    %v3668 = vmul.f32 %v3476, %v3636
    %v3669 = vadd.f32 %v3605, 2.0
    %v3670 = vadd.f32 %v3606, 2.0
    %v3671 = vadd.f32 %v3607, 2.0
    %v3672 = vadd.f32 %v3608, 2.0
    %v3673 = vadd.f32 %v3609, 2.0
    %v3674 = vadd.f32 %v3610, 2.0
    %v3675 = vadd.f32 %v3611, 2.0
    %v3676 = vadd.f32 %v3612, 2.0
    %v3677 = vadd.f32 %v3613, 2.0
    %v3678 = vadd.f32 %v3614, 2.0
    %v3679 = vadd.f32 %v3615, 2.0
    %v3680 = vadd.f32 %v3616, 2.0
    %v3681 = vadd.f32 %v3617, 2.0
    %v3682 = vadd.f32 %v3618, 2.0
    %v3683 = vadd.f32 %v3619, 2.0
    %v3684 = vadd.f32 %v3620, 2.0
    %v3685 = vadd.f32 %v3621, 2.0
    %v3686 = vadd.f32 %v3622, 2.0
    %v3687 = vadd.f32 %v3623, 2.0
    %v3688 = vadd.f32 %v3624, 2.0
    %v3689 = vadd.f32 %v3625, 2.0
    %v3690 = vadd.f32 %v3626, 2.0
    %v3691 = vadd.f32 %v3627, 2.0
    %v3692 = vadd.f32 %v3628, 2.0
    %v3693 = vadd.f32 %v3629, 2.0
    %v3694 = vadd.f32 %v3630, 2.0
    %v3695 = vadd.f32 %v3631, 2.0
    %v3696 = vadd.f32 %v3632, 2.0
    %v3697 = vadd.f32 %v3633, 2.0
    %v3698 = vadd.f32 %v3634, 2.0
    %v3699 = vadd.f32 %v3635, 2.0
    %v3700 = vadd.f32 %v3636, 2.0
    %v3701 = vrcp.pop %v3669
    %v3702 = vrcp.pop %v3670
    %v3703 = vrcp.pop %v3671
    %v3704 = vrcp.pop %v3672
    %v3705 = vrcp.pop %v3673
    %v3706 = vrcp.pop %v3674
    %v3707 = vrcp.pop %v3675
    %v3708 = vrcp.pop %v3676
    %v3709 = vrcp.pop %v3677
    %v3710 = vrcp.pop %v3678
    %v3711 = vrcp.pop %v3679
    %v3712 = vrcp.pop %v3680
    %v3713 = vrcp.pop %v3681
    %v3714 = vrcp.pop %v3682
    %v3715 = vrcp.pop %v3683
    %v3716 = vrcp.pop %v3684
    %v3717 = vrcp.pop %v3685
    %v3718 = vrcp.pop %v3686
    %v3719 = vrcp.pop %v3687
    %v3720 = vrcp.pop %v3688
    %v3721 = vrcp.pop %v3689
    %v3722 = vrcp.pop %v3690
    %v3723 = vrcp.pop %v3691
    %v3724 = vrcp.pop %v3692
    %v3725 = vrcp.pop %v3693
    %v3726 = vrcp.pop %v3694
    %v3727 = vrcp.pop %v3695
    %v3728 = vrcp.pop %v3696
    %v3729 = vrcp.pop %v3697
    %v3730 = vrcp.pop %v3698
    %v3731 = vrcp.pop %v3699
    %v3732 = vrcp.pop %v3700
    %v3733 = vmul.f32 %v3637, %v3701
    %v3734 = vmul.f32 %v3638, %v3702
    %v3735 = vmul.f32 %v3639, %v3703
    %v3736 = vmul.f32 %v3640, %v3704
    %v3737 = vmul.f32 %v3641, %v3705
    %v3738 = vmul.f32 %v3642, %v3706
    %v3739 = vmul.f32 %v3643, %v3707
    %v3740 = vmul.f32 %v3644, %v3708
    %v3741 = vmul.f32 %v3645, %v3709
    %v3742 = vmul.f32 %v3646, %v3710
    %v3743 = vmul.f32 %v3647, %v3711
    %v3744 = vmul.f32 %v3648, %v3712
    %v3745 = vmul.f32 %v3649, %v3713
    %v3746 = vmul.f32 %v3650, %v3714
    %v3747 = vmul.f32 %v3651, %v3715
    %v3748 = vmul.f32 %v3652, %v3716
    %v3749 = vmul.f32 %v3653, %v3717
    %v3750 = vmul.f32 %v3654, %v3718
    %v3751 = vmul.f32 %v3655, %v3719
    %v3752 = vmul.f32 %v3656, %v3720
    %v3753 = vmul.f32 %v3657, %v3721
    %v3754 = vmul.f32 %v3658, %v3722
    %v3755 = vmul.f32 %v3659, %v3723
    %v3756 = vmul.f32 %v3660, %v3724
    %v3757 = vmul.f32 %v3661, %v3725
    %v3758 = vmul.f32 %v3662, %v3726
    %v3759 = vmul.f32 %v3663, %v3727
    %v3760 = vmul.f32 %v3664, %v3728
    %v3761 = vmul.f32 %v3665, %v3729
    %v3762 = vmul.f32 %v3666, %v3730
    %v3763 = vmul.f32 %v3667, %v3731
    %v3764 = vmul.f32 %v3668, %v3732
    %v3765 = vpack.c.bf16 %v3735, %v3733
    %v3766 = vpack.c.bf16 %v3736, %v3734
    %v3767 = vpack.c.bf16 %v3739, %v3737
    %v3768 = vpack.c.bf16 %v3740, %v3738
    %v3769 = vpack.c.bf16 %v3743, %v3741
    %v3770 = vpack.c.bf16 %v3744, %v3742
    %v3771 = vpack.c.bf16 %v3747, %v3745
    %v3772 = vpack.c.bf16 %v3748, %v3746
    %v3773 = vpack.c.bf16 %v3751, %v3749
    %v3774 = vpack.c.bf16 %v3752, %v3750
    %v3775 = vpack.c.bf16 %v3755, %v3753
    %v3776 = vpack.c.bf16 %v3756, %v3754
    %v3777 = vpack.c.bf16 %v3759, %v3757
    %v3778 = vpack.c.bf16 %v3760, %v3758
    %v3779 = vpack.c.bf16 %v3763, %v3761
    %v3780 = vpack.c.bf16 %v3764, %v3762
    %v3781 = vld [vmem:[#allocation11] sm:$0xff]
    %v3782 = vld [vmem:[#allocation11 + $0x8] sm:$0xff]
    %v3783 = vld [vmem:[#allocation11 + $0x10] sm:$0xff]
    %v3784 = vld [vmem:[#allocation11 + $0x18] sm:$0xff]
    %v3785 = vld [vmem:[#allocation11 + $0x20] sm:$0xff]
    %v3786 = vld [vmem:[#allocation11 + $0x28] sm:$0xff]
    %v3787 = vld [vmem:[#allocation11 + $0x30] sm:$0xff]
    %v3788 = vld [vmem:[#allocation11 + $0x38] sm:$0xff]
    %v3789 = vld [vmem:[#allocation11 + $0x40] sm:$0xff]
    %v3790 = vld [vmem:[#allocation11 + $0x48] sm:$0xff]
    %v3791 = vld [vmem:[#allocation11 + $0x50] sm:$0xff]
    %v3792 = vld [vmem:[#allocation11 + $0x58] sm:$0xff]
    %v3793 = vld [vmem:[#allocation11 + $0x60] sm:$0xff]
    %v3794 = vld [vmem:[#allocation11 + $0x68] sm:$0xff]
    %v3795 = vld [vmem:[#allocation11 + $0x70] sm:$0xff]
    %v3796 = vld [vmem:[#allocation11 + $0x78] sm:$0xff]
    %v3797 = vld [vmem:[#allocation11 + $0x80] sm:$0xff]
    %v3798 = vld [vmem:[#allocation11 + $0x88] sm:$0xff]
    %v3799 = vld [vmem:[#allocation11 + $0x90] sm:$0xff]
    %v3800 = vld [vmem:[#allocation11 + $0x98] sm:$0xff]
    %v3801 = vld [vmem:[#allocation11 + $0xa0] sm:$0xff]
    %v3802 = vld [vmem:[#allocation11 + $0xa8] sm:$0xff]
    %v3803 = vld [vmem:[#allocation11 + $0xb0] sm:$0xff]
    %v3804 = vld [vmem:[#allocation11 + $0xb8] sm:$0xff]
    %v3805 = vld [vmem:[#allocation11 + $0xc0] sm:$0xff]
    %v3806 = vld [vmem:[#allocation11 + $0xc8] sm:$0xff]
    %v3807 = vld [vmem:[#allocation11 + $0xd0] sm:$0xff]
    %v3808 = vld [vmem:[#allocation11 + $0xd8] sm:$0xff]
    %v3809 = vld [vmem:[#allocation11 + $0xe0] sm:$0xff]
    %v3810 = vld [vmem:[#allocation11 + $0xe8] sm:$0xff]
    %v3811 = vld [vmem:[#allocation11 + $0xf0] sm:$0xff]
    %v3812 = vld [vmem:[#allocation11 + $0xf8] sm:$0xff]
    %v3813 = vld [vmem:[#allocation13] sm:$0x3]
    %v3815 = vperm.slane %v3813, 0
    %v3816 = vperm.slane %v3813, 1
    %v3851 = vunpack.c.l.b16 %v3781
    %v3852 = vunpack.c.h.b16 %v3781
    %v3853 = vunpack.c.l.b16 %v3782
    %v3854 = vunpack.c.h.b16 %v3782
    %v3855 = vunpack.c.l.b16 %v3783
    %v3856 = vunpack.c.h.b16 %v3783
    %v3857 = vunpack.c.l.b16 %v3784
    %v3858 = vunpack.c.h.b16 %v3784
    %v3859 = vunpack.c.l.b16 %v3785
    %v3860 = vunpack.c.h.b16 %v3785
    %v3861 = vunpack.c.l.b16 %v3786
    %v3862 = vunpack.c.h.b16 %v3786
    %v3863 = vunpack.c.l.b16 %v3787
    %v3864 = vunpack.c.h.b16 %v3787
    %v3865 = vunpack.c.l.b16 %v3788
    %v3866 = vunpack.c.h.b16 %v3788
    %v3867 = vunpack.c.l.b16 %v3789
    %v3868 = vunpack.c.h.b16 %v3789
    %v3869 = vunpack.c.l.b16 %v3790
    %v3870 = vunpack.c.h.b16 %v3790
    %v3871 = vunpack.c.l.b16 %v3791
    %v3872 = vunpack.c.h.b16 %v3791
    %v3873 = vunpack.c.l.b16 %v3792
    %v3874 = vunpack.c.h.b16 %v3792
    %v3875 = vunpack.c.l.b16 %v3793
    %v3876 = vunpack.c.h.b16 %v3793
    %v3877 = vunpack.c.l.b16 %v3794
    %v3878 = vunpack.c.h.b16 %v3794
    %v3879 = vunpack.c.l.b16 %v3795
    %v3880 = vunpack.c.h.b16 %v3795
    %v3881 = vunpack.c.l.b16 %v3796
    %v3882 = vunpack.c.h.b16 %v3796
    %v3883 = vunpack.c.l.b16 %v3797
    %v3884 = vunpack.c.h.b16 %v3797
    %v3885 = vunpack.c.l.b16 %v3798
    %v3886 = vunpack.c.h.b16 %v3798
    %v3887 = vunpack.c.l.b16 %v3799
    %v3888 = vunpack.c.h.b16 %v3799
    %v3889 = vunpack.c.l.b16 %v3800
    %v3890 = vunpack.c.h.b16 %v3800
    %v3891 = vunpack.c.l.b16 %v3801
    %v3892 = vunpack.c.h.b16 %v3801
    %v3893 = vunpack.c.l.b16 %v3802
    %v3894 = vunpack.c.h.b16 %v3802
    %v3895 = vunpack.c.l.b16 %v3803
    %v3896 = vunpack.c.h.b16 %v3803
    %v3897 = vunpack.c.l.b16 %v3804
    %v3898 = vunpack.c.h.b16 %v3804
    %v3899 = vunpack.c.l.b16 %v3805
    %v3900 = vunpack.c.h.b16 %v3805
    %v3901 = vunpack.c.l.b16 %v3806
    %v3902 = vunpack.c.h.b16 %v3806
    %v3903 = vunpack.c.l.b16 %v3807
    %v3904 = vunpack.c.h.b16 %v3807
    %v3905 = vunpack.c.l.b16 %v3808
    %v3906 = vunpack.c.h.b16 %v3808
    %v3907 = vunpack.c.l.b16 %v3809
    %v3908 = vunpack.c.h.b16 %v3809
    %v3909 = vunpack.c.l.b16 %v3810
    %v3910 = vunpack.c.h.b16 %v3810
    %v3911 = vunpack.c.l.b16 %v3811
    %v3912 = vunpack.c.h.b16 %v3811
    %v3913 = vunpack.c.l.b16 %v3812
    %v3914 = vunpack.c.h.b16 %v3812
    %v3915 = vpack.c.b16 %v3853, %v3851
    %v3916 = vpack.c.b16 %v3854, %v3852
    %v3917 = vpack.c.b16 %v3857, %v3855
    %v3918 = vpack.c.b16 %v3858, %v3856
    %v3919 = vpack.c.b16 %v3861, %v3859
    %v3920 = vpack.c.b16 %v3862, %v3860
    %v3921 = vpack.c.b16 %v3865, %v3863
    %v3922 = vpack.c.b16 %v3866, %v3864
    %v3923 = vpack.c.b16 %v3869, %v3867
    %v3924 = vpack.c.b16 %v3870, %v3868
    %v3925 = vpack.c.b16 %v3873, %v3871
    %v3926 = vpack.c.b16 %v3874, %v3872
    %v3927 = vpack.c.b16 %v3877, %v3875
    %v3928 = vpack.c.b16 %v3878, %v3876
    %v3929 = vpack.c.b16 %v3881, %v3879
    %v3930 = vpack.c.b16 %v3882, %v3880
    %v3931 = vpack.c.b16 %v3885, %v3883
    %v3932 = vpack.c.b16 %v3886, %v3884
    %v3933 = vpack.c.b16 %v3889, %v3887
    %v3934 = vpack.c.b16 %v3890, %v3888
    %v3935 = vpack.c.b16 %v3893, %v3891
    %v3936 = vpack.c.b16 %v3894, %v3892
    %v3937 = vpack.c.b16 %v3897, %v3895
    %v3938 = vpack.c.b16 %v3898, %v3896
    %v3939 = vpack.c.b16 %v3901, %v3899
    %v3940 = vpack.c.b16 %v3902, %v3900
    %v3941 = vpack.c.b16 %v3905, %v3903
    %v3942 = vpack.c.b16 %v3906, %v3904
    %v3943 = vpack.c.b16 %v3909, %v3907
    %v3944 = vpack.c.b16 %v3910, %v3908
    %v3945 = vpack.c.b16 %v3913, %v3911
    %v3946 = vpack.c.b16 %v3914, %v3912
    %3979 = vmatpush.bf16.msra.mxu0 %v3929
    %3980 = vmatpush.bf16.msra.mxu0 %v3927
    %3981 = vmatpush.bf16.msra.mxu0 %v3925
    %3982 = vmatpush.bf16.msra.mxu0 %v3923
    %3983 = vmatpush.bf16.msra.mxu0 %v3921
    %3984 = vmatpush.bf16.msra.mxu0 %v3919
    %3985 = vmatpush.bf16.msra.mxu0 %v3917
    %3986 = vmatpush.bf16.msra.mxu0 %v3915
    %3987 = vmatmul.bf16.gmra.mxu0 %v3765
    %v3988 = vpop.f32.mrf.mxu0
    %v3989 = vadd.f32 %v3815, %v3988
    %v3990 = vpop.f32.mrf.mxu0
    %v3991 = vadd.f32 %v3815, %v3990
    %3992 = vmatmul.bf16.gmra.mxu0 %v3767
    %v3993 = vpop.f32.mrf.mxu0
    %v3994 = vadd.f32 %v3815, %v3993
    %v3995 = vpop.f32.mrf.mxu0
    %v3996 = vadd.f32 %v3815, %v3995
    %3997 = vmatmul.bf16.gmra.mxu0 %v3769
    %v3998 = vpop.f32.mrf.mxu0
    %v3999 = vadd.f32 %v3815, %v3998
    %v4000 = vpop.f32.mrf.mxu0
    %v4001 = vadd.f32 %v3815, %v4000
    %4002 = vmatmul.bf16.gmra.mxu0 %v3771
    %v4003 = vpop.f32.mrf.mxu0
    %v4004 = vadd.f32 %v3815, %v4003
    %v4005 = vpop.f32.mrf.mxu0
    %v4006 = vadd.f32 %v3815, %v4005
    %4007 = vmatmul.bf16.gmra.mxu0 %v3773
    %v4008 = vpop.f32.mrf.mxu0
    %v4009 = vadd.f32 %v3815, %v4008
    %v4010 = vpop.f32.mrf.mxu0
    %v4011 = vadd.f32 %v3815, %v4010
    %4012 = vmatmul.bf16.gmra.mxu0 %v3775
    %v4013 = vpop.f32.mrf.mxu0
    %v4014 = vadd.f32 %v3815, %v4013
    %v4015 = vpop.f32.mrf.mxu0
    %v4016 = vadd.f32 %v3815, %v4015
    %4017 = vmatmul.bf16.gmra.mxu0 %v3777
    %v4018 = vpop.f32.mrf.mxu0
    %v4019 = vadd.f32 %v3815, %v4018
    %v4020 = vpop.f32.mrf.mxu0
    %v4021 = vadd.f32 %v3815, %v4020
    %4022 = vmatmul.bf16.gmra.mxu0 %v3779
    %v4023 = vpop.f32.mrf.mxu0
    %v4024 = vadd.f32 %v3815, %v4023
    %v4025 = vpop.f32.mrf.mxu0
    %v4026 = vadd.f32 %v3815, %v4025
    %4027 = vdwg.mxu0
    %4028 = vmatpush.bf16.msra.mxu0 %v3945
    %4029 = vmatpush.bf16.msra.mxu0 %v3943
    %4030 = vmatpush.bf16.msra.mxu0 %v3941
    %4031 = vmatpush.bf16.msra.mxu0 %v3939
    %4032 = vmatpush.bf16.msra.mxu0 %v3937
    %4033 = vmatpush.bf16.msra.mxu0 %v3935
    %4034 = vmatpush.bf16.msra.mxu0 %v3933
    %4035 = vmatpush.bf16.msra.mxu0 %v3931
    %4036 = vmatmul.bf16.gmra.mxu0 %v3766
    %v4037 = vpop.f32.mrf.mxu0
    %v4038 = vadd.f32 %v3989, %v4037
    %v4039 = vpop.f32.mrf.mxu0
    %v4040 = vadd.f32 %v3991, %v4039
    %4041 = vmatmul.bf16.gmra.mxu0 %v3768
    %v4042 = vpop.f32.mrf.mxu0
    %v4043 = vadd.f32 %v3994, %v4042
    %v4044 = vpop.f32.mrf.mxu0
    %v4045 = vadd.f32 %v3996, %v4044
    %4046 = vmatmul.bf16.gmra.mxu0 %v3770
    %v4047 = vpop.f32.mrf.mxu0
    %v4048 = vadd.f32 %v3999, %v4047
    %v4049 = vpop.f32.mrf.mxu0
    %v4050 = vadd.f32 %v4001, %v4049
    %4051 = vmatmul.bf16.gmra.mxu0 %v3772
    %v4052 = vpop.f32.mrf.mxu0
    %v4053 = vadd.f32 %v4004, %v4052
    %v4054 = vpop.f32.mrf.mxu0
    %v4055 = vadd.f32 %v4006, %v4054
    %4056 = vmatmul.bf16.gmra.mxu0 %v3774
    %v4057 = vpop.f32.mrf.mxu0
    %v4058 = vadd.f32 %v4009, %v4057
    %v4059 = vpop.f32.mrf.mxu0
    %v4060 = vadd.f32 %v4011, %v4059
    %4061 = vmatmul.bf16.gmra.mxu0 %v3776
    %v4062 = vpop.f32.mrf.mxu0
    %v4063 = vadd.f32 %v4014, %v4062
    %v4064 = vpop.f32.mrf.mxu0
    %v4065 = vadd.f32 %v4016, %v4064
    %4066 = vmatmul.bf16.gmra.mxu0 %v3778
    %v4067 = vpop.f32.mrf.mxu0
    %v4068 = vadd.f32 %v4019, %v4067
    %v4069 = vpop.f32.mrf.mxu0
    %v4070 = vadd.f32 %v4021, %v4069
    %4071 = vmatmul.bf16.gmra.mxu0 %v3780
    %v4072 = vpop.f32.mrf.mxu0
    %v4073 = vadd.f32 %v4024, %v4072
    %v4074 = vpop.f32.mrf.mxu0
    %v4075 = vadd.f32 %v4026, %v4074
    %4076 = vdwg.mxu0
    %4077 = vmatpush.bf16.msra.mxu0 %v3930
    %4078 = vmatpush.bf16.msra.mxu0 %v3928
    %4079 = vmatpush.bf16.msra.mxu0 %v3926
    %4080 = vmatpush.bf16.msra.mxu0 %v3924
    %4081 = vmatpush.bf16.msra.mxu0 %v3922
    %4082 = vmatpush.bf16.msra.mxu0 %v3920
    %4083 = vmatpush.bf16.msra.mxu0 %v3918
    %4084 = vmatpush.bf16.msra.mxu0 %v3916
    %4085 = vmatmul.bf16.gmra.mxu0 %v3765
    %v4086 = vpop.f32.mrf.mxu0
    %v4087 = vadd.f32 %v3816, %v4086
    %v4088 = vpop.f32.mrf.mxu0
    %v4089 = vadd.f32 %v3816, %v4088
    %4090 = vmatmul.bf16.gmra.mxu0 %v3767
    %v4091 = vpop.f32.mrf.mxu0
    %v4092 = vadd.f32 %v3816, %v4091
    %v4093 = vpop.f32.mrf.mxu0
    %v4094 = vadd.f32 %v3816, %v4093
    %4095 = vmatmul.bf16.gmra.mxu0 %v3769
    %v4096 = vpop.f32.mrf.mxu0
    %v4097 = vadd.f32 %v3816, %v4096
    %v4098 = vpop.f32.mrf.mxu0
    %v4099 = vadd.f32 %v3816, %v4098
    %4100 = vmatmul.bf16.gmra.mxu0 %v3771
    %v4101 = vpop.f32.mrf.mxu0
    %v4102 = vadd.f32 %v3816, %v4101
    %v4103 = vpop.f32.mrf.mxu0
    %v4104 = vadd.f32 %v3816, %v4103
    %4105 = vmatmul.bf16.gmra.mxu0 %v3773
    %v4106 = vpop.f32.mrf.mxu0
    %v4107 = vadd.f32 %v3816, %v4106
    %v4108 = vpop.f32.mrf.mxu0
    %v4109 = vadd.f32 %v3816, %v4108
    %4110 = vmatmul.bf16.gmra.mxu0 %v3775
    %v4111 = vpop.f32.mrf.mxu0
    %v4112 = vadd.f32 %v3816, %v4111
    %v4113 = vpop.f32.mrf.mxu0
    %v4114 = vadd.f32 %v3816, %v4113
    %4115 = vmatmul.bf16.gmra.mxu0 %v3777
    %v4116 = vpop.f32.mrf.mxu0
    %v4117 = vadd.f32 %v3816, %v4116
    %v4118 = vpop.f32.mrf.mxu0
    %v4119 = vadd.f32 %v3816, %v4118
    %4120 = vmatmul.bf16.gmra.mxu0 %v3779
    %v4121 = vpop.f32.mrf.mxu0
    %v4122 = vadd.f32 %v3816, %v4121
    %v4123 = vpop.f32.mrf.mxu0
    %v4124 = vadd.f32 %v3816, %v4123
    %4125 = vdwg.mxu0
    %4126 = vmatpush.bf16.msra.mxu0 %v3946
    %4127 = vmatpush.bf16.msra.mxu0 %v3944
    %4128 = vmatpush.bf16.msra.mxu0 %v3942
    %4129 = vmatpush.bf16.msra.mxu0 %v3940
    %4130 = vmatpush.bf16.msra.mxu0 %v3938
    %4131 = vmatpush.bf16.msra.mxu0 %v3936
    %4132 = vmatpush.bf16.msra.mxu0 %v3934
    %4133 = vmatpush.bf16.msra.mxu0 %v3932
    %4134 = vmatmul.bf16.gmra.mxu0 %v3766
    %v4135 = vpop.f32.mrf.mxu0
    %v4136 = vadd.f32 %v4087, %v4135
    %v4137 = vpop.f32.mrf.mxu0
    %v4138 = vadd.f32 %v4089, %v4137
    %4139 = vmatmul.bf16.gmra.mxu0 %v3768
    %v4140 = vpop.f32.mrf.mxu0
    %v4141 = vadd.f32 %v4092, %v4140
    %v4142 = vpop.f32.mrf.mxu0
    %v4143 = vadd.f32 %v4094, %v4142
    %4144 = vmatmul.bf16.gmra.mxu0 %v3770
    %v4145 = vpop.f32.mrf.mxu0
    %v4146 = vadd.f32 %v4097, %v4145
    %v4147 = vpop.f32.mrf.mxu0
    %v4148 = vadd.f32 %v4099, %v4147
    %4149 = vmatmul.bf16.gmra.mxu0 %v3772
    %v4150 = vpop.f32.mrf.mxu0
    %v4151 = vadd.f32 %v4102, %v4150
    %v4152 = vpop.f32.mrf.mxu0
    %v4153 = vadd.f32 %v4104, %v4152
    %4154 = vmatmul.bf16.gmra.mxu0 %v3774
    %v4155 = vpop.f32.mrf.mxu0
    %v4156 = vadd.f32 %v4107, %v4155
    %v4157 = vpop.f32.mrf.mxu0
    %v4158 = vadd.f32 %v4109, %v4157
    %4159 = vmatmul.bf16.gmra.mxu0 %v3776
    %v4160 = vpop.f32.mrf.mxu0
    %v4161 = vadd.f32 %v4112, %v4160
    %v4162 = vpop.f32.mrf.mxu0
    %v4163 = vadd.f32 %v4114, %v4162
    %4164 = vmatmul.bf16.gmra.mxu0 %v3778
    %v4165 = vpop.f32.mrf.mxu0
    %v4166 = vadd.f32 %v4117, %v4165
    %v4167 = vpop.f32.mrf.mxu0
    %v4168 = vadd.f32 %v4119, %v4167
    %4169 = vmatmul.bf16.gmra.mxu0 %v3780
    %v4170 = vpop.f32.mrf.mxu0
    %v4171 = vadd.f32 %v4122, %v4170
    %v4172 = vpop.f32.mrf.mxu0
    %v4173 = vadd.f32 %v4124, %v4172
    %4174 = vdwg.mxu0
    %v4175 = vmin.f32 %v4038, 40.0
    %v4176 = vmin.f32 %v4136, 40.0
    %v4177 = vmin.f32 %v4040, 40.0
    %v4178 = vmin.f32 %v4138, 40.0
    %v4179 = vmin.f32 %v4043, 40.0
    %v4180 = vmin.f32 %v4141, 40.0
    %v4181 = vmin.f32 %v4045, 40.0
    %v4182 = vmin.f32 %v4143, 40.0
    %v4183 = vmin.f32 %v4048, 40.0
    %v4184 = vmin.f32 %v4146, 40.0
    %v4185 = vmin.f32 %v4050, 40.0
    %v4186 = vmin.f32 %v4148, 40.0
    %v4187 = vmin.f32 %v4053, 40.0
    %v4188 = vmin.f32 %v4151, 40.0
    %v4189 = vmin.f32 %v4055, 40.0
    %v4190 = vmin.f32 %v4153, 40.0
    %v4191 = vmin.f32 %v4058, 40.0
    %v4192 = vmin.f32 %v4156, 40.0
    %v4193 = vmin.f32 %v4060, 40.0
    %v4194 = vmin.f32 %v4158, 40.0
    %v4195 = vmin.f32 %v4063, 40.0
    %v4196 = vmin.f32 %v4161, 40.0
    %v4197 = vmin.f32 %v4065, 40.0
    %v4198 = vmin.f32 %v4163, 40.0
    %v4199 = vmin.f32 %v4068, 40.0
    %v4200 = vmin.f32 %v4166, 40.0
    %v4201 = vmin.f32 %v4070, 40.0
    %v4202 = vmin.f32 %v4168, 40.0
    %v4203 = vmin.f32 %v4073, 40.0
    %v4204 = vmin.f32 %v4171, 40.0
    %v4205 = vmin.f32 %v4075, 40.0
    %v4206 = vmin.f32 %v4173, 40.0
    %v4207 = vmul.f32 %v4175, 1.442695
    %v4208 = vpow.pop %v4207
    %v4209 = vmul.f32 %v4176, 1.442695
    %v4210 = vpow.pop %v4209
    %v4211 = vmul.f32 %v4177, 1.442695
    %v4212 = vpow.pop %v4211
    %v4213 = vmul.f32 %v4178, 1.442695
    %v4214 = vpow.pop %v4213
    %v4215 = vmul.f32 %v4179, 1.442695
    %v4216 = vpow.pop %v4215
    %v4217 = vmul.f32 %v4180, 1.442695
    %v4218 = vpow.pop %v4217
    %v4219 = vmul.f32 %v4181, 1.442695
    %v4220 = vpow.pop %v4219
    %v4221 = vmul.f32 %v4182, 1.442695
    %v4222 = vpow.pop %v4221
    %v4223 = vmul.f32 %v4183, 1.442695
    %v4224 = vpow.pop %v4223
    %v4225 = vmul.f32 %v4184, 1.442695
    %v4226 = vpow.pop %v4225
    %v4227 = vmul.f32 %v4185, 1.442695
    %v4228 = vpow.pop %v4227
    %v4229 = vmul.f32 %v4186, 1.442695
    %v4230 = vpow.pop %v4229
    %v4231 = vmul.f32 %v4187, 1.442695
    %v4232 = vpow.pop %v4231
    %v4233 = vmul.f32 %v4188, 1.442695
    %v4234 = vpow.pop %v4233
    %v4235 = vmul.f32 %v4189, 1.442695
    %v4236 = vpow.pop %v4235
    %v4237 = vmul.f32 %v4190, 1.442695
    %v4238 = vpow.pop %v4237
    %v4239 = vmul.f32 %v4191, 1.442695
    %v4240 = vpow.pop %v4239
    %v4241 = vmul.f32 %v4192, 1.442695
    %v4242 = vpow.pop %v4241
    %v4243 = vmul.f32 %v4193, 1.442695
    %v4244 = vpow.pop %v4243
    %v4245 = vmul.f32 %v4194, 1.442695
    %v4246 = vpow.pop %v4245
    %v4247 = vmul.f32 %v4195, 1.442695
    %v4248 = vpow.pop %v4247
    %v4249 = vmul.f32 %v4196, 1.442695
    %v4250 = vpow.pop %v4249
    %v4251 = vmul.f32 %v4197, 1.442695
    %v4252 = vpow.pop %v4251
    %v4253 = vmul.f32 %v4198, 1.442695
    %v4254 = vpow.pop %v4253
    %v4255 = vmul.f32 %v4199, 1.442695
    %v4256 = vpow.pop %v4255
    %v4257 = vmul.f32 %v4200, 1.442695
    %v4258 = vpow.pop %v4257
    %v4259 = vmul.f32 %v4201, 1.442695
    %v4260 = vpow.pop %v4259
    %v4261 = vmul.f32 %v4202, 1.442695
    %v4262 = vpow.pop %v4261
    %v4263 = vmul.f32 %v4203, 1.442695
    %v4264 = vpow.pop %v4263
    %v4265 = vmul.f32 %v4204, 1.442695
    %v4266 = vpow.pop %v4265
    %v4267 = vmul.f32 %v4205, 1.442695
    %v4268 = vpow.pop %v4267
    %v4269 = vmul.f32 %v4206, 1.442695
    %v4270 = vpow.pop %v4269
    %v4271 = vadd.f32 %v4208, 2.0
    %v4272 = vadd.f32 %v4210, 2.0
    %v4273 = vadd.f32 %v4212, 2.0
    %v4274 = vadd.f32 %v4214, 2.0
    %v4275 = vadd.f32 %v4216, 2.0
    %v4276 = vadd.f32 %v4218, 2.0
    %v4277 = vadd.f32 %v4220, 2.0
    %v4278 = vadd.f32 %v4222, 2.0
    %v4279 = vadd.f32 %v4224, 2.0
    %v4280 = vadd.f32 %v4226, 2.0
    %v4281 = vadd.f32 %v4228, 2.0
    %v4282 = vadd.f32 %v4230, 2.0
    %v4283 = vadd.f32 %v4232, 2.0
    %v4284 = vadd.f32 %v4234, 2.0
    %v4285 = vadd.f32 %v4236, 2.0
    %v4286 = vadd.f32 %v4238, 2.0
    %v4287 = vadd.f32 %v4240, 2.0
    %v4288 = vadd.f32 %v4242, 2.0
    %v4289 = vadd.f32 %v4244, 2.0
    %v4290 = vadd.f32 %v4246, 2.0
    %v4291 = vadd.f32 %v4248, 2.0
    %v4292 = vadd.f32 %v4250, 2.0
    %v4293 = vadd.f32 %v4252, 2.0
    %v4294 = vadd.f32 %v4254, 2.0
    %v4295 = vadd.f32 %v4256, 2.0
    %v4296 = vadd.f32 %v4258, 2.0
    %v4297 = vadd.f32 %v4260, 2.0
    %v4298 = vadd.f32 %v4262, 2.0
    %v4299 = vadd.f32 %v4264, 2.0
    %v4300 = vadd.f32 %v4266, 2.0
    %v4301 = vadd.f32 %v4268, 2.0
    %v4302 = vadd.f32 %v4270, 2.0
    %v4303 = vmul.f32 %v4208, %v4271
    %v4304 = vmul.f32 %v4210, %v4272
    %v4305 = vmul.f32 %v4212, %v4273
    %v4306 = vmul.f32 %v4214, %v4274
    %v4307 = vmul.f32 %v4216, %v4275
    %v4308 = vmul.f32 %v4218, %v4276
    %v4309 = vmul.f32 %v4220, %v4277
    %v4310 = vmul.f32 %v4222, %v4278
    %v4311 = vmul.f32 %v4224, %v4279
    %v4312 = vmul.f32 %v4226, %v4280
    %v4313 = vmul.f32 %v4228, %v4281
    %v4314 = vmul.f32 %v4230, %v4282
    %v4315 = vmul.f32 %v4232, %v4283
    %v4316 = vmul.f32 %v4234, %v4284
    %v4317 = vmul.f32 %v4236, %v4285
    %v4318 = vmul.f32 %v4238, %v4286
    %v4319 = vmul.f32 %v4240, %v4287
    %v4320 = vmul.f32 %v4242, %v4288
    %v4321 = vmul.f32 %v4244, %v4289
    %v4322 = vmul.f32 %v4246, %v4290
    %v4323 = vmul.f32 %v4248, %v4291
    %v4324 = vmul.f32 %v4250, %v4292
    %v4325 = vmul.f32 %v4252, %v4293
    %v4326 = vmul.f32 %v4254, %v4294
    %v4327 = vmul.f32 %v4256, %v4295
    %v4328 = vmul.f32 %v4258, %v4296
    %v4329 = vmul.f32 %v4260, %v4297
    %v4330 = vmul.f32 %v4262, %v4298
    %v4331 = vmul.f32 %v4264, %v4299
    %v4332 = vmul.f32 %v4266, %v4300
    %v4333 = vmul.f32 %v4268, %v4301
    %v4334 = vmul.f32 %v4270, %v4302
    %v4335 = vmul.f32 %v4038, %v4303
    %v4336 = vmul.f32 %v4136, %v4304
    %v4337 = vmul.f32 %v4040, %v4305
    %v4338 = vmul.f32 %v4138, %v4306
    %v4339 = vmul.f32 %v4043, %v4307
    %v4340 = vmul.f32 %v4141, %v4308
    %v4341 = vmul.f32 %v4045, %v4309
    %v4342 = vmul.f32 %v4143, %v4310
    %v4343 = vmul.f32 %v4048, %v4311
    %v4344 = vmul.f32 %v4146, %v4312
    %v4345 = vmul.f32 %v4050, %v4313
    %v4346 = vmul.f32 %v4148, %v4314
    %v4347 = vmul.f32 %v4053, %v4315
    %v4348 = vmul.f32 %v4151, %v4316
    %v4349 = vmul.f32 %v4055, %v4317
    %v4350 = vmul.f32 %v4153, %v4318
    %v4351 = vmul.f32 %v4058, %v4319
    %v4352 = vmul.f32 %v4156, %v4320
    %v4353 = vmul.f32 %v4060, %v4321
    %v4354 = vmul.f32 %v4158, %v4322
    %v4355 = vmul.f32 %v4063, %v4323
    %v4356 = vmul.f32 %v4161, %v4324
    %v4357 = vmul.f32 %v4065, %v4325
    %v4358 = vmul.f32 %v4163, %v4326
    %v4359 = vmul.f32 %v4068, %v4327
    %v4360 = vmul.f32 %v4166, %v4328
    %v4361 = vmul.f32 %v4070, %v4329
    %v4362 = vmul.f32 %v4168, %v4330
    %v4363 = vmul.f32 %v4073, %v4331
    %v4364 = vmul.f32 %v4171, %v4332
    %v4365 = vmul.f32 %v4075, %v4333
    %v4366 = vmul.f32 %v4173, %v4334
    %v4367 = vadd.f32 %v4303, 2.0
    %v4368 = vadd.f32 %v4304, 2.0
    %v4369 = vadd.f32 %v4305, 2.0
    %v4370 = vadd.f32 %v4306, 2.0
    %v4371 = vadd.f32 %v4307, 2.0
    %v4372 = vadd.f32 %v4308, 2.0
    %v4373 = vadd.f32 %v4309, 2.0
    %v4374 = vadd.f32 %v4310, 2.0
    %v4375 = vadd.f32 %v4311, 2.0
    %v4376 = vadd.f32 %v4312, 2.0
    %v4377 = vadd.f32 %v4313, 2.0
    %v4378 = vadd.f32 %v4314, 2.0
    %v4379 = vadd.f32 %v4315, 2.0
    %v4380 = vadd.f32 %v4316, 2.0
    %v4381 = vadd.f32 %v4317, 2.0
    %v4382 = vadd.f32 %v4318, 2.0
    %v4383 = vadd.f32 %v4319, 2.0
    %v4384 = vadd.f32 %v4320, 2.0
    %v4385 = vadd.f32 %v4321, 2.0
    %v4386 = vadd.f32 %v4322, 2.0
    %v4387 = vadd.f32 %v4323, 2.0
    %v4388 = vadd.f32 %v4324, 2.0
    %v4389 = vadd.f32 %v4325, 2.0
    %v4390 = vadd.f32 %v4326, 2.0
    %v4391 = vadd.f32 %v4327, 2.0
    %v4392 = vadd.f32 %v4328, 2.0
    %v4393 = vadd.f32 %v4329, 2.0
    %v4394 = vadd.f32 %v4330, 2.0
    %v4395 = vadd.f32 %v4331, 2.0
    %v4396 = vadd.f32 %v4332, 2.0
    %v4397 = vadd.f32 %v4333, 2.0
    %v4398 = vadd.f32 %v4334, 2.0
    %v4399 = vrcp.pop %v4367
    %v4400 = vrcp.pop %v4368
    %v4401 = vrcp.pop %v4369
    %v4402 = vrcp.pop %v4370
    %v4403 = vrcp.pop %v4371
    %v4404 = vrcp.pop %v4372
    %v4405 = vrcp.pop %v4373
    %v4406 = vrcp.pop %v4374
    %v4407 = vrcp.pop %v4375
    %v4408 = vrcp.pop %v4376
    %v4409 = vrcp.pop %v4377
    %v4410 = vrcp.pop %v4378
    %v4411 = vrcp.pop %v4379
    %v4412 = vrcp.pop %v4380
    %v4413 = vrcp.pop %v4381
    %v4414 = vrcp.pop %v4382
    %v4415 = vrcp.pop %v4383
    %v4416 = vrcp.pop %v4384
    %v4417 = vrcp.pop %v4385
    %v4418 = vrcp.pop %v4386
    %v4419 = vrcp.pop %v4387
    %v4420 = vrcp.pop %v4388
    %v4421 = vrcp.pop %v4389
    %v4422 = vrcp.pop %v4390
    %v4423 = vrcp.pop %v4391
    %v4424 = vrcp.pop %v4392
    %v4425 = vrcp.pop %v4393
    %v4426 = vrcp.pop %v4394
    %v4427 = vrcp.pop %v4395
    %v4428 = vrcp.pop %v4396
    %v4429 = vrcp.pop %v4397
    %v4430 = vrcp.pop %v4398
    %v4431 = vmul.f32 %v4335, %v4399
    %v4432 = vmul.f32 %v4336, %v4400
    %v4433 = vmul.f32 %v4337, %v4401
    %v4434 = vmul.f32 %v4338, %v4402
    %v4435 = vmul.f32 %v4339, %v4403
    %v4436 = vmul.f32 %v4340, %v4404
    %v4437 = vmul.f32 %v4341, %v4405
    %v4438 = vmul.f32 %v4342, %v4406
    %v4439 = vmul.f32 %v4343, %v4407
    %v4440 = vmul.f32 %v4344, %v4408
    %v4441 = vmul.f32 %v4345, %v4409
    %v4442 = vmul.f32 %v4346, %v4410
    %v4443 = vmul.f32 %v4347, %v4411
    %v4444 = vmul.f32 %v4348, %v4412
    %v4445 = vmul.f32 %v4349, %v4413
    %v4446 = vmul.f32 %v4350, %v4414
    %v4447 = vmul.f32 %v4351, %v4415
    %v4448 = vmul.f32 %v4352, %v4416
    %v4449 = vmul.f32 %v4353, %v4417
    %v4450 = vmul.f32 %v4354, %v4418
    %v4451 = vmul.f32 %v4355, %v4419
    %v4452 = vmul.f32 %v4356, %v4420
    %v4453 = vmul.f32 %v4357, %v4421
    %v4454 = vmul.f32 %v4358, %v4422
    %v4455 = vmul.f32 %v4359, %v4423
    %v4456 = vmul.f32 %v4360, %v4424
    %v4457 = vmul.f32 %v4361, %v4425
    %v4458 = vmul.f32 %v4362, %v4426
    %v4459 = vmul.f32 %v4363, %v4427
    %v4460 = vmul.f32 %v4364, %v4428
    %v4461 = vmul.f32 %v4365, %v4429
    %v4462 = vmul.f32 %v4366, %v4430
    %v4463 = vld [vmem:[%s9] sm:$0xff]
    %v4464 = vpack.c.bf16 %v4433, %v4431
    %v4465 = vpack.c.bf16 %v4434, %v4432
    %v4466 = vpack.c.bf16 %v4437, %v4435
    %v4467 = vpack.c.bf16 %v4438, %v4436
    %v4468 = vpack.c.bf16 %v4441, %v4439
    %v4469 = vpack.c.bf16 %v4442, %v4440
    %v4470 = vpack.c.bf16 %v4445, %v4443
    %v4471 = vpack.c.bf16 %v4446, %v4444
    %v4472 = vpack.c.bf16 %v4449, %v4447
    %v4473 = vpack.c.bf16 %v4450, %v4448
    %v4474 = vpack.c.bf16 %v4453, %v4451
    %v4475 = vpack.c.bf16 %v4454, %v4452
    %v4476 = vpack.c.bf16 %v4457, %v4455
    %v4477 = vpack.c.bf16 %v4458, %v4456
    %v4478 = vpack.c.bf16 %v4461, %v4459
    %v4479 = vpack.c.bf16 %v4462, %v4460
    %v4481 = vunpack.c.l.b16 %v4463
    %v4482 = vunpack.c.h.b16 %v4463
    %v4483 = vpack.c.b16 %v4481, %v4481
    %v4484 = vpack.c.b16 %v4482, %v4482
    %4487 = vmatpush.bf16.xpose.msra.mxu0 %v4478
    %4488 = vmatpush.bf16.xpose.msra.mxu0 %v4476
    %4489 = vmatpush.bf16.xpose.msra.mxu0 %v4474
    %4490 = vmatpush.bf16.xpose.msra.mxu0 %v4472
    %4491 = vmatpush.bf16.xpose.msra.mxu0 %v4470
    %4492 = vmatpush.bf16.xpose.msra.mxu0 %v4468
    %4493 = vmatpush.bf16.xpose.msra.mxu0 %v4466
    %4494 = vmatpush.bf16.xpose.msra.mxu0 %v4464
    %4495 = vmatmul.bf16.gmra.mxu0 %v4483
    %v4496 = vpop.f32.mrf.mxu0
    %v4497 = vadd.f32 0.0, %v4496
    %v4498 = vpop.f32.mrf.mxu0
    %4499 = vdwg.mxu0
    %4500 = vmatpush.bf16.xpose.msra.mxu0 %v4479
    %4501 = vmatpush.bf16.xpose.msra.mxu0 %v4477
    %4502 = vmatpush.bf16.xpose.msra.mxu0 %v4475
    %4503 = vmatpush.bf16.xpose.msra.mxu0 %v4473
    %4504 = vmatpush.bf16.xpose.msra.mxu0 %v4471
    %4505 = vmatpush.bf16.xpose.msra.mxu0 %v4469
    %4506 = vmatpush.bf16.xpose.msra.mxu0 %v4467
    %4507 = vmatpush.bf16.xpose.msra.mxu0 %v4465
    %4508 = vmatmul.bf16.gmra.mxu0 %v4484
    %v4509 = vpop.f32.mrf.mxu0
    %v4510 = vadd.f32 %v4497, %v4509
    %v4511 = vpop.f32.mrf.mxu0
    %4512 = vdwg.mxu0
    %4513 = vst [vmem:[#allocation14] sm:$0x1] %v4510
    // Predicated region
    $region70: #{tpu_custom_call.1} parent=1 // pred_check
      _
    $region71: #{tpu_custom_call.1} parent=1 // pred_check_branch
      %4515 = sbr.rel (0) target = $region73
    $region72: #{tpu_custom_call.1} parent=1 // pred_region
      %4517 = vsyncadd [#allocation4], 0
      %s4519 = sshll.u32 [#allocation14], 4
      %s4520 = int_to_ptr.vmem [resolvable:$true] %s4519
      %s4521 = sshll.u32 %s10, 4
      %s4522 = int_to_ptr.hbm [resolvable:$true] %s4521
      %4524 = dma.vmem_to_hbm [thread:$0]  %s4520, 16, %s4522, [#allocation4]
    $region73: #{tpu_custom_call.1} parent=1 // pred_fallthru
      _
    // Predicated region
    $region74: #{tpu_custom_call.1} parent=1 // pred_check
      _
    $region75: #{tpu_custom_call.1} parent=1 // pred_check_branch
      %4526 = sbr.rel (0) target = $region77
    $region76: #{tpu_custom_call.1} parent=1 // pred_region
      %4528 = dma.done [#allocation4], 16
    $region77: #{tpu_custom_call.1} parent=1 // pred_fallthru
      _
    %4529 = vsyncpa [#allocation3], 1
    %4530 = vsyncpa [#allocation6], 1
    %4531 = vsyncpa [#allocation9], 1
    %4532 = vsyncpa [#allocation12], 1
    %4533 = vsyncpa [#allocation4], 1

</llo_original>
